<compile_context>
chip_gen: v5e
topology: v5e:2x2
jax: 0.10.0
libtpu: 0.0.40
codegen_flags: <defaults>
</compile_context>

<pallas_src>
import jax
import jax.numpy as jnp
from jax.experimental import pallas as pl
from jax.experimental.pallas import tpu as pltpu

FEATURE_BINS = 512
D_FF = 512
LN_EPS = 1e-5  # torch.nn.LayerNorm default


def ffn_kernel(x_ref, w1_ref, b1_ref, w2_ref, b2_ref, gamma_ref, beta_ref, o_ref):
    x = x_ref[...]                                   # (TM, C) f32 (residual path)
    xb = x.astype(jnp.bfloat16)

    # conv1 (1x1) + ReLU  ==  relu(x @ W1 + b1)   -- bf16 operands, f32 accumulate
    h = jnp.dot(xb, w1_ref[...], preferred_element_type=jnp.float32) + b1_ref[...]
    h = jnp.maximum(h, 0.0)

    # conv2 (1x1)  ==  h @ W2 + b2
    y = jnp.dot(h.astype(jnp.bfloat16), w2_ref[...],
                preferred_element_type=jnp.float32) + b2_ref[...]

    # residual add + LayerNorm over the feature axis (all f32)
    z = y + x
    mean = jnp.mean(z, axis=-1, keepdims=True)
    var = jnp.mean(jnp.square(z - mean), axis=-1, keepdims=True)
    zn = (z - mean) * jax.lax.rsqrt(var + LN_EPS)
    o_ref[...] = (zn * gamma_ref[...] + beta_ref[...]).astype(o_ref.dtype)


def poswise_ffn(x, w1, b1, w2, b2, gamma, beta, *, tm=256):
    """x: (B, L, C) float32. Returns (B, L, C) float32.

    tm: row tile (rows of B*L processed per grid step). Multiples of 256 feed
    the v6e/v7x MXU fully; 128 suffices on v5e. Sweep 256/512/1024 for prod N.
    """
    B, L, C = x.shape
    N = B * L
    x2d = x.reshape(N, C)

    # Pad the row count up to a tile multiple so the output store stays
    # unmasked and lane-dense; padded rows are sliced off below.
    n_pad = pl.cdiv(N, tm) * tm
    if n_pad != N:
        x2d = jnp.pad(x2d, ((0, n_pad - N), (0, 0)))

    # bf16 weights: halve DMA bytes / resident VMEM, run the MXU at bf16 rate.
    w1_bf = w1.astype(jnp.bfloat16)
    w2_bf = w2.astype(jnp.bfloat16)

    out = pl.pallas_call(
        ffn_kernel,
        out_shape=jax.ShapeDtypeStruct((n_pad, C), x.dtype),
        grid_spec=pltpu.PrefetchScalarGridSpec(
            num_scalar_prefetch=0,
            grid=(n_pad // tm,),
            in_specs=[
                pl.BlockSpec((tm, C), lambda i: (i, 0)),          # x rows
                pl.BlockSpec((C, D_FF), lambda i: (0, 0)),        # W1 (in, out), bf16
                pl.BlockSpec((1, D_FF), lambda i: (0, 0)),        # b1
                pl.BlockSpec((D_FF, C), lambda i: (0, 0)),        # W2 (in, out), bf16
                pl.BlockSpec((1, C), lambda i: (0, 0)),           # b2
                pl.BlockSpec((1, C), lambda i: (0, 0)),           # LN gamma
                pl.BlockSpec((1, C), lambda i: (0, 0)),           # LN beta
            ],
            out_specs=pl.BlockSpec((tm, C), lambda i: (i, 0)),
        ),
        compiler_params=pltpu.CompilerParams(
            dimension_semantics=("parallel",),   # shards across v7x's 2 TCs
            vmem_limit_bytes=32 * 1024 * 1024,   # headroom for tm=1024 on v5e
        ),
    )(x2d, w1_bf, b1, w2_bf, b2, gamma, beta)

    if n_pad != N:
        out = out[:N]
    return out.reshape(B, L, C)


def init_params(key):
    """Deterministic params matching the PyTorch module's shapes.

    conv1.weight: (d_ff, feature_bins, 1) -> stored transposed as (feature_bins, d_ff)
    conv2.weight: (feature_bins, d_ff, 1) -> stored transposed as (d_ff, feature_bins)
    """
    k1, k2, k3, k4 = jax.random.split(key, 4)
    scale1 = 1.0 / jnp.sqrt(FEATURE_BINS)
    scale2 = 1.0 / jnp.sqrt(D_FF)
    w1 = jax.random.uniform(k1, (FEATURE_BINS, D_FF), jnp.float32, -scale1, scale1)
    b1 = jax.random.uniform(k2, (1, D_FF), jnp.float32, -scale1, scale1)
    w2 = jax.random.uniform(k3, (D_FF, FEATURE_BINS), jnp.float32, -scale2, scale2)
    b2 = jax.random.uniform(k4, (1, FEATURE_BINS), jnp.float32, -scale2, scale2)
    gamma = jnp.ones((1, FEATURE_BINS), jnp.float32)   # LayerNorm weight init
    beta = jnp.zeros((1, FEATURE_BINS), jnp.float32)   # LayerNorm bias init
    return w1, b1, w2, b2, gamma, beta


def reference_ffn(x, w1, b1, w2, b2, gamma, beta):
    """Pure-JAX f32 reference mirroring the PyTorch forward exactly."""
    residual = x
    h = jnp.maximum(jnp.einsum("blc,cd->bld", x, w1) + b1[0], 0.0)
    y = jnp.einsum("bld,dc->blc", h, w2) + b2[0]
    z = y + residual
    mean = jnp.mean(z, axis=-1, keepdims=True)
    var = jnp.mean(jnp.square(z - mean), axis=-1, keepdims=True)
    return (z - mean) * jax.lax.rsqrt(var + LN_EPS) * gamma[0] + beta[0]


if __name__ == "__main__":
    key = jax.random.PRNGKey(0)
    kx, kp = jax.random.split(key)

    # Small test shapes; feature dims fixed by the module (512). At this size
    # the kernel pads N=16 rows up to one 256-row tile — real wins show up at
    # production-sized B*L (thousands of rows).
    B, L = 2, 8
    x = jax.random.normal(kx, (B, L, FEATURE_BINS), jnp.float32)
    params = init_params(kp)

    out = poswise_ffn(x, *params)
    out = jax.block_until_ready(out)

    ref = reference_ffn(x, *params)
    assert out.shape == (B, L, FEATURE_BINS)
    # bf16 matmul operands (f32 accumulation) shift results at the ~1e-3..1e-2
    # level vs the pure-f32 reference, so use a looser tolerance than before.
    assert jnp.allclose(out, ref, atol=5e-2, rtol=5e-2), "mismatch vs reference"

    print("KERNEL_OK")
</pallas_src>

<mosaic_0001>
module attributes {stable_mosaic.version = 11 : i64} {
  func.func @ffn_kernel(%arg0: i32, %arg1: memref<256x512xf32, #tpu.memory_space<vmem>>, %arg2: memref<512x512xbf16, #tpu.memory_space<vmem>>, %arg3: memref<1x512xf32, #tpu.memory_space<vmem>>, %arg4: memref<512x512xbf16, #tpu.memory_space<vmem>>, %arg5: memref<1x512xf32, #tpu.memory_space<vmem>>, %arg6: memref<1x512xf32, #tpu.memory_space<vmem>>, %arg7: memref<1x512xf32, #tpu.memory_space<vmem>>, %arg8: memref<256x512xf32, #tpu.memory_space<vmem>>) attributes {dimension_semantics = [#tpu.dimension_semantics<parallel>], iteration_bounds = array<i64: 1>, scalar_prefetch = 0 : i64, scratch_operands = 0 : i64, tpu.core_type = #tpu.core_type<tc>, window_params = [{transform_indices = @transform_0, window_bounds = array<i64: 256, 512>}, {pipeline_mode = #tpu.pipeline_mode<synchronous>, transform_indices = @transform_1, window_bounds = array<i64: 512, 512>}, {pipeline_mode = #tpu.pipeline_mode<synchronous>, transform_indices = @transform_2, window_bounds = array<i64: 1, 512>}, {pipeline_mode = #tpu.pipeline_mode<synchronous>, transform_indices = @transform_3, window_bounds = array<i64: 512, 512>}, {pipeline_mode = #tpu.pipeline_mode<synchronous>, transform_indices = @transform_4, window_bounds = array<i64: 1, 512>}, {pipeline_mode = #tpu.pipeline_mode<synchronous>, transform_indices = @transform_5, window_bounds = array<i64: 1, 512>}, {pipeline_mode = #tpu.pipeline_mode<synchronous>, transform_indices = @transform_6, window_bounds = array<i64: 1, 512>}, {transform_indices = @transform_7, window_bounds = array<i64: 256, 512>}]} {
    %c0 = arith.constant 0 : index
    %c0_0 = arith.constant 0 : index
    %0 = vector.load %arg1[%c0, %c0_0] : memref<256x512xf32, #tpu.memory_space<vmem>>, vector<256x512xf32>
    %1 = arith.truncf %0 : vector<256x512xf32> to vector<256x512xbf16>
    %c0_1 = arith.constant 0 : index
    %c0_2 = arith.constant 0 : index
    %2 = vector.load %arg2[%c0_1, %c0_2] : memref<512x512xbf16, #tpu.memory_space<vmem>>, vector<512x512xbf16>
    %cst = arith.constant dense<0.000000e+00> : vector<256x512xf32>
    %3 = tpu.matmul %1, %2, %cst {dimension_numbers = #tpu.dot_dimension_numbers<[1], [0], [0], [1], [0, 0, 1, 1], [], []>} : vector<256x512xbf16>, vector<512x512xbf16>, vector<256x512xf32> -> vector<256x512xf32>
    %c0_3 = arith.constant 0 : index
    %c0_4 = arith.constant 0 : index
    %4 = vector.load %arg3[%c0_3, %c0_4] : memref<1x512xf32, #tpu.memory_space<vmem>>, vector<1x512xf32>
    %5 = vector.broadcast %4 : vector<1x512xf32> to vector<256x512xf32>
    %6 = arith.addf %3, %5 : vector<256x512xf32>
    %cst_5 = arith.constant 0.000000e+00 : f32
    %7 = vector.broadcast %cst_5 : f32 to vector<256x512xf32>
    %8 = arith.maximumf %6, %7 : vector<256x512xf32>
    %9 = arith.truncf %8 : vector<256x512xf32> to vector<256x512xbf16>
    %c0_6 = arith.constant 0 : index
    %c0_7 = arith.constant 0 : index
    %10 = vector.load %arg4[%c0_6, %c0_7] : memref<512x512xbf16, #tpu.memory_space<vmem>>, vector<512x512xbf16>
    %cst_8 = arith.constant dense<0.000000e+00> : vector<256x512xf32>
    %11 = tpu.matmul %9, %10, %cst_8 {dimension_numbers = #tpu.dot_dimension_numbers<[1], [0], [0], [1], [0, 0, 1, 1], [], []>} : vector<256x512xbf16>, vector<512x512xbf16>, vector<256x512xf32> -> vector<256x512xf32>
    %c0_9 = arith.constant 0 : index
    %c0_10 = arith.constant 0 : index
    %12 = vector.load %arg5[%c0_9, %c0_10] : memref<1x512xf32, #tpu.memory_space<vmem>>, vector<1x512xf32>
    %13 = vector.broadcast %12 : vector<1x512xf32> to vector<256x512xf32>
    %14 = arith.addf %11, %13 : vector<256x512xf32>
    %15 = arith.addf %14, %0 : vector<256x512xf32>
    %cst_11 = arith.constant dense<0.000000e+00> : vector<256xf32>
    %16 = vector.multi_reduction <add>, %15, %cst_11 [1] : vector<256x512xf32> to vector<256xf32>
    %17 = vector.shape_cast %16 : vector<256xf32> to vector<256x1xf32>
    %cst_12 = arith.constant 5.120000e+02 : f32
    %18 = vector.broadcast %cst_12 : f32 to vector<256x1xf32>
    %19 = arith.divf %17, %18 : vector<256x1xf32>
    %20 = vector.broadcast %19 : vector<256x1xf32> to vector<256x512xf32>
    %21 = arith.subf %15, %20 : vector<256x512xf32>
    %22 = arith.mulf %21, %21 : vector<256x512xf32>
    %cst_13 = arith.constant dense<0.000000e+00> : vector<256xf32>
    %23 = vector.multi_reduction <add>, %22, %cst_13 [1] : vector<256x512xf32> to vector<256xf32>
    %24 = vector.shape_cast %23 : vector<256xf32> to vector<256x1xf32>
    %cst_14 = arith.constant 5.120000e+02 : f32
    %25 = vector.broadcast %cst_14 : f32 to vector<256x1xf32>
    %26 = arith.divf %24, %25 : vector<256x1xf32>
    %27 = vector.broadcast %19 : vector<256x1xf32> to vector<256x512xf32>
    %28 = arith.subf %15, %27 : vector<256x512xf32>
    %cst_15 = arith.constant 9.99999974E-6 : f32
    %29 = vector.broadcast %cst_15 : f32 to vector<256x1xf32>
    %30 = arith.addf %26, %29 : vector<256x1xf32>
    %31 = math.rsqrt %30 : vector<256x1xf32>
    %32 = vector.broadcast %31 : vector<256x1xf32> to vector<256x512xf32>
    %33 = arith.mulf %28, %32 : vector<256x512xf32>
    %c0_16 = arith.constant 0 : index
    %c0_17 = arith.constant 0 : index
    %34 = vector.load %arg6[%c0_16, %c0_17] : memref<1x512xf32, #tpu.memory_space<vmem>>, vector<1x512xf32>
    %35 = vector.broadcast %34 : vector<1x512xf32> to vector<256x512xf32>
    %36 = arith.mulf %33, %35 : vector<256x512xf32>
    %c0_18 = arith.constant 0 : index
    %c0_19 = arith.constant 0 : index
    %37 = vector.load %arg7[%c0_18, %c0_19] : memref<1x512xf32, #tpu.memory_space<vmem>>, vector<1x512xf32>
    %38 = vector.broadcast %37 : vector<1x512xf32> to vector<256x512xf32>
    %39 = arith.addf %36, %38 : vector<256x512xf32>
    %c0_20 = arith.constant 0 : index
    %c0_21 = arith.constant 0 : index
    %40 = vector.load %arg8[%c0_20, %c0_21] : memref<256x512xf32, #tpu.memory_space<vmem>>, vector<256x512xf32>
    tpu.vector_store %arg8[%c0_20, %c0_21], %39 {strides = array<i32>} : memref<256x512xf32, #tpu.memory_space<vmem>>, vector<256x512xf32>,
    return
  }
  func.func @transform_0(%arg0: i32) -> (i32, i32) {
    %c0_i32 = arith.constant 0 : i32
    %c0_i32_0 = arith.constant 0 : i32
    return %arg0, %c0_i32 : i32, i32
  }
  func.func @transform_1(%arg0: i32) -> (i32, i32) {
    %c0_i32 = arith.constant 0 : i32
    %c0_i32_0 = arith.constant 0 : i32
    %c0_i32_1 = arith.constant 0 : i32
    return %c0_i32, %c0_i32_0 : i32, i32
  }
  func.func @transform_2(%arg0: i32) -> (i32, i32) {
    %c0_i32 = arith.constant 0 : i32
    %c0_i32_0 = arith.constant 0 : i32
    %c0_i32_1 = arith.constant 0 : i32
    return %c0_i32, %c0_i32_0 : i32, i32
  }
  func.func @transform_3(%arg0: i32) -> (i32, i32) {
    %c0_i32 = arith.constant 0 : i32
    %c0_i32_0 = arith.constant 0 : i32
    %c0_i32_1 = arith.constant 0 : i32
    return %c0_i32, %c0_i32_0 : i32, i32
  }
  func.func @transform_4(%arg0: i32) -> (i32, i32) {
    %c0_i32 = arith.constant 0 : i32
    %c0_i32_0 = arith.constant 0 : i32
    %c0_i32_1 = arith.constant 0 : i32
    return %c0_i32, %c0_i32_0 : i32, i32
  }
  func.func @transform_5(%arg0: i32) -> (i32, i32) {
    %c0_i32 = arith.constant 0 : i32
    %c0_i32_0 = arith.constant 0 : i32
    %c0_i32_1 = arith.constant 0 : i32
    return %c0_i32, %c0_i32_0 : i32, i32
  }
  func.func @transform_6(%arg0: i32) -> (i32, i32) {
    %c0_i32 = arith.constant 0 : i32
    %c0_i32_0 = arith.constant 0 : i32
    %c0_i32_1 = arith.constant 0 : i32
    return %c0_i32, %c0_i32_0 : i32, i32
  }
  func.func @transform_7(%arg0: i32) -> (i32, i32) {
    %c0_i32 = arith.constant 0 : i32
    %c0_i32_0 = arith.constant 0 : i32
    return %arg0, %c0_i32 : i32, i32
  }
}

</mosaic_0001>

<llo_original>
// kernel: tpu_custom_call.1
$region0: #{tpu_custom_call.1}
  #allocation0 [shape = 'u32[]', space=smem, size = 0x4, offset = 0x4, fixed_abs, tag = 'smem constant byte address 0x4 - core index']
  #allocation1 [shape = 'u32[72,128]{1,0:T(1,128)}', space=vmem, size = 0x9000, scoped, tag = 'internal scratch']
  %s0 = inlined_call_operand.hbm [shape: f32[256,512], index: 0, kind: input, shape index: {}]
  %s1 = inlined_call_operand.hbm [shape: bf16[512,512], index: 1, kind: input, shape index: {}]
  %s2 = inlined_call_operand.hbm [shape: f32[1,512], index: 2, kind: input, shape index: {}]
  %s3 = inlined_call_operand.hbm [shape: bf16[512,512], index: 3, kind: input, shape index: {}]
  %s4 = inlined_call_operand.hbm [shape: f32[1,512], index: 4, kind: input, shape index: {}]
  %s5 = inlined_call_operand.vmem [shape: f32[1,512], index: 5, kind: input, shape index: {}]
  %s6 = inlined_call_operand.hbm [shape: f32[1,512], index: 6, kind: input, shape index: {}]
  %s7 = inlined_call_operand.hbm [shape: f32[256,512], index: 7, kind: output, shape index: {}]
  %s8 = sld [smem:[#allocation0]]
  $region62: #{tpu_custom_call.1} parent=0
    _
  %s10 = ssub.s32 1, %s8
  %s11 = scalar_select 0, %s10, %s8
  $region1: #{tpu_custom_call.1} parent=0
    #allocation2 [shape = 'u8[524288]{0}', space=vmem, size = 0x80000, scoped, tag = 'input window, operand 0, single buffered']
    #allocation3 [shape = 's32[1]{0}', space=sflag, size = 0x4, scoped, tag = 'scoped memory for tpu_custom_call.1']
    #allocation4 [shape = 's32[1]{0}', space=sflag, size = 0x4, scoped, tag = 'scoped memory for tpu_custom_call.1']
    #allocation5 [shape = 'u8[524288]{0}', space=vmem, size = 0x80000, scoped, tag = 'input window, operand 1, single buffered']
    #allocation6 [shape = 's32[1]{0}', space=sflag, size = 0x4, scoped, tag = 'scoped memory for tpu_custom_call.1']
    #allocation7 [shape = 'u8[2048]{0}', space=vmem, size = 0x800, scoped, tag = 'input window, operand 2, single buffered']
    #allocation8 [shape = 'u8[524288]{0}', space=vmem, size = 0x80000, scoped, tag = 'input window, operand 3, single buffered']
    #allocation9 [shape = 's32[1]{0}', space=sflag, size = 0x4, scoped, tag = 'scoped memory for tpu_custom_call.1']
    #allocation10 [shape = 'u8[2048]{0}', space=vmem, size = 0x800, scoped, tag = 'input window, operand 4, single buffered']
    #allocation11 [shape = 'u8[2048]{0}', space=vmem, size = 0x800, scoped, tag = 'input window, operand 6, single buffered']
    #allocation12 [shape = 's32[1]{0}', space=sflag, size = 0x4, scoped, tag = 'scoped memory for tpu_custom_call.1']
    #allocation13 [shape = 'u8[524288]{0}', space=vmem, size = 0x80000, scoped, tag = 'output window, operand 0, single buffered']
    %12 = vsyncpa [#allocation3], 0
    %13 = vsyncpa [#allocation6], 0
    %14 = vsyncpa [#allocation9], 0
    %15 = vsyncpa [#allocation12], 0
    %16 = vsyncpa [#allocation4], 0
    // Predicated region
    $region2: #{tpu_custom_call.1} parent=1 // pred_check
      _
    $region3: #{tpu_custom_call.1} parent=1 // pred_check_branch
      %18 = sbr.rel (0) target = $region5
    $region4: #{tpu_custom_call.1} parent=1 // pred_region
      %20 = vsyncadd [#allocation3], 0
      %s21 = sshll.u32 %s0, 4
      %s22 = int_to_ptr.hbm [resolvable:$true] %s21
      %s23 = sshll.u32 [#allocation2], 4
      %s24 = int_to_ptr.vmem [resolvable:$true] %s23
      %29 = dma.hbm_to_vmem [thread:$0]  %s22, 16384, %s24, [#allocation3], 512, 512, 32
    $region5: #{tpu_custom_call.1} parent=1 // pred_fallthru
      _
    // Predicated region
    $region6: #{tpu_custom_call.1} parent=1 // pred_check
      _
    $region7: #{tpu_custom_call.1} parent=1 // pred_check_branch
      %31 = sbr.rel (0) target = $region9
    $region8: #{tpu_custom_call.1} parent=1 // pred_region
      %33 = vsyncadd [#allocation6], 0
      %s34 = sshll.u32 %s1, 4
      %s35 = int_to_ptr.hbm [resolvable:$true] %s34
      %s36 = sshll.u32 [#allocation5], 4
      %s37 = int_to_ptr.vmem [resolvable:$true] %s36
      %42 = dma.hbm_to_vmem [thread:$0]  %s35, 16384, %s37, [#allocation6], 256, 256, 16
    $region9: #{tpu_custom_call.1} parent=1 // pred_fallthru
      _
    // Predicated region
    $region10: #{tpu_custom_call.1} parent=1 // pred_check
      _
    $region11: #{tpu_custom_call.1} parent=1 // pred_check_branch
      %44 = sbr.rel (0) target = $region13
    $region12: #{tpu_custom_call.1} parent=1 // pred_region
      %46 = vsyncadd [#allocation6], 0
      %s48 = sshll.u32 %s2, 4
      %s49 = int_to_ptr.hbm [resolvable:$true] %s48
      %s50 = sshll.u32 [#allocation7], 4
      %s51 = int_to_ptr.vmem [resolvable:$true] %s50
      %53 = dma.hbm_to_vmem [thread:$0]  %s49, 64, %s51, [#allocation6]
    $region13: #{tpu_custom_call.1} parent=1 // pred_fallthru
      _
    // Predicated region
    $region14: #{tpu_custom_call.1} parent=1 // pred_check
      _
    $region15: #{tpu_custom_call.1} parent=1 // pred_check_branch
      %55 = sbr.rel (0) target = $region17
    $region16: #{tpu_custom_call.1} parent=1 // pred_region
      %57 = vsyncadd [#allocation9], 0
      %s58 = sshll.u32 %s3, 4
      %s59 = int_to_ptr.hbm [resolvable:$true] %s58
      %s60 = sshll.u32 [#allocation8], 4
      %s61 = int_to_ptr.vmem [resolvable:$true] %s60
      %66 = dma.hbm_to_vmem [thread:$0]  %s59, 16384, %s61, [#allocation9], 256, 256, 16
    $region17: #{tpu_custom_call.1} parent=1 // pred_fallthru
      _
    // Predicated region
    $region18: #{tpu_custom_call.1} parent=1 // pred_check
      _
    $region19: #{tpu_custom_call.1} parent=1 // pred_check_branch
      %68 = sbr.rel (0) target = $region21
    $region20: #{tpu_custom_call.1} parent=1 // pred_region
      %70 = vsyncadd [#allocation9], 0
      %s72 = sshll.u32 %s4, 4
      %s73 = int_to_ptr.hbm [resolvable:$true] %s72
      %s74 = sshll.u32 [#allocation10], 4
      %s75 = int_to_ptr.vmem [resolvable:$true] %s74
      %77 = dma.hbm_to_vmem [thread:$0]  %s73, 64, %s75, [#allocation9]
    $region21: #{tpu_custom_call.1} parent=1 // pred_fallthru
      _
    // Predicated region
    $region22: #{tpu_custom_call.1} parent=1 // pred_check
      _
    $region23: #{tpu_custom_call.1} parent=1 // pred_check_branch
      %79 = sbr.rel (0) target = $region25
    $region24: #{tpu_custom_call.1} parent=1 // pred_region
      _
    $region25: #{tpu_custom_call.1} parent=1 // pred_fallthru
      _
    // Predicated region
    $region26: #{tpu_custom_call.1} parent=1 // pred_check
      _
    $region27: #{tpu_custom_call.1} parent=1 // pred_check_branch
      %81 = sbr.rel (0) target = $region29
    $region28: #{tpu_custom_call.1} parent=1 // pred_region
      %83 = vsyncadd [#allocation12], 0
      %s85 = sshll.u32 %s6, 4
      %s86 = int_to_ptr.hbm [resolvable:$true] %s85
      %s87 = sshll.u32 [#allocation11], 4
      %s88 = int_to_ptr.vmem [resolvable:$true] %s87
      %90 = dma.hbm_to_vmem [thread:$0]  %s86, 64, %s88, [#allocation12]
    $region29: #{tpu_custom_call.1} parent=1 // pred_fallthru
      _
    // Predicated region
    $region30: #{tpu_custom_call.1} parent=1 // pred_check
      _
    $region31: #{tpu_custom_call.1} parent=1 // pred_check_branch
      %92 = sbr.rel (0) target = $region33
    $region32: #{tpu_custom_call.1} parent=1 // pred_region
      %94 = dma.done [#allocation3], 16384
    $region33: #{tpu_custom_call.1} parent=1 // pred_fallthru
      _
    // Predicated region
    $region34: #{tpu_custom_call.1} parent=1 // pred_check
      _
    $region35: #{tpu_custom_call.1} parent=1 // pred_check_branch
      %96 = sbr.rel (0) target = $region37
    $region36: #{tpu_custom_call.1} parent=1 // pred_region
      %98 = dma.done [#allocation6], 16384
    $region37: #{tpu_custom_call.1} parent=1 // pred_fallthru
      _
    // Predicated region
    $region38: #{tpu_custom_call.1} parent=1 // pred_check
      _
    $region39: #{tpu_custom_call.1} parent=1 // pred_check_branch
      %100 = sbr.rel (0) target = $region41
    $region40: #{tpu_custom_call.1} parent=1 // pred_region
      %102 = dma.done [#allocation6], 64
    $region41: #{tpu_custom_call.1} parent=1 // pred_fallthru
      _
    // Predicated region
    $region42: #{tpu_custom_call.1} parent=1 // pred_check
      _
    $region43: #{tpu_custom_call.1} parent=1 // pred_check_branch
      %104 = sbr.rel (0) target = $region45
    $region44: #{tpu_custom_call.1} parent=1 // pred_region
      %106 = dma.done [#allocation9], 16384
    $region45: #{tpu_custom_call.1} parent=1 // pred_fallthru
      _
    // Predicated region
    $region46: #{tpu_custom_call.1} parent=1 // pred_check
      _
    $region47: #{tpu_custom_call.1} parent=1 // pred_check_branch
      %108 = sbr.rel (0) target = $region49
    $region48: #{tpu_custom_call.1} parent=1 // pred_region
      %110 = dma.done [#allocation9], 64
    $region49: #{tpu_custom_call.1} parent=1 // pred_fallthru
      _
    // Predicated region
    $region50: #{tpu_custom_call.1} parent=1 // pred_check
      _
    $region51: #{tpu_custom_call.1} parent=1 // pred_check_branch
      %112 = sbr.rel (0) target = $region53
    $region52: #{tpu_custom_call.1} parent=1 // pred_region
      %114 = dma.done [#allocation12], 64
    $region53: #{tpu_custom_call.1} parent=1 // pred_fallthru
      _
    %v115 = vld [vmem:[#allocation2] sm:$0xff]
    %v116 = vld [vmem:[#allocation2 + $0x8] sm:$0xff]
    %v117 = vld [vmem:[#allocation2 + $0x10] sm:$0xff]
    %v118 = vld [vmem:[#allocation2 + $0x18] sm:$0xff]
    %v119 = vld [vmem:[#allocation2 + $0x20] sm:$0xff]
    %v120 = vld [vmem:[#allocation2 + $0x28] sm:$0xff]
    %v121 = vld [vmem:[#allocation2 + $0x30] sm:$0xff]
    %v122 = vld [vmem:[#allocation2 + $0x38] sm:$0xff]
    %v123 = vld [vmem:[#allocation2 + $0x40] sm:$0xff]
    %v124 = vld [vmem:[#allocation2 + $0x48] sm:$0xff]
    %v125 = vld [vmem:[#allocation2 + $0x50] sm:$0xff]
    %v126 = vld [vmem:[#allocation2 + $0x58] sm:$0xff]
    %v127 = vld [vmem:[#allocation2 + $0x60] sm:$0xff]
    %v128 = vld [vmem:[#allocation2 + $0x68] sm:$0xff]
    %v129 = vld [vmem:[#allocation2 + $0x70] sm:$0xff]
    %v130 = vld [vmem:[#allocation2 + $0x78] sm:$0xff]
    %v131 = vld [vmem:[#allocation2 + $0x80] sm:$0xff]
    %v132 = vld [vmem:[#allocation2 + $0x88] sm:$0xff]
    %v133 = vld [vmem:[#allocation2 + $0x90] sm:$0xff]
    %v134 = vld [vmem:[#allocation2 + $0x98] sm:$0xff]
    %v135 = vld [vmem:[#allocation2 + $0xa0] sm:$0xff]
    %v136 = vld [vmem:[#allocation2 + $0xa8] sm:$0xff]
    %v137 = vld [vmem:[#allocation2 + $0xb0] sm:$0xff]
    %v138 = vld [vmem:[#allocation2 + $0xb8] sm:$0xff]
    %v139 = vld [vmem:[#allocation2 + $0xc0] sm:$0xff]
    %v140 = vld [vmem:[#allocation2 + $0xc8] sm:$0xff]
    %v141 = vld [vmem:[#allocation2 + $0xd0] sm:$0xff]
    %v142 = vld [vmem:[#allocation2 + $0xd8] sm:$0xff]
    %v143 = vld [vmem:[#allocation2 + $0xe0] sm:$0xff]
    %v144 = vld [vmem:[#allocation2 + $0xe8] sm:$0xff]
    %v145 = vld [vmem:[#allocation2 + $0xf0] sm:$0xff]
    %v146 = vld [vmem:[#allocation2 + $0xf8] sm:$0xff]
    %v147 = vld [vmem:[#allocation2 + $0x100] sm:$0xff]
    %v148 = vld [vmem:[#allocation2 + $0x108] sm:$0xff]
    %v149 = vld [vmem:[#allocation2 + $0x110] sm:$0xff]
    %v150 = vld [vmem:[#allocation2 + $0x118] sm:$0xff]
    %v151 = vld [vmem:[#allocation2 + $0x120] sm:$0xff]
    %v152 = vld [vmem:[#allocation2 + $0x128] sm:$0xff]
    %v153 = vld [vmem:[#allocation2 + $0x130] sm:$0xff]
    %v154 = vld [vmem:[#allocation2 + $0x138] sm:$0xff]
    %v155 = vld [vmem:[#allocation2 + $0x140] sm:$0xff]
    %v156 = vld [vmem:[#allocation2 + $0x148] sm:$0xff]
    %v157 = vld [vmem:[#allocation2 + $0x150] sm:$0xff]
    %v158 = vld [vmem:[#allocation2 + $0x158] sm:$0xff]
    %v159 = vld [vmem:[#allocation2 + $0x160] sm:$0xff]
    %v160 = vld [vmem:[#allocation2 + $0x168] sm:$0xff]
    %v161 = vld [vmem:[#allocation2 + $0x170] sm:$0xff]
    %v162 = vld [vmem:[#allocation2 + $0x178] sm:$0xff]
    %v163 = vld [vmem:[#allocation2 + $0x180] sm:$0xff]
    %v164 = vld [vmem:[#allocation2 + $0x188] sm:$0xff]
    %v165 = vld [vmem:[#allocation2 + $0x190] sm:$0xff]
    %v166 = vld [vmem:[#allocation2 + $0x198] sm:$0xff]
    %v167 = vld [vmem:[#allocation2 + $0x1a0] sm:$0xff]
    %v168 = vld [vmem:[#allocation2 + $0x1a8] sm:$0xff]
    %v169 = vld [vmem:[#allocation2 + $0x1b0] sm:$0xff]
    %v170 = vld [vmem:[#allocation2 + $0x1b8] sm:$0xff]
    %v171 = vld [vmem:[#allocation2 + $0x1c0] sm:$0xff]
    %v172 = vld [vmem:[#allocation2 + $0x1c8] sm:$0xff]
    %v173 = vld [vmem:[#allocation2 + $0x1d0] sm:$0xff]
    %v174 = vld [vmem:[#allocation2 + $0x1d8] sm:$0xff]
    %v175 = vld [vmem:[#allocation2 + $0x1e0] sm:$0xff]
    %v176 = vld [vmem:[#allocation2 + $0x1e8] sm:$0xff]
    %v177 = vld [vmem:[#allocation2 + $0x1f0] sm:$0xff]
    %v178 = vld [vmem:[#allocation2 + $0x1f8] sm:$0xff]
    %v179 = vld [vmem:[#allocation2 + $0x200] sm:$0xff]
    %v180 = vld [vmem:[#allocation2 + $0x208] sm:$0xff]
    %v181 = vld [vmem:[#allocation2 + $0x210] sm:$0xff]
    %v182 = vld [vmem:[#allocation2 + $0x218] sm:$0xff]
    %v183 = vld [vmem:[#allocation2 + $0x220] sm:$0xff]
    %v184 = vld [vmem:[#allocation2 + $0x228] sm:$0xff]
    %v185 = vld [vmem:[#allocation2 + $0x230] sm:$0xff]
    %v186 = vld [vmem:[#allocation2 + $0x238] sm:$0xff]
    %v187 = vld [vmem:[#allocation2 + $0x240] sm:$0xff]
    %v188 = vld [vmem:[#allocation2 + $0x248] sm:$0xff]
    %v189 = vld [vmem:[#allocation2 + $0x250] sm:$0xff]
    %v190 = vld [vmem:[#allocation2 + $0x258] sm:$0xff]
    %v191 = vld [vmem:[#allocation2 + $0x260] sm:$0xff]
    %v192 = vld [vmem:[#allocation2 + $0x268] sm:$0xff]
    %v193 = vld [vmem:[#allocation2 + $0x270] sm:$0xff]
    %v194 = vld [vmem:[#allocation2 + $0x278] sm:$0xff]
    %v195 = vld [vmem:[#allocation2 + $0x280] sm:$0xff]
    %v196 = vld [vmem:[#allocation2 + $0x288] sm:$0xff]
    %v197 = vld [vmem:[#allocation2 + $0x290] sm:$0xff]
    %v198 = vld [vmem:[#allocation2 + $0x298] sm:$0xff]
    %v199 = vld [vmem:[#allocation2 + $0x2a0] sm:$0xff]
    %v200 = vld [vmem:[#allocation2 + $0x2a8] sm:$0xff]
    %v201 = vld [vmem:[#allocation2 + $0x2b0] sm:$0xff]
    %v202 = vld [vmem:[#allocation2 + $0x2b8] sm:$0xff]
    %v203 = vld [vmem:[#allocation2 + $0x2c0] sm:$0xff]
    %v204 = vld [vmem:[#allocation2 + $0x2c8] sm:$0xff]
    %v205 = vld [vmem:[#allocation2 + $0x2d0] sm:$0xff]
    %v206 = vld [vmem:[#allocation2 + $0x2d8] sm:$0xff]
    %v207 = vld [vmem:[#allocation2 + $0x2e0] sm:$0xff]
    %v208 = vld [vmem:[#allocation2 + $0x2e8] sm:$0xff]
    %v209 = vld [vmem:[#allocation2 + $0x2f0] sm:$0xff]
    %v210 = vld [vmem:[#allocation2 + $0x2f8] sm:$0xff]
    %v211 = vld [vmem:[#allocation2 + $0x300] sm:$0xff]
    %v212 = vld [vmem:[#allocation2 + $0x308] sm:$0xff]
    %v213 = vld [vmem:[#allocation2 + $0x310] sm:$0xff]
    %v214 = vld [vmem:[#allocation2 + $0x318] sm:$0xff]
    %v215 = vld [vmem:[#allocation2 + $0x320] sm:$0xff]
    %v216 = vld [vmem:[#allocation2 + $0x328] sm:$0xff]
    %v217 = vld [vmem:[#allocation2 + $0x330] sm:$0xff]
    %v218 = vld [vmem:[#allocation2 + $0x338] sm:$0xff]
    %v219 = vld [vmem:[#allocation2 + $0x340] sm:$0xff]
    %v220 = vld [vmem:[#allocation2 + $0x348] sm:$0xff]
    %v221 = vld [vmem:[#allocation2 + $0x350] sm:$0xff]
    %v222 = vld [vmem:[#allocation2 + $0x358] sm:$0xff]
    %v223 = vld [vmem:[#allocation2 + $0x360] sm:$0xff]
    %v224 = vld [vmem:[#allocation2 + $0x368] sm:$0xff]
    %v225 = vld [vmem:[#allocation2 + $0x370] sm:$0xff]
    %v226 = vld [vmem:[#allocation2 + $0x378] sm:$0xff]
    %v227 = vld [vmem:[#allocation2 + $0x380] sm:$0xff]
    %v228 = vld [vmem:[#allocation2 + $0x388] sm:$0xff]
    %v229 = vld [vmem:[#allocation2 + $0x390] sm:$0xff]
    %v230 = vld [vmem:[#allocation2 + $0x398] sm:$0xff]
    %v231 = vld [vmem:[#allocation2 + $0x3a0] sm:$0xff]
    %v232 = vld [vmem:[#allocation2 + $0x3a8] sm:$0xff]
    %v233 = vld [vmem:[#allocation2 + $0x3b0] sm:$0xff]
    %v234 = vld [vmem:[#allocation2 + $0x3b8] sm:$0xff]
    %v235 = vld [vmem:[#allocation2 + $0x3c0] sm:$0xff]
    %v236 = vld [vmem:[#allocation2 + $0x3c8] sm:$0xff]
    %v237 = vld [vmem:[#allocation2 + $0x3d0] sm:$0xff]
    %v238 = vld [vmem:[#allocation2 + $0x3d8] sm:$0xff]
    %v239 = vld [vmem:[#allocation2 + $0x3e0] sm:$0xff]
    %v240 = vld [vmem:[#allocation2 + $0x3e8] sm:$0xff]
    %v241 = vld [vmem:[#allocation2 + $0x3f0] sm:$0xff]
    %v242 = vld [vmem:[#allocation2 + $0x3f8] sm:$0xff]
    %v243 = vpack.c.bf16 %v119, %v115
    %v244 = vpack.c.bf16 %v120, %v116
    %v245 = vpack.c.bf16 %v121, %v117
    %v246 = vpack.c.bf16 %v122, %v118
    %v247 = vpack.c.bf16 %v127, %v123
    %v248 = vpack.c.bf16 %v128, %v124
    %v249 = vpack.c.bf16 %v129, %v125
    %v250 = vpack.c.bf16 %v130, %v126
    %v251 = vpack.c.bf16 %v135, %v131
    %v252 = vpack.c.bf16 %v136, %v132
    %v253 = vpack.c.bf16 %v137, %v133
    %v254 = vpack.c.bf16 %v138, %v134
    %v255 = vpack.c.bf16 %v143, %v139
    %v256 = vpack.c.bf16 %v144, %v140
    %v257 = vpack.c.bf16 %v145, %v141
    %v258 = vpack.c.bf16 %v146, %v142
    %v259 = vpack.c.bf16 %v151, %v147
    %v260 = vpack.c.bf16 %v152, %v148
    %v261 = vpack.c.bf16 %v153, %v149
    %v262 = vpack.c.bf16 %v154, %v150
    %v263 = vpack.c.bf16 %v159, %v155
    %v264 = vpack.c.bf16 %v160, %v156
    %v265 = vpack.c.bf16 %v161, %v157
    %v266 = vpack.c.bf16 %v162, %v158
    %v267 = vpack.c.bf16 %v167, %v163
    %v268 = vpack.c.bf16 %v168, %v164
    %v269 = vpack.c.bf16 %v169, %v165
    %v270 = vpack.c.bf16 %v170, %v166
    %v271 = vpack.c.bf16 %v175, %v171
    %v272 = vpack.c.bf16 %v176, %v172
    %v273 = vpack.c.bf16 %v177, %v173
    %v274 = vpack.c.bf16 %v178, %v174
    %v275 = vpack.c.bf16 %v183, %v179
    %v276 = vpack.c.bf16 %v184, %v180
    %v277 = vpack.c.bf16 %v185, %v181
    %v278 = vpack.c.bf16 %v186, %v182
    %v279 = vpack.c.bf16 %v191, %v187
    %v280 = vpack.c.bf16 %v192, %v188
    %v281 = vpack.c.bf16 %v193, %v189
    %v282 = vpack.c.bf16 %v194, %v190
    %v283 = vpack.c.bf16 %v199, %v195
    %v284 = vpack.c.bf16 %v200, %v196
    %v285 = vpack.c.bf16 %v201, %v197
    %v286 = vpack.c.bf16 %v202, %v198
    %v287 = vpack.c.bf16 %v207, %v203
    %v288 = vpack.c.bf16 %v208, %v204
    %v289 = vpack.c.bf16 %v209, %v205
    %v290 = vpack.c.bf16 %v210, %v206
    %v291 = vpack.c.bf16 %v215, %v211
    %v292 = vpack.c.bf16 %v216, %v212
    %v293 = vpack.c.bf16 %v217, %v213
    %v294 = vpack.c.bf16 %v218, %v214
    %v295 = vpack.c.bf16 %v223, %v219
    %v296 = vpack.c.bf16 %v224, %v220
    %v297 = vpack.c.bf16 %v225, %v221
    %v298 = vpack.c.bf16 %v226, %v222
    %v299 = vpack.c.bf16 %v231, %v227
    %v300 = vpack.c.bf16 %v232, %v228
    %v301 = vpack.c.bf16 %v233, %v229
    %v302 = vpack.c.bf16 %v234, %v230
    %v303 = vpack.c.bf16 %v239, %v235
    %v304 = vpack.c.bf16 %v240, %v236
    %v305 = vpack.c.bf16 %v241, %v237
    %v306 = vpack.c.bf16 %v242, %v238
    %v307 = vld [vmem:[#allocation5] sm:$0xff]
    %v308 = vld [vmem:[#allocation5 + $0x8] sm:$0xff]
    %v309 = vld [vmem:[#allocation5 + $0x10] sm:$0xff]
    %v310 = vld [vmem:[#allocation5 + $0x18] sm:$0xff]
    %v311 = vld [vmem:[#allocation5 + $0x20] sm:$0xff]
    %v312 = vld [vmem:[#allocation5 + $0x28] sm:$0xff]
    %v313 = vld [vmem:[#allocation5 + $0x30] sm:$0xff]
    %v314 = vld [vmem:[#allocation5 + $0x38] sm:$0xff]
    %v315 = vld [vmem:[#allocation5 + $0x40] sm:$0xff]
    %v316 = vld [vmem:[#allocation5 + $0x48] sm:$0xff]
    %v317 = vld [vmem:[#allocation5 + $0x50] sm:$0xff]
    %v318 = vld [vmem:[#allocation5 + $0x58] sm:$0xff]
    %v319 = vld [vmem:[#allocation5 + $0x60] sm:$0xff]
    %v320 = vld [vmem:[#allocation5 + $0x68] sm:$0xff]
    %v321 = vld [vmem:[#allocation5 + $0x70] sm:$0xff]
    %v322 = vld [vmem:[#allocation5 + $0x78] sm:$0xff]
    %v323 = vld [vmem:[#allocation5 + $0x80] sm:$0xff]
    %v324 = vld [vmem:[#allocation5 + $0x88] sm:$0xff]
    %v325 = vld [vmem:[#allocation5 + $0x90] sm:$0xff]
    %v326 = vld [vmem:[#allocation5 + $0x98] sm:$0xff]
    %v327 = vld [vmem:[#allocation5 + $0xa0] sm:$0xff]
    %v328 = vld [vmem:[#allocation5 + $0xa8] sm:$0xff]
    %v329 = vld [vmem:[#allocation5 + $0xb0] sm:$0xff]
    %v330 = vld [vmem:[#allocation5 + $0xb8] sm:$0xff]
    %v331 = vld [vmem:[#allocation5 + $0xc0] sm:$0xff]
    %v332 = vld [vmem:[#allocation5 + $0xc8] sm:$0xff]
    %v333 = vld [vmem:[#allocation5 + $0xd0] sm:$0xff]
    %v334 = vld [vmem:[#allocation5 + $0xd8] sm:$0xff]
    %v335 = vld [vmem:[#allocation5 + $0xe0] sm:$0xff]
    %v336 = vld [vmem:[#allocation5 + $0xe8] sm:$0xff]
    %v337 = vld [vmem:[#allocation5 + $0xf0] sm:$0xff]
    %v338 = vld [vmem:[#allocation5 + $0xf8] sm:$0xff]
    %v339 = vld [vmem:[#allocation5 + $0x100] sm:$0xff]
    %v340 = vld [vmem:[#allocation5 + $0x108] sm:$0xff]
    %v341 = vld [vmem:[#allocation5 + $0x110] sm:$0xff]
    %v342 = vld [vmem:[#allocation5 + $0x118] sm:$0xff]
    %v343 = vld [vmem:[#allocation5 + $0x120] sm:$0xff]
    %v344 = vld [vmem:[#allocation5 + $0x128] sm:$0xff]
    %v345 = vld [vmem:[#allocation5 + $0x130] sm:$0xff]
    %v346 = vld [vmem:[#allocation5 + $0x138] sm:$0xff]
    %v347 = vld [vmem:[#allocation5 + $0x140] sm:$0xff]
    %v348 = vld [vmem:[#allocation5 + $0x148] sm:$0xff]
    %v349 = vld [vmem:[#allocation5 + $0x150] sm:$0xff]
    %v350 = vld [vmem:[#allocation5 + $0x158] sm:$0xff]
    %v351 = vld [vmem:[#allocation5 + $0x160] sm:$0xff]
    %v352 = vld [vmem:[#allocation5 + $0x168] sm:$0xff]
    %v353 = vld [vmem:[#allocation5 + $0x170] sm:$0xff]
    %v354 = vld [vmem:[#allocation5 + $0x178] sm:$0xff]
    %v355 = vld [vmem:[#allocation5 + $0x180] sm:$0xff]
    %v356 = vld [vmem:[#allocation5 + $0x188] sm:$0xff]
    %v357 = vld [vmem:[#allocation5 + $0x190] sm:$0xff]
    %v358 = vld [vmem:[#allocation5 + $0x198] sm:$0xff]
    %v359 = vld [vmem:[#allocation5 + $0x1a0] sm:$0xff]
    %v360 = vld [vmem:[#allocation5 + $0x1a8] sm:$0xff]
    %v361 = vld [vmem:[#allocation5 + $0x1b0] sm:$0xff]
    %v362 = vld [vmem:[#allocation5 + $0x1b8] sm:$0xff]
    %v363 = vld [vmem:[#allocation5 + $0x1c0] sm:$0xff]
    %v364 = vld [vmem:[#allocation5 + $0x1c8] sm:$0xff]
    %v365 = vld [vmem:[#allocation5 + $0x1d0] sm:$0xff]
    %v366 = vld [vmem:[#allocation5 + $0x1d8] sm:$0xff]
    %v367 = vld [vmem:[#allocation5 + $0x1e0] sm:$0xff]
    %v368 = vld [vmem:[#allocation5 + $0x1e8] sm:$0xff]
    %v369 = vld [vmem:[#allocation5 + $0x1f0] sm:$0xff]
    %v370 = vld [vmem:[#allocation5 + $0x1f8] sm:$0xff]
    %v371 = vld [vmem:[#allocation5 + $0x200] sm:$0xff]
    %v372 = vld [vmem:[#allocation5 + $0x208] sm:$0xff]
    %v373 = vld [vmem:[#allocation5 + $0x210] sm:$0xff]
    %v374 = vld [vmem:[#allocation5 + $0x218] sm:$0xff]
    %v375 = vld [vmem:[#allocation5 + $0x220] sm:$0xff]
    %v376 = vld [vmem:[#allocation5 + $0x228] sm:$0xff]
    %v377 = vld [vmem:[#allocation5 + $0x230] sm:$0xff]
    %v378 = vld [vmem:[#allocation5 + $0x238] sm:$0xff]
    %v379 = vld [vmem:[#allocation5 + $0x240] sm:$0xff]
    %v380 = vld [vmem:[#allocation5 + $0x248] sm:$0xff]
    %v381 = vld [vmem:[#allocation5 + $0x250] sm:$0xff]
    %v382 = vld [vmem:[#allocation5 + $0x258] sm:$0xff]
    %v383 = vld [vmem:[#allocation5 + $0x260] sm:$0xff]
    %v384 = vld [vmem:[#allocation5 + $0x268] sm:$0xff]
    %v385 = vld [vmem:[#allocation5 + $0x270] sm:$0xff]
    %v386 = vld [vmem:[#allocation5 + $0x278] sm:$0xff]
    %v387 = vld [vmem:[#allocation5 + $0x280] sm:$0xff]
    %v388 = vld [vmem:[#allocation5 + $0x288] sm:$0xff]
    %v389 = vld [vmem:[#allocation5 + $0x290] sm:$0xff]
    %v390 = vld [vmem:[#allocation5 + $0x298] sm:$0xff]
    %v391 = vld [vmem:[#allocation5 + $0x2a0] sm:$0xff]
    %v392 = vld [vmem:[#allocation5 + $0x2a8] sm:$0xff]
    %v393 = vld [vmem:[#allocation5 + $0x2b0] sm:$0xff]
    %v394 = vld [vmem:[#allocation5 + $0x2b8] sm:$0xff]
    %v395 = vld [vmem:[#allocation5 + $0x2c0] sm:$0xff]
    %v396 = vld [vmem:[#allocation5 + $0x2c8] sm:$0xff]
    %v397 = vld [vmem:[#allocation5 + $0x2d0] sm:$0xff]
    %v398 = vld [vmem:[#allocation5 + $0x2d8] sm:$0xff]
    %v399 = vld [vmem:[#allocation5 + $0x2e0] sm:$0xff]
    %v400 = vld [vmem:[#allocation5 + $0x2e8] sm:$0xff]
    %v401 = vld [vmem:[#allocation5 + $0x2f0] sm:$0xff]
    %v402 = vld [vmem:[#allocation5 + $0x2f8] sm:$0xff]
    %v403 = vld [vmem:[#allocation5 + $0x300] sm:$0xff]
    %v404 = vld [vmem:[#allocation5 + $0x308] sm:$0xff]
    %v405 = vld [vmem:[#allocation5 + $0x310] sm:$0xff]
    %v406 = vld [vmem:[#allocation5 + $0x318] sm:$0xff]
    %v407 = vld [vmem:[#allocation5 + $0x320] sm:$0xff]
    %v408 = vld [vmem:[#allocation5 + $0x328] sm:$0xff]
    %v409 = vld [vmem:[#allocation5 + $0x330] sm:$0xff]
    %v410 = vld [vmem:[#allocation5 + $0x338] sm:$0xff]
    %v411 = vld [vmem:[#allocation5 + $0x340] sm:$0xff]
    %v412 = vld [vmem:[#allocation5 + $0x348] sm:$0xff]
    %v413 = vld [vmem:[#allocation5 + $0x350] sm:$0xff]
    %v414 = vld [vmem:[#allocation5 + $0x358] sm:$0xff]
    %v415 = vld [vmem:[#allocation5 + $0x360] sm:$0xff]
    %v416 = vld [vmem:[#allocation5 + $0x368] sm:$0xff]
    %v417 = vld [vmem:[#allocation5 + $0x370] sm:$0xff]
    %v418 = vld [vmem:[#allocation5 + $0x378] sm:$0xff]
    %v419 = vld [vmem:[#allocation5 + $0x380] sm:$0xff]
    %v420 = vld [vmem:[#allocation5 + $0x388] sm:$0xff]
    %v421 = vld [vmem:[#allocation5 + $0x390] sm:$0xff]
    %v422 = vld [vmem:[#allocation5 + $0x398] sm:$0xff]
    %v423 = vld [vmem:[#allocation5 + $0x3a0] sm:$0xff]
    %v424 = vld [vmem:[#allocation5 + $0x3a8] sm:$0xff]
    %v425 = vld [vmem:[#allocation5 + $0x3b0] sm:$0xff]
    %v426 = vld [vmem:[#allocation5 + $0x3b8] sm:$0xff]
    %v427 = vld [vmem:[#allocation5 + $0x3c0] sm:$0xff]
    %v428 = vld [vmem:[#allocation5 + $0x3c8] sm:$0xff]
    %v429 = vld [vmem:[#allocation5 + $0x3d0] sm:$0xff]
    %v430 = vld [vmem:[#allocation5 + $0x3d8] sm:$0xff]
    %v431 = vld [vmem:[#allocation5 + $0x3e0] sm:$0xff]
    %v432 = vld [vmem:[#allocation5 + $0x3e8] sm:$0xff]
    %v433 = vld [vmem:[#allocation5 + $0x3f0] sm:$0xff]
    %v434 = vld [vmem:[#allocation5 + $0x3f8] sm:$0xff]
    %v435 = vld [vmem:[#allocation7] sm:$0xf]
    %v437 = vperm.slane %v435, 0
    %v438 = vperm.slane %v435, 1
    %v439 = vperm.slane %v435, 2
    %v440 = vperm.slane %v435, 3
    %v573 = vunpack.c.l.b16 %v307
    %v574 = vunpack.c.h.b16 %v307
    %v575 = vunpack.c.l.b16 %v308
    %v576 = vunpack.c.h.b16 %v308
    %v577 = vunpack.c.l.b16 %v309
    %v578 = vunpack.c.h.b16 %v309
    %v579 = vunpack.c.l.b16 %v310
    %v580 = vunpack.c.h.b16 %v310
    %v581 = vunpack.c.l.b16 %v311
    %v582 = vunpack.c.h.b16 %v311
    %v583 = vunpack.c.l.b16 %v312
    %v584 = vunpack.c.h.b16 %v312
    %v585 = vunpack.c.l.b16 %v313
    %v586 = vunpack.c.h.b16 %v313
    %v587 = vunpack.c.l.b16 %v314
    %v588 = vunpack.c.h.b16 %v314
    %v589 = vunpack.c.l.b16 %v315
    %v590 = vunpack.c.h.b16 %v315
    %v591 = vunpack.c.l.b16 %v316
    %v592 = vunpack.c.h.b16 %v316
    %v593 = vunpack.c.l.b16 %v317
    %v594 = vunpack.c.h.b16 %v317
    %v595 = vunpack.c.l.b16 %v318
    %v596 = vunpack.c.h.b16 %v318
    %v597 = vunpack.c.l.b16 %v319
    %v598 = vunpack.c.h.b16 %v319
    %v599 = vunpack.c.l.b16 %v320
    %v600 = vunpack.c.h.b16 %v320
    %v601 = vunpack.c.l.b16 %v321
    %v602 = vunpack.c.h.b16 %v321
    %v603 = vunpack.c.l.b16 %v322
    %v604 = vunpack.c.h.b16 %v322
    %v605 = vunpack.c.l.b16 %v323
    %v606 = vunpack.c.h.b16 %v323
    %v607 = vunpack.c.l.b16 %v324
    %v608 = vunpack.c.h.b16 %v324
    %v609 = vunpack.c.l.b16 %v325
    %v610 = vunpack.c.h.b16 %v325
    %v611 = vunpack.c.l.b16 %v326
    %v612 = vunpack.c.h.b16 %v326
    %v613 = vunpack.c.l.b16 %v327
    %v614 = vunpack.c.h.b16 %v327
    %v615 = vunpack.c.l.b16 %v328
    %v616 = vunpack.c.h.b16 %v328
    %v617 = vunpack.c.l.b16 %v329
    %v618 = vunpack.c.h.b16 %v329
    %v619 = vunpack.c.l.b16 %v330
    %v620 = vunpack.c.h.b16 %v330
    %v621 = vunpack.c.l.b16 %v331
    %v622 = vunpack.c.h.b16 %v331
    %v623 = vunpack.c.l.b16 %v332
    %v624 = vunpack.c.h.b16 %v332
    %v625 = vunpack.c.l.b16 %v333
    %v626 = vunpack.c.h.b16 %v333
    %v627 = vunpack.c.l.b16 %v334
    %v628 = vunpack.c.h.b16 %v334
    %v629 = vunpack.c.l.b16 %v335
    %v630 = vunpack.c.h.b16 %v335
    %v631 = vunpack.c.l.b16 %v336
    %v632 = vunpack.c.h.b16 %v336
    %v633 = vunpack.c.l.b16 %v337
    %v634 = vunpack.c.h.b16 %v337
    %v635 = vunpack.c.l.b16 %v338
    %v636 = vunpack.c.h.b16 %v338
    %v637 = vunpack.c.l.b16 %v339
    %v638 = vunpack.c.h.b16 %v339
    %v639 = vunpack.c.l.b16 %v340
    %v640 = vunpack.c.h.b16 %v340
    %v641 = vunpack.c.l.b16 %v341
    %v642 = vunpack.c.h.b16 %v341
    %v643 = vunpack.c.l.b16 %v342
    %v644 = vunpack.c.h.b16 %v342
    %v645 = vunpack.c.l.b16 %v343
    %v646 = vunpack.c.h.b16 %v343
    %v647 = vunpack.c.l.b16 %v344
    %v648 = vunpack.c.h.b16 %v344
    %v649 = vunpack.c.l.b16 %v345
    %v650 = vunpack.c.h.b16 %v345
    %v651 = vunpack.c.l.b16 %v346
    %v652 = vunpack.c.h.b16 %v346
    %v653 = vunpack.c.l.b16 %v347
    %v654 = vunpack.c.h.b16 %v347
    %v655 = vunpack.c.l.b16 %v348
    %v656 = vunpack.c.h.b16 %v348
    %v657 = vunpack.c.l.b16 %v349
    %v658 = vunpack.c.h.b16 %v349
    %v659 = vunpack.c.l.b16 %v350
    %v660 = vunpack.c.h.b16 %v350
    %v661 = vunpack.c.l.b16 %v351
    %v662 = vunpack.c.h.b16 %v351
    %v663 = vunpack.c.l.b16 %v352
    %v664 = vunpack.c.h.b16 %v352
    %v665 = vunpack.c.l.b16 %v353
    %v666 = vunpack.c.h.b16 %v353
    %v667 = vunpack.c.l.b16 %v354
    %v668 = vunpack.c.h.b16 %v354
    %v669 = vunpack.c.l.b16 %v355
    %v670 = vunpack.c.h.b16 %v355
    %v671 = vunpack.c.l.b16 %v356
    %v672 = vunpack.c.h.b16 %v356
    %v673 = vunpack.c.l.b16 %v357
    %v674 = vunpack.c.h.b16 %v357
    %v675 = vunpack.c.l.b16 %v358
    %v676 = vunpack.c.h.b16 %v358
    %v677 = vunpack.c.l.b16 %v359
    %v678 = vunpack.c.h.b16 %v359
    %v679 = vunpack.c.l.b16 %v360
    %v680 = vunpack.c.h.b16 %v360
    %v681 = vunpack.c.l.b16 %v361
    %v682 = vunpack.c.h.b16 %v361
    %v683 = vunpack.c.l.b16 %v362
    %v684 = vunpack.c.h.b16 %v362
    %v685 = vunpack.c.l.b16 %v363
    %v686 = vunpack.c.h.b16 %v363
    %v687 = vunpack.c.l.b16 %v364
    %v688 = vunpack.c.h.b16 %v364
    %v689 = vunpack.c.l.b16 %v365
    %v690 = vunpack.c.h.b16 %v365
    %v691 = vunpack.c.l.b16 %v366
    %v692 = vunpack.c.h.b16 %v366
    %v693 = vunpack.c.l.b16 %v367
    %v694 = vunpack.c.h.b16 %v367
    %v695 = vunpack.c.l.b16 %v368
    %v696 = vunpack.c.h.b16 %v368
    %v697 = vunpack.c.l.b16 %v369
    %v698 = vunpack.c.h.b16 %v369
    %v699 = vunpack.c.l.b16 %v370
    %v700 = vunpack.c.h.b16 %v370
    %v701 = vunpack.c.l.b16 %v371
    %v702 = vunpack.c.h.b16 %v371
    %v703 = vunpack.c.l.b16 %v372
    %v704 = vunpack.c.h.b16 %v372
    %v705 = vunpack.c.l.b16 %v373
    %v706 = vunpack.c.h.b16 %v373
    %v707 = vunpack.c.l.b16 %v374
    %v708 = vunpack.c.h.b16 %v374
    %v709 = vunpack.c.l.b16 %v375
    %v710 = vunpack.c.h.b16 %v375
    %v711 = vunpack.c.l.b16 %v376
    %v712 = vunpack.c.h.b16 %v376
    %v713 = vunpack.c.l.b16 %v377
    %v714 = vunpack.c.h.b16 %v377
    %v715 = vunpack.c.l.b16 %v378
    %v716 = vunpack.c.h.b16 %v378
    %v717 = vunpack.c.l.b16 %v379
    %v718 = vunpack.c.h.b16 %v379
    %v719 = vunpack.c.l.b16 %v380
    %v720 = vunpack.c.h.b16 %v380
    %v721 = vunpack.c.l.b16 %v381
    %v722 = vunpack.c.h.b16 %v381
    %v723 = vunpack.c.l.b16 %v382
    %v724 = vunpack.c.h.b16 %v382
    %v725 = vunpack.c.l.b16 %v383
    %v726 = vunpack.c.h.b16 %v383
    %v727 = vunpack.c.l.b16 %v384
    %v728 = vunpack.c.h.b16 %v384
    %v729 = vunpack.c.l.b16 %v385
    %v730 = vunpack.c.h.b16 %v385
    %v731 = vunpack.c.l.b16 %v386
    %v732 = vunpack.c.h.b16 %v386
    %v733 = vunpack.c.l.b16 %v387
    %v734 = vunpack.c.h.b16 %v387
    %v735 = vunpack.c.l.b16 %v388
    %v736 = vunpack.c.h.b16 %v388
    %v737 = vunpack.c.l.b16 %v389
    %v738 = vunpack.c.h.b16 %v389
    %v739 = vunpack.c.l.b16 %v390
    %v740 = vunpack.c.h.b16 %v390
    %v741 = vunpack.c.l.b16 %v391
    %v742 = vunpack.c.h.b16 %v391
    %v743 = vunpack.c.l.b16 %v392
    %v744 = vunpack.c.h.b16 %v392
    %v745 = vunpack.c.l.b16 %v393
    %v746 = vunpack.c.h.b16 %v393
    %v747 = vunpack.c.l.b16 %v394
    %v748 = vunpack.c.h.b16 %v394
    %v749 = vunpack.c.l.b16 %v395
    %v750 = vunpack.c.h.b16 %v395
    %v751 = vunpack.c.l.b16 %v396
    %v752 = vunpack.c.h.b16 %v396
    %v753 = vunpack.c.l.b16 %v397
    %v754 = vunpack.c.h.b16 %v397
    %v755 = vunpack.c.l.b16 %v398
    %v756 = vunpack.c.h.b16 %v398
    %v757 = vunpack.c.l.b16 %v399
    %v758 = vunpack.c.h.b16 %v399
    %v759 = vunpack.c.l.b16 %v400
    %v760 = vunpack.c.h.b16 %v400
    %v761 = vunpack.c.l.b16 %v401
    %v762 = vunpack.c.h.b16 %v401
    %v763 = vunpack.c.l.b16 %v402
    %v764 = vunpack.c.h.b16 %v402
    %v765 = vunpack.c.l.b16 %v403
    %v766 = vunpack.c.h.b16 %v403
    %v767 = vunpack.c.l.b16 %v404
    %v768 = vunpack.c.h.b16 %v404
    %v769 = vunpack.c.l.b16 %v405
    %v770 = vunpack.c.h.b16 %v405
    %v771 = vunpack.c.l.b16 %v406
    %v772 = vunpack.c.h.b16 %v406
    %v773 = vunpack.c.l.b16 %v407
    %v774 = vunpack.c.h.b16 %v407
    %v775 = vunpack.c.l.b16 %v408
    %v776 = vunpack.c.h.b16 %v408
    %v777 = vunpack.c.l.b16 %v409
    %v778 = vunpack.c.h.b16 %v409
    %v779 = vunpack.c.l.b16 %v410
    %v780 = vunpack.c.h.b16 %v410
    %v781 = vunpack.c.l.b16 %v411
    %v782 = vunpack.c.h.b16 %v411
    %v783 = vunpack.c.l.b16 %v412
    %v784 = vunpack.c.h.b16 %v412
    %v785 = vunpack.c.l.b16 %v413
    %v786 = vunpack.c.h.b16 %v413
    %v787 = vunpack.c.l.b16 %v414
    %v788 = vunpack.c.h.b16 %v414
    %v789 = vunpack.c.l.b16 %v415
    %v790 = vunpack.c.h.b16 %v415
    %v791 = vunpack.c.l.b16 %v416
    %v792 = vunpack.c.h.b16 %v416
    %v793 = vunpack.c.l.b16 %v417
    %v794 = vunpack.c.h.b16 %v417
    %v795 = vunpack.c.l.b16 %v418
    %v796 = vunpack.c.h.b16 %v418
    %v797 = vunpack.c.l.b16 %v419
    %v798 = vunpack.c.h.b16 %v419
    %v799 = vunpack.c.l.b16 %v420
    %v800 = vunpack.c.h.b16 %v420
    %v801 = vunpack.c.l.b16 %v421
    %v802 = vunpack.c.h.b16 %v421
    %v803 = vunpack.c.l.b16 %v422
    %v804 = vunpack.c.h.b16 %v422
    %v805 = vunpack.c.l.b16 %v423
    %v806 = vunpack.c.h.b16 %v423
    %v807 = vunpack.c.l.b16 %v424
    %v808 = vunpack.c.h.b16 %v424
    %v809 = vunpack.c.l.b16 %v425
    %v810 = vunpack.c.h.b16 %v425
    %v811 = vunpack.c.l.b16 %v426
    %v812 = vunpack.c.h.b16 %v426
    %v813 = vunpack.c.l.b16 %v427
    %v814 = vunpack.c.h.b16 %v427
    %v815 = vunpack.c.l.b16 %v428
    %v816 = vunpack.c.h.b16 %v428
    %v817 = vunpack.c.l.b16 %v429
    %v818 = vunpack.c.h.b16 %v429
    %v819 = vunpack.c.l.b16 %v430
    %v820 = vunpack.c.h.b16 %v430
    %v821 = vunpack.c.l.b16 %v431
    %v822 = vunpack.c.h.b16 %v431
    %v823 = vunpack.c.l.b16 %v432
    %v824 = vunpack.c.h.b16 %v432
    %v825 = vunpack.c.l.b16 %v433
    %v826 = vunpack.c.h.b16 %v433
    %v827 = vunpack.c.l.b16 %v434
    %v828 = vunpack.c.h.b16 %v434
    %v829 = vpack.c.b16 %v577, %v573
    %v830 = vpack.c.b16 %v578, %v574
    %v831 = vpack.c.b16 %v579, %v575
    %v832 = vpack.c.b16 %v580, %v576
    %v833 = vpack.c.b16 %v585, %v581
    %v834 = vpack.c.b16 %v586, %v582
    %v835 = vpack.c.b16 %v587, %v583
    %v836 = vpack.c.b16 %v588, %v584
    %v837 = vpack.c.b16 %v593, %v589
    %v838 = vpack.c.b16 %v594, %v590
    %v839 = vpack.c.b16 %v595, %v591
    %v840 = vpack.c.b16 %v596, %v592
    %v841 = vpack.c.b16 %v601, %v597
    %v842 = vpack.c.b16 %v602, %v598
    %v843 = vpack.c.b16 %v603, %v599
    %v844 = vpack.c.b16 %v604, %v600
    %v845 = vpack.c.b16 %v609, %v605
    %v846 = vpack.c.b16 %v610, %v606
    %v847 = vpack.c.b16 %v611, %v607
    %v848 = vpack.c.b16 %v612, %v608
    %v849 = vpack.c.b16 %v617, %v613
    %v850 = vpack.c.b16 %v618, %v614
    %v851 = vpack.c.b16 %v619, %v615
    %v852 = vpack.c.b16 %v620, %v616
    %v853 = vpack.c.b16 %v625, %v621
    %v854 = vpack.c.b16 %v626, %v622
    %v855 = vpack.c.b16 %v627, %v623
    %v856 = vpack.c.b16 %v628, %v624
    %v857 = vpack.c.b16 %v633, %v629
    %v858 = vpack.c.b16 %v634, %v630
    %v859 = vpack.c.b16 %v635, %v631
    %v860 = vpack.c.b16 %v636, %v632
    %v861 = vpack.c.b16 %v641, %v637
    %v862 = vpack.c.b16 %v642, %v638
    %v863 = vpack.c.b16 %v643, %v639
    %v864 = vpack.c.b16 %v644, %v640
    %v865 = vpack.c.b16 %v649, %v645
    %v866 = vpack.c.b16 %v650, %v646
    %v867 = vpack.c.b16 %v651, %v647
    %v868 = vpack.c.b16 %v652, %v648
    %v869 = vpack.c.b16 %v657, %v653
    %v870 = vpack.c.b16 %v658, %v654
    %v871 = vpack.c.b16 %v659, %v655
    %v872 = vpack.c.b16 %v660, %v656
    %v873 = vpack.c.b16 %v665, %v661
    %v874 = vpack.c.b16 %v666, %v662
    %v875 = vpack.c.b16 %v667, %v663
    %v876 = vpack.c.b16 %v668, %v664
    %v877 = vpack.c.b16 %v673, %v669
    %v878 = vpack.c.b16 %v674, %v670
    %v879 = vpack.c.b16 %v675, %v671
    %v880 = vpack.c.b16 %v676, %v672
    %v881 = vpack.c.b16 %v681, %v677
    %v882 = vpack.c.b16 %v682, %v678
    %v883 = vpack.c.b16 %v683, %v679
    %v884 = vpack.c.b16 %v684, %v680
    %v885 = vpack.c.b16 %v689, %v685
    %v886 = vpack.c.b16 %v690, %v686
    %v887 = vpack.c.b16 %v691, %v687
    %v888 = vpack.c.b16 %v692, %v688
    %v889 = vpack.c.b16 %v697, %v693
    %v890 = vpack.c.b16 %v698, %v694
    %v891 = vpack.c.b16 %v699, %v695
    %v892 = vpack.c.b16 %v700, %v696
    %v893 = vpack.c.b16 %v705, %v701
    %v894 = vpack.c.b16 %v706, %v702
    %v895 = vpack.c.b16 %v707, %v703
    %v896 = vpack.c.b16 %v708, %v704
    %v897 = vpack.c.b16 %v713, %v709
    %v898 = vpack.c.b16 %v714, %v710
    %v899 = vpack.c.b16 %v715, %v711
    %v900 = vpack.c.b16 %v716, %v712
    %v901 = vpack.c.b16 %v721, %v717
    %v902 = vpack.c.b16 %v722, %v718
    %v903 = vpack.c.b16 %v723, %v719
    %v904 = vpack.c.b16 %v724, %v720
    %v905 = vpack.c.b16 %v729, %v725
    %v906 = vpack.c.b16 %v730, %v726
    %v907 = vpack.c.b16 %v731, %v727
    %v908 = vpack.c.b16 %v732, %v728
    %v909 = vpack.c.b16 %v737, %v733
    %v910 = vpack.c.b16 %v738, %v734
    %v911 = vpack.c.b16 %v739, %v735
    %v912 = vpack.c.b16 %v740, %v736
    %v913 = vpack.c.b16 %v745, %v741
    %v914 = vpack.c.b16 %v746, %v742
    %v915 = vpack.c.b16 %v747, %v743
    %v916 = vpack.c.b16 %v748, %v744
    %v917 = vpack.c.b16 %v753, %v749
    %v918 = vpack.c.b16 %v754, %v750
    %v919 = vpack.c.b16 %v755, %v751
    %v920 = vpack.c.b16 %v756, %v752
    %v921 = vpack.c.b16 %v761, %v757
    %v922 = vpack.c.b16 %v762, %v758
    %v923 = vpack.c.b16 %v763, %v759
    %v924 = vpack.c.b16 %v764, %v760
    %v925 = vpack.c.b16 %v769, %v765
    %v926 = vpack.c.b16 %v770, %v766
    %v927 = vpack.c.b16 %v771, %v767
    %v928 = vpack.c.b16 %v772, %v768
    %v929 = vpack.c.b16 %v777, %v773
    %v930 = vpack.c.b16 %v778, %v774
    %v931 = vpack.c.b16 %v779, %v775
    %v932 = vpack.c.b16 %v780, %v776
    %v933 = vpack.c.b16 %v785, %v781
    %v934 = vpack.c.b16 %v786, %v782
    %v935 = vpack.c.b16 %v787, %v783
    %v936 = vpack.c.b16 %v788, %v784
    %v937 = vpack.c.b16 %v793, %v789
    %v938 = vpack.c.b16 %v794, %v790
    %v939 = vpack.c.b16 %v795, %v791
    %v940 = vpack.c.b16 %v796, %v792
    %v941 = vpack.c.b16 %v801, %v797
    %v942 = vpack.c.b16 %v802, %v798
    %v943 = vpack.c.b16 %v803, %v799
    %v944 = vpack.c.b16 %v804, %v800
    %v945 = vpack.c.b16 %v809, %v805
    %v946 = vpack.c.b16 %v810, %v806
    %v947 = vpack.c.b16 %v811, %v807
    %v948 = vpack.c.b16 %v812, %v808
    %v949 = vpack.c.b16 %v817, %v813
    %v950 = vpack.c.b16 %v818, %v814
    %v951 = vpack.c.b16 %v819, %v815
    %v952 = vpack.c.b16 %v820, %v816
    %v953 = vpack.c.b16 %v825, %v821
    %v954 = vpack.c.b16 %v826, %v822
    %v955 = vpack.c.b16 %v827, %v823
    %v956 = vpack.c.b16 %v828, %v824
    %1085 = vmatpush.bf16.msra.mxu0 %v857
    %1086 = vmatpush.bf16.msra.mxu0 %v853
    %1087 = vmatpush.bf16.msra.mxu0 %v849
    %1088 = vmatpush.bf16.msra.mxu0 %v845
    %1089 = vmatpush.bf16.msra.mxu0 %v841
    %1090 = vmatpush.bf16.msra.mxu0 %v837
    %1091 = vmatpush.bf16.msra.mxu0 %v833
    %1092 = vmatpush.bf16.msra.mxu0 %v829
    %1093 = vmatmul.bf16.gmra.mxu0 %v243
    %v1094 = vpop.f32.mrf.mxu0
    %v1095 = vadd.f32 %v437, %v1094
    %v1096 = vpop.f32.mrf.mxu0
    %v1097 = vadd.f32 %v437, %v1096
    %1098 = vmatmul.bf16.gmra.mxu0 %v247
    %v1099 = vpop.f32.mrf.mxu0
    %v1100 = vadd.f32 %v437, %v1099
    %v1101 = vpop.f32.mrf.mxu0
    %v1102 = vadd.f32 %v437, %v1101
    %1103 = vmatmul.bf16.gmra.mxu0 %v251
    %v1104 = vpop.f32.mrf.mxu0
    %v1105 = vadd.f32 %v437, %v1104
    %v1106 = vpop.f32.mrf.mxu0
    %v1107 = vadd.f32 %v437, %v1106
    %1108 = vmatmul.bf16.gmra.mxu0 %v255
    %v1109 = vpop.f32.mrf.mxu0
    %v1110 = vadd.f32 %v437, %v1109
    %v1111 = vpop.f32.mrf.mxu0
    %v1112 = vadd.f32 %v437, %v1111
    %1113 = vmatmul.bf16.gmra.mxu0 %v259
    %v1114 = vpop.f32.mrf.mxu0
    %v1115 = vadd.f32 %v437, %v1114
    %v1116 = vpop.f32.mrf.mxu0
    %v1117 = vadd.f32 %v437, %v1116
    %1118 = vmatmul.bf16.gmra.mxu0 %v263
    %v1119 = vpop.f32.mrf.mxu0
    %v1120 = vadd.f32 %v437, %v1119
    %v1121 = vpop.f32.mrf.mxu0
    %v1122 = vadd.f32 %v437, %v1121
    %1123 = vmatmul.bf16.gmra.mxu0 %v267
    %v1124 = vpop.f32.mrf.mxu0
    %v1125 = vadd.f32 %v437, %v1124
    %v1126 = vpop.f32.mrf.mxu0
    %v1127 = vadd.f32 %v437, %v1126
    %1128 = vmatmul.bf16.gmra.mxu0 %v271
    %v1129 = vpop.f32.mrf.mxu0
    %v1130 = vadd.f32 %v437, %v1129
    %v1131 = vpop.f32.mrf.mxu0
    %v1132 = vadd.f32 %v437, %v1131
    %1133 = vmatmul.bf16.gmra.mxu0 %v275
    %v1134 = vpop.f32.mrf.mxu0
    %v1135 = vadd.f32 %v437, %v1134
    %v1136 = vpop.f32.mrf.mxu0
    %v1137 = vadd.f32 %v437, %v1136
    %1138 = vmatmul.bf16.gmra.mxu0 %v279
    %v1139 = vpop.f32.mrf.mxu0
    %v1140 = vadd.f32 %v437, %v1139
    %v1141 = vpop.f32.mrf.mxu0
    %v1142 = vadd.f32 %v437, %v1141
    %1143 = vmatmul.bf16.gmra.mxu0 %v283
    %v1144 = vpop.f32.mrf.mxu0
    %v1145 = vadd.f32 %v437, %v1144
    %v1146 = vpop.f32.mrf.mxu0
    %v1147 = vadd.f32 %v437, %v1146
    %1148 = vmatmul.bf16.gmra.mxu0 %v287
    %v1149 = vpop.f32.mrf.mxu0
    %v1150 = vadd.f32 %v437, %v1149
    %v1151 = vpop.f32.mrf.mxu0
    %v1152 = vadd.f32 %v437, %v1151
    %1153 = vmatmul.bf16.gmra.mxu0 %v291
    %v1154 = vpop.f32.mrf.mxu0
    %v1155 = vadd.f32 %v437, %v1154
    %v1156 = vpop.f32.mrf.mxu0
    %v1157 = vadd.f32 %v437, %v1156
    %1158 = vmatmul.bf16.gmra.mxu0 %v295
    %v1159 = vpop.f32.mrf.mxu0
    %v1160 = vadd.f32 %v437, %v1159
    %v1161 = vpop.f32.mrf.mxu0
    %v1162 = vadd.f32 %v437, %v1161
    %1163 = vmatmul.bf16.gmra.mxu0 %v299
    %v1164 = vpop.f32.mrf.mxu0
    %v1165 = vadd.f32 %v437, %v1164
    %v1166 = vpop.f32.mrf.mxu0
    %v1167 = vadd.f32 %v437, %v1166
    %1168 = vmatmul.bf16.gmra.mxu0 %v303
    %v1169 = vpop.f32.mrf.mxu0
    %v1170 = vadd.f32 %v437, %v1169
    %v1171 = vpop.f32.mrf.mxu0
    %v1172 = vadd.f32 %v437, %v1171
    %1173 = vdwg.mxu0
    %1174 = vmatpush.bf16.msra.mxu0 %v889
    %1175 = vmatpush.bf16.msra.mxu0 %v885
    %1176 = vmatpush.bf16.msra.mxu0 %v881
    %1177 = vmatpush.bf16.msra.mxu0 %v877
    %1178 = vmatpush.bf16.msra.mxu0 %v873
    %1179 = vmatpush.bf16.msra.mxu0 %v869
    %1180 = vmatpush.bf16.msra.mxu0 %v865
    %1181 = vmatpush.bf16.msra.mxu0 %v861
    %1182 = vmatmul.bf16.gmra.mxu0 %v244
    %v1183 = vpop.f32.mrf.mxu0
    %v1184 = vadd.f32 %v1095, %v1183
    %v1185 = vpop.f32.mrf.mxu0
    %v1186 = vadd.f32 %v1097, %v1185
    %1187 = vmatmul.bf16.gmra.mxu0 %v248
    %v1188 = vpop.f32.mrf.mxu0
    %v1189 = vadd.f32 %v1100, %v1188
    %v1190 = vpop.f32.mrf.mxu0
    %v1191 = vadd.f32 %v1102, %v1190
    %1192 = vmatmul.bf16.gmra.mxu0 %v252
    %v1193 = vpop.f32.mrf.mxu0
    %v1194 = vadd.f32 %v1105, %v1193
    %v1195 = vpop.f32.mrf.mxu0
    %v1196 = vadd.f32 %v1107, %v1195
    %1197 = vmatmul.bf16.gmra.mxu0 %v256
    %v1198 = vpop.f32.mrf.mxu0
    %v1199 = vadd.f32 %v1110, %v1198
    %v1200 = vpop.f32.mrf.mxu0
    %v1201 = vadd.f32 %v1112, %v1200
    %1202 = vmatmul.bf16.gmra.mxu0 %v260
    %v1203 = vpop.f32.mrf.mxu0
    %v1204 = vadd.f32 %v1115, %v1203
    %v1205 = vpop.f32.mrf.mxu0
    %v1206 = vadd.f32 %v1117, %v1205
    %1207 = vmatmul.bf16.gmra.mxu0 %v264
    %v1208 = vpop.f32.mrf.mxu0
    %v1209 = vadd.f32 %v1120, %v1208
    %v1210 = vpop.f32.mrf.mxu0
    %v1211 = vadd.f32 %v1122, %v1210
    %1212 = vmatmul.bf16.gmra.mxu0 %v268
    %v1213 = vpop.f32.mrf.mxu0
    %v1214 = vadd.f32 %v1125, %v1213
    %v1215 = vpop.f32.mrf.mxu0
    %v1216 = vadd.f32 %v1127, %v1215
    %1217 = vmatmul.bf16.gmra.mxu0 %v272
    %v1218 = vpop.f32.mrf.mxu0
    %v1219 = vadd.f32 %v1130, %v1218
    %v1220 = vpop.f32.mrf.mxu0
    %v1221 = vadd.f32 %v1132, %v1220
    %1222 = vmatmul.bf16.gmra.mxu0 %v276
    %v1223 = vpop.f32.mrf.mxu0
    %v1224 = vadd.f32 %v1135, %v1223
    %v1225 = vpop.f32.mrf.mxu0
    %v1226 = vadd.f32 %v1137, %v1225
    %1227 = vmatmul.bf16.gmra.mxu0 %v280
    %v1228 = vpop.f32.mrf.mxu0
    %v1229 = vadd.f32 %v1140, %v1228
    %v1230 = vpop.f32.mrf.mxu0
    %v1231 = vadd.f32 %v1142, %v1230
    %1232 = vmatmul.bf16.gmra.mxu0 %v284
    %v1233 = vpop.f32.mrf.mxu0
    %v1234 = vadd.f32 %v1145, %v1233
    %v1235 = vpop.f32.mrf.mxu0
    %v1236 = vadd.f32 %v1147, %v1235
    %1237 = vmatmul.bf16.gmra.mxu0 %v288
    %v1238 = vpop.f32.mrf.mxu0
    %v1239 = vadd.f32 %v1150, %v1238
    %v1240 = vpop.f32.mrf.mxu0
    %v1241 = vadd.f32 %v1152, %v1240
    %1242 = vmatmul.bf16.gmra.mxu0 %v292
    %v1243 = vpop.f32.mrf.mxu0
    %v1244 = vadd.f32 %v1155, %v1243
    %v1245 = vpop.f32.mrf.mxu0
    %v1246 = vadd.f32 %v1157, %v1245
    %1247 = vmatmul.bf16.gmra.mxu0 %v296
    %v1248 = vpop.f32.mrf.mxu0
    %v1249 = vadd.f32 %v1160, %v1248
    %v1250 = vpop.f32.mrf.mxu0
    %v1251 = vadd.f32 %v1162, %v1250
    %1252 = vmatmul.bf16.gmra.mxu0 %v300
    %v1253 = vpop.f32.mrf.mxu0
    %v1254 = vadd.f32 %v1165, %v1253
    %v1255 = vpop.f32.mrf.mxu0
    %v1256 = vadd.f32 %v1167, %v1255
    %1257 = vmatmul.bf16.gmra.mxu0 %v304
    %v1258 = vpop.f32.mrf.mxu0
    %v1259 = vadd.f32 %v1170, %v1258
    %v1260 = vpop.f32.mrf.mxu0
    %v1261 = vadd.f32 %v1172, %v1260
    %1262 = vdwg.mxu0
    %1263 = vmatpush.bf16.msra.mxu0 %v921
    %1264 = vmatpush.bf16.msra.mxu0 %v917
    %1265 = vmatpush.bf16.msra.mxu0 %v913
    %1266 = vmatpush.bf16.msra.mxu0 %v909
    %1267 = vmatpush.bf16.msra.mxu0 %v905
    %1268 = vmatpush.bf16.msra.mxu0 %v901
    %1269 = vmatpush.bf16.msra.mxu0 %v897
    %1270 = vmatpush.bf16.msra.mxu0 %v893
    %1271 = vmatmul.bf16.gmra.mxu0 %v245
    %v1272 = vpop.f32.mrf.mxu0
    %v1273 = vadd.f32 %v1184, %v1272
    %v1274 = vpop.f32.mrf.mxu0
    %v1275 = vadd.f32 %v1186, %v1274
    %1276 = vmatmul.bf16.gmra.mxu0 %v249
    %v1277 = vpop.f32.mrf.mxu0
    %v1278 = vadd.f32 %v1189, %v1277
    %v1279 = vpop.f32.mrf.mxu0
    %v1280 = vadd.f32 %v1191, %v1279
    %1281 = vmatmul.bf16.gmra.mxu0 %v253
    %v1282 = vpop.f32.mrf.mxu0
    %v1283 = vadd.f32 %v1194, %v1282
    %v1284 = vpop.f32.mrf.mxu0
    %v1285 = vadd.f32 %v1196, %v1284
    %1286 = vmatmul.bf16.gmra.mxu0 %v257
    %v1287 = vpop.f32.mrf.mxu0
    %v1288 = vadd.f32 %v1199, %v1287
    %v1289 = vpop.f32.mrf.mxu0
    %v1290 = vadd.f32 %v1201, %v1289
    %1291 = vmatmul.bf16.gmra.mxu0 %v261
    %v1292 = vpop.f32.mrf.mxu0
    %v1293 = vadd.f32 %v1204, %v1292
    %v1294 = vpop.f32.mrf.mxu0
    %v1295 = vadd.f32 %v1206, %v1294
    %1296 = vmatmul.bf16.gmra.mxu0 %v265
    %v1297 = vpop.f32.mrf.mxu0
    %v1298 = vadd.f32 %v1209, %v1297
    %v1299 = vpop.f32.mrf.mxu0
    %v1300 = vadd.f32 %v1211, %v1299
    %1301 = vmatmul.bf16.gmra.mxu0 %v269
    %v1302 = vpop.f32.mrf.mxu0
    %v1303 = vadd.f32 %v1214, %v1302
    %v1304 = vpop.f32.mrf.mxu0
    %v1305 = vadd.f32 %v1216, %v1304
    %1306 = vmatmul.bf16.gmra.mxu0 %v273
    %v1307 = vpop.f32.mrf.mxu0
    %v1308 = vadd.f32 %v1219, %v1307
    %v1309 = vpop.f32.mrf.mxu0
    %v1310 = vadd.f32 %v1221, %v1309
    %1311 = vmatmul.bf16.gmra.mxu0 %v277
    %v1312 = vpop.f32.mrf.mxu0
    %v1313 = vadd.f32 %v1224, %v1312
    %v1314 = vpop.f32.mrf.mxu0
    %v1315 = vadd.f32 %v1226, %v1314
    %1316 = vmatmul.bf16.gmra.mxu0 %v281
    %v1317 = vpop.f32.mrf.mxu0
    %v1318 = vadd.f32 %v1229, %v1317
    %v1319 = vpop.f32.mrf.mxu0
    %v1320 = vadd.f32 %v1231, %v1319
    %1321 = vmatmul.bf16.gmra.mxu0 %v285
    %v1322 = vpop.f32.mrf.mxu0
    %v1323 = vadd.f32 %v1234, %v1322
    %v1324 = vpop.f32.mrf.mxu0
    %v1325 = vadd.f32 %v1236, %v1324
    %1326 = vmatmul.bf16.gmra.mxu0 %v289
    %v1327 = vpop.f32.mrf.mxu0
    %v1328 = vadd.f32 %v1239, %v1327
    %v1329 = vpop.f32.mrf.mxu0
    %v1330 = vadd.f32 %v1241, %v1329
    %1331 = vmatmul.bf16.gmra.mxu0 %v293
    %v1332 = vpop.f32.mrf.mxu0
    %v1333 = vadd.f32 %v1244, %v1332
    %v1334 = vpop.f32.mrf.mxu0
    %v1335 = vadd.f32 %v1246, %v1334
    %1336 = vmatmul.bf16.gmra.mxu0 %v297
    %v1337 = vpop.f32.mrf.mxu0
    %v1338 = vadd.f32 %v1249, %v1337
    %v1339 = vpop.f32.mrf.mxu0
    %v1340 = vadd.f32 %v1251, %v1339
    %1341 = vmatmul.bf16.gmra.mxu0 %v301
    %v1342 = vpop.f32.mrf.mxu0
    %v1343 = vadd.f32 %v1254, %v1342
    %v1344 = vpop.f32.mrf.mxu0
    %v1345 = vadd.f32 %v1256, %v1344
    %1346 = vmatmul.bf16.gmra.mxu0 %v305
    %v1347 = vpop.f32.mrf.mxu0
    %v1348 = vadd.f32 %v1259, %v1347
    %v1349 = vpop.f32.mrf.mxu0
    %v1350 = vadd.f32 %v1261, %v1349
    %1351 = vdwg.mxu0
    %1352 = vmatpush.bf16.msra.mxu0 %v953
    %1353 = vmatpush.bf16.msra.mxu0 %v949
    %1354 = vmatpush.bf16.msra.mxu0 %v945
    %1355 = vmatpush.bf16.msra.mxu0 %v941
    %1356 = vmatpush.bf16.msra.mxu0 %v937
    %1357 = vmatpush.bf16.msra.mxu0 %v933
    %1358 = vmatpush.bf16.msra.mxu0 %v929
    %1359 = vmatpush.bf16.msra.mxu0 %v925
    %1360 = vmatmul.bf16.gmra.mxu0 %v246
    %v1361 = vpop.f32.mrf.mxu0
    %v1362 = vadd.f32 %v1273, %v1361
    %v1363 = vpop.f32.mrf.mxu0
    %v1364 = vadd.f32 %v1275, %v1363
    %1365 = vmatmul.bf16.gmra.mxu0 %v250
    %v1366 = vpop.f32.mrf.mxu0
    %v1367 = vadd.f32 %v1278, %v1366
    %v1368 = vpop.f32.mrf.mxu0
    %v1369 = vadd.f32 %v1280, %v1368
    %1370 = vmatmul.bf16.gmra.mxu0 %v254
    %v1371 = vpop.f32.mrf.mxu0
    %v1372 = vadd.f32 %v1283, %v1371
    %v1373 = vpop.f32.mrf.mxu0
    %v1374 = vadd.f32 %v1285, %v1373
    %1375 = vmatmul.bf16.gmra.mxu0 %v258
    %v1376 = vpop.f32.mrf.mxu0
    %v1377 = vadd.f32 %v1288, %v1376
    %v1378 = vpop.f32.mrf.mxu0
    %v1379 = vadd.f32 %v1290, %v1378
    %1380 = vmatmul.bf16.gmra.mxu0 %v262
    %v1381 = vpop.f32.mrf.mxu0
    %v1382 = vadd.f32 %v1293, %v1381
    %v1383 = vpop.f32.mrf.mxu0
    %v1384 = vadd.f32 %v1295, %v1383
    %1385 = vmatmul.bf16.gmra.mxu0 %v266
    %v1386 = vpop.f32.mrf.mxu0
    %v1387 = vadd.f32 %v1298, %v1386
    %v1388 = vpop.f32.mrf.mxu0
    %v1389 = vadd.f32 %v1300, %v1388
    %1390 = vmatmul.bf16.gmra.mxu0 %v270
    %v1391 = vpop.f32.mrf.mxu0
    %v1392 = vadd.f32 %v1303, %v1391
    %v1393 = vpop.f32.mrf.mxu0
    %v1394 = vadd.f32 %v1305, %v1393
    %1395 = vmatmul.bf16.gmra.mxu0 %v274
    %v1396 = vpop.f32.mrf.mxu0
    %v1397 = vadd.f32 %v1308, %v1396
    %v1398 = vpop.f32.mrf.mxu0
    %v1399 = vadd.f32 %v1310, %v1398
    %1400 = vmatmul.bf16.gmra.mxu0 %v278
    %v1401 = vpop.f32.mrf.mxu0
    %v1402 = vadd.f32 %v1313, %v1401
    %v1403 = vpop.f32.mrf.mxu0
    %v1404 = vadd.f32 %v1315, %v1403
    %1405 = vmatmul.bf16.gmra.mxu0 %v282
    %v1406 = vpop.f32.mrf.mxu0
    %v1407 = vadd.f32 %v1318, %v1406
    %v1408 = vpop.f32.mrf.mxu0
    %v1409 = vadd.f32 %v1320, %v1408
    %1410 = vmatmul.bf16.gmra.mxu0 %v286
    %v1411 = vpop.f32.mrf.mxu0
    %v1412 = vadd.f32 %v1323, %v1411
    %v1413 = vpop.f32.mrf.mxu0
    %v1414 = vadd.f32 %v1325, %v1413
    %1415 = vmatmul.bf16.gmra.mxu0 %v290
    %v1416 = vpop.f32.mrf.mxu0
    %v1417 = vadd.f32 %v1328, %v1416
    %v1418 = vpop.f32.mrf.mxu0
    %v1419 = vadd.f32 %v1330, %v1418
    %1420 = vmatmul.bf16.gmra.mxu0 %v294
    %v1421 = vpop.f32.mrf.mxu0
    %v1422 = vadd.f32 %v1333, %v1421
    %v1423 = vpop.f32.mrf.mxu0
    %v1424 = vadd.f32 %v1335, %v1423
    %1425 = vmatmul.bf16.gmra.mxu0 %v298
    %v1426 = vpop.f32.mrf.mxu0
    %v1427 = vadd.f32 %v1338, %v1426
    %v1428 = vpop.f32.mrf.mxu0
    %v1429 = vadd.f32 %v1340, %v1428
    %1430 = vmatmul.bf16.gmra.mxu0 %v302
    %v1431 = vpop.f32.mrf.mxu0
    %v1432 = vadd.f32 %v1343, %v1431
    %v1433 = vpop.f32.mrf.mxu0
    %v1434 = vadd.f32 %v1345, %v1433
    %1435 = vmatmul.bf16.gmra.mxu0 %v306
    %v1436 = vpop.f32.mrf.mxu0
    %v1437 = vadd.f32 %v1348, %v1436
    %v1438 = vpop.f32.mrf.mxu0
    %v1439 = vadd.f32 %v1350, %v1438
    %1440 = vdwg.mxu0
    %1441 = vmatpush.bf16.msra.mxu0 %v858
    %1442 = vmatpush.bf16.msra.mxu0 %v854
    %1443 = vmatpush.bf16.msra.mxu0 %v850
    %1444 = vmatpush.bf16.msra.mxu0 %v846
    %1445 = vmatpush.bf16.msra.mxu0 %v842
    %1446 = vmatpush.bf16.msra.mxu0 %v838
    %1447 = vmatpush.bf16.msra.mxu0 %v834
    %1448 = vmatpush.bf16.msra.mxu0 %v830
    %1449 = vmatmul.bf16.gmra.mxu0 %v243
    %v1450 = vpop.f32.mrf.mxu0
    %v1451 = vadd.f32 %v438, %v1450
    %v1452 = vpop.f32.mrf.mxu0
    %v1453 = vadd.f32 %v438, %v1452
    %1454 = vmatmul.bf16.gmra.mxu0 %v247
    %v1455 = vpop.f32.mrf.mxu0
    %v1456 = vadd.f32 %v438, %v1455
    %v1457 = vpop.f32.mrf.mxu0
    %v1458 = vadd.f32 %v438, %v1457
    %1459 = vmatmul.bf16.gmra.mxu0 %v251
    %v1460 = vpop.f32.mrf.mxu0
    %v1461 = vadd.f32 %v438, %v1460
    %v1462 = vpop.f32.mrf.mxu0
    %v1463 = vadd.f32 %v438, %v1462
    %1464 = vmatmul.bf16.gmra.mxu0 %v255
    %v1465 = vpop.f32.mrf.mxu0
    %v1466 = vadd.f32 %v438, %v1465
    %v1467 = vpop.f32.mrf.mxu0
    %v1468 = vadd.f32 %v438, %v1467
    %1469 = vmatmul.bf16.gmra.mxu0 %v259
    %v1470 = vpop.f32.mrf.mxu0
    %v1471 = vadd.f32 %v438, %v1470
    %v1472 = vpop.f32.mrf.mxu0
    %v1473 = vadd.f32 %v438, %v1472
    %1474 = vmatmul.bf16.gmra.mxu0 %v263
    %v1475 = vpop.f32.mrf.mxu0
    %v1476 = vadd.f32 %v438, %v1475
    %v1477 = vpop.f32.mrf.mxu0
    %v1478 = vadd.f32 %v438, %v1477
    %1479 = vmatmul.bf16.gmra.mxu0 %v267
    %v1480 = vpop.f32.mrf.mxu0
    %v1481 = vadd.f32 %v438, %v1480
    %v1482 = vpop.f32.mrf.mxu0
    %v1483 = vadd.f32 %v438, %v1482
    %1484 = vmatmul.bf16.gmra.mxu0 %v271
    %v1485 = vpop.f32.mrf.mxu0
    %v1486 = vadd.f32 %v438, %v1485
    %v1487 = vpop.f32.mrf.mxu0
    %v1488 = vadd.f32 %v438, %v1487
    %1489 = vmatmul.bf16.gmra.mxu0 %v275
    %v1490 = vpop.f32.mrf.mxu0
    %v1491 = vadd.f32 %v438, %v1490
    %v1492 = vpop.f32.mrf.mxu0
    %v1493 = vadd.f32 %v438, %v1492
    %1494 = vmatmul.bf16.gmra.mxu0 %v279
    %v1495 = vpop.f32.mrf.mxu0
    %v1496 = vadd.f32 %v438, %v1495
    %v1497 = vpop.f32.mrf.mxu0
    %v1498 = vadd.f32 %v438, %v1497
    %1499 = vmatmul.bf16.gmra.mxu0 %v283
    %v1500 = vpop.f32.mrf.mxu0
    %v1501 = vadd.f32 %v438, %v1500
    %v1502 = vpop.f32.mrf.mxu0
    %v1503 = vadd.f32 %v438, %v1502
    %1504 = vmatmul.bf16.gmra.mxu0 %v287
    %v1505 = vpop.f32.mrf.mxu0
    %v1506 = vadd.f32 %v438, %v1505
    %v1507 = vpop.f32.mrf.mxu0
    %v1508 = vadd.f32 %v438, %v1507
    %1509 = vmatmul.bf16.gmra.mxu0 %v291
    %v1510 = vpop.f32.mrf.mxu0
    %v1511 = vadd.f32 %v438, %v1510
    %v1512 = vpop.f32.mrf.mxu0
    %v1513 = vadd.f32 %v438, %v1512
    %1514 = vmatmul.bf16.gmra.mxu0 %v295
    %v1515 = vpop.f32.mrf.mxu0
    %v1516 = vadd.f32 %v438, %v1515
    %v1517 = vpop.f32.mrf.mxu0
    %v1518 = vadd.f32 %v438, %v1517
    %1519 = vmatmul.bf16.gmra.mxu0 %v299
    %v1520 = vpop.f32.mrf.mxu0
    %v1521 = vadd.f32 %v438, %v1520
    %v1522 = vpop.f32.mrf.mxu0
    %v1523 = vadd.f32 %v438, %v1522
    %1524 = vmatmul.bf16.gmra.mxu0 %v303
    %v1525 = vpop.f32.mrf.mxu0
    %v1526 = vadd.f32 %v438, %v1525
    %v1527 = vpop.f32.mrf.mxu0
    %v1528 = vadd.f32 %v438, %v1527
    %1529 = vdwg.mxu0
    %1530 = vmatpush.bf16.msra.mxu0 %v890
    %1531 = vmatpush.bf16.msra.mxu0 %v886
    %1532 = vmatpush.bf16.msra.mxu0 %v882
    %1533 = vmatpush.bf16.msra.mxu0 %v878
    %1534 = vmatpush.bf16.msra.mxu0 %v874
    %1535 = vmatpush.bf16.msra.mxu0 %v870
    %1536 = vmatpush.bf16.msra.mxu0 %v866
    %1537 = vmatpush.bf16.msra.mxu0 %v862
    %1538 = vmatmul.bf16.gmra.mxu0 %v244
    %v1539 = vpop.f32.mrf.mxu0
    %v1540 = vadd.f32 %v1451, %v1539
    %v1541 = vpop.f32.mrf.mxu0
    %v1542 = vadd.f32 %v1453, %v1541
    %1543 = vmatmul.bf16.gmra.mxu0 %v248
    %v1544 = vpop.f32.mrf.mxu0
    %v1545 = vadd.f32 %v1456, %v1544
    %v1546 = vpop.f32.mrf.mxu0
    %v1547 = vadd.f32 %v1458, %v1546
    %1548 = vmatmul.bf16.gmra.mxu0 %v252
    %v1549 = vpop.f32.mrf.mxu0
    %v1550 = vadd.f32 %v1461, %v1549
    %v1551 = vpop.f32.mrf.mxu0
    %v1552 = vadd.f32 %v1463, %v1551
    %1553 = vmatmul.bf16.gmra.mxu0 %v256
    %v1554 = vpop.f32.mrf.mxu0
    %v1555 = vadd.f32 %v1466, %v1554
    %v1556 = vpop.f32.mrf.mxu0
    %v1557 = vadd.f32 %v1468, %v1556
    %1558 = vmatmul.bf16.gmra.mxu0 %v260
    %v1559 = vpop.f32.mrf.mxu0
    %v1560 = vadd.f32 %v1471, %v1559
    %v1561 = vpop.f32.mrf.mxu0
    %v1562 = vadd.f32 %v1473, %v1561
    %1563 = vmatmul.bf16.gmra.mxu0 %v264
    %v1564 = vpop.f32.mrf.mxu0
    %v1565 = vadd.f32 %v1476, %v1564
    %v1566 = vpop.f32.mrf.mxu0
    %v1567 = vadd.f32 %v1478, %v1566
    %1568 = vmatmul.bf16.gmra.mxu0 %v268
    %v1569 = vpop.f32.mrf.mxu0
    %v1570 = vadd.f32 %v1481, %v1569
    %v1571 = vpop.f32.mrf.mxu0
    %v1572 = vadd.f32 %v1483, %v1571
    %1573 = vmatmul.bf16.gmra.mxu0 %v272
    %v1574 = vpop.f32.mrf.mxu0
    %v1575 = vadd.f32 %v1486, %v1574
    %v1576 = vpop.f32.mrf.mxu0
    %v1577 = vadd.f32 %v1488, %v1576
    %1578 = vmatmul.bf16.gmra.mxu0 %v276
    %v1579 = vpop.f32.mrf.mxu0
    %v1580 = vadd.f32 %v1491, %v1579
    %v1581 = vpop.f32.mrf.mxu0
    %v1582 = vadd.f32 %v1493, %v1581
    %1583 = vmatmul.bf16.gmra.mxu0 %v280
    %v1584 = vpop.f32.mrf.mxu0
    %v1585 = vadd.f32 %v1496, %v1584
    %v1586 = vpop.f32.mrf.mxu0
    %v1587 = vadd.f32 %v1498, %v1586
    %1588 = vmatmul.bf16.gmra.mxu0 %v284
    %v1589 = vpop.f32.mrf.mxu0
    %v1590 = vadd.f32 %v1501, %v1589
    %v1591 = vpop.f32.mrf.mxu0
    %v1592 = vadd.f32 %v1503, %v1591
    %1593 = vmatmul.bf16.gmra.mxu0 %v288
    %v1594 = vpop.f32.mrf.mxu0
    %v1595 = vadd.f32 %v1506, %v1594
    %v1596 = vpop.f32.mrf.mxu0
    %v1597 = vadd.f32 %v1508, %v1596
    %1598 = vmatmul.bf16.gmra.mxu0 %v292
    %v1599 = vpop.f32.mrf.mxu0
    %v1600 = vadd.f32 %v1511, %v1599
    %v1601 = vpop.f32.mrf.mxu0
    %v1602 = vadd.f32 %v1513, %v1601
    %1603 = vmatmul.bf16.gmra.mxu0 %v296
    %v1604 = vpop.f32.mrf.mxu0
    %v1605 = vadd.f32 %v1516, %v1604
    %v1606 = vpop.f32.mrf.mxu0
    %v1607 = vadd.f32 %v1518, %v1606
    %1608 = vmatmul.bf16.gmra.mxu0 %v300
    %v1609 = vpop.f32.mrf.mxu0
    %v1610 = vadd.f32 %v1521, %v1609
    %v1611 = vpop.f32.mrf.mxu0
    %v1612 = vadd.f32 %v1523, %v1611
    %1613 = vmatmul.bf16.gmra.mxu0 %v304
    %v1614 = vpop.f32.mrf.mxu0
    %v1615 = vadd.f32 %v1526, %v1614
    %v1616 = vpop.f32.mrf.mxu0
    %v1617 = vadd.f32 %v1528, %v1616
    %1618 = vdwg.mxu0
    %1619 = vmatpush.bf16.msra.mxu0 %v922
    %1620 = vmatpush.bf16.msra.mxu0 %v918
    %1621 = vmatpush.bf16.msra.mxu0 %v914
    %1622 = vmatpush.bf16.msra.mxu0 %v910
    %1623 = vmatpush.bf16.msra.mxu0 %v906
    %1624 = vmatpush.bf16.msra.mxu0 %v902
    %1625 = vmatpush.bf16.msra.mxu0 %v898
    %1626 = vmatpush.bf16.msra.mxu0 %v894
    %1627 = vmatmul.bf16.gmra.mxu0 %v245
    %v1628 = vpop.f32.mrf.mxu0
    %v1629 = vadd.f32 %v1540, %v1628
    %v1630 = vpop.f32.mrf.mxu0
    %v1631 = vadd.f32 %v1542, %v1630
    %1632 = vmatmul.bf16.gmra.mxu0 %v249
    %v1633 = vpop.f32.mrf.mxu0
    %v1634 = vadd.f32 %v1545, %v1633
    %v1635 = vpop.f32.mrf.mxu0
    %v1636 = vadd.f32 %v1547, %v1635
    %1637 = vmatmul.bf16.gmra.mxu0 %v253
    %v1638 = vpop.f32.mrf.mxu0
    %v1639 = vadd.f32 %v1550, %v1638
    %v1640 = vpop.f32.mrf.mxu0
    %v1641 = vadd.f32 %v1552, %v1640
    %1642 = vmatmul.bf16.gmra.mxu0 %v257
    %v1643 = vpop.f32.mrf.mxu0
    %v1644 = vadd.f32 %v1555, %v1643
    %v1645 = vpop.f32.mrf.mxu0
    %v1646 = vadd.f32 %v1557, %v1645
    %1647 = vmatmul.bf16.gmra.mxu0 %v261
    %v1648 = vpop.f32.mrf.mxu0
    %v1649 = vadd.f32 %v1560, %v1648
    %v1650 = vpop.f32.mrf.mxu0
    %v1651 = vadd.f32 %v1562, %v1650
    %1652 = vmatmul.bf16.gmra.mxu0 %v265
    %v1653 = vpop.f32.mrf.mxu0
    %v1654 = vadd.f32 %v1565, %v1653
    %v1655 = vpop.f32.mrf.mxu0
    %v1656 = vadd.f32 %v1567, %v1655
    %1657 = vmatmul.bf16.gmra.mxu0 %v269
    %v1658 = vpop.f32.mrf.mxu0
    %v1659 = vadd.f32 %v1570, %v1658
    %v1660 = vpop.f32.mrf.mxu0
    %v1661 = vadd.f32 %v1572, %v1660
    %1662 = vmatmul.bf16.gmra.mxu0 %v273
    %v1663 = vpop.f32.mrf.mxu0
    %v1664 = vadd.f32 %v1575, %v1663
    %v1665 = vpop.f32.mrf.mxu0
    %v1666 = vadd.f32 %v1577, %v1665
    %1667 = vmatmul.bf16.gmra.mxu0 %v277
    %v1668 = vpop.f32.mrf.mxu0
    %v1669 = vadd.f32 %v1580, %v1668
    %v1670 = vpop.f32.mrf.mxu0
    %v1671 = vadd.f32 %v1582, %v1670
    %1672 = vmatmul.bf16.gmra.mxu0 %v281
    %v1673 = vpop.f32.mrf.mxu0
    %v1674 = vadd.f32 %v1585, %v1673
    %v1675 = vpop.f32.mrf.mxu0
    %v1676 = vadd.f32 %v1587, %v1675
    %1677 = vmatmul.bf16.gmra.mxu0 %v285
    %v1678 = vpop.f32.mrf.mxu0
    %v1679 = vadd.f32 %v1590, %v1678
    %v1680 = vpop.f32.mrf.mxu0
    %v1681 = vadd.f32 %v1592, %v1680
    %1682 = vmatmul.bf16.gmra.mxu0 %v289
    %v1683 = vpop.f32.mrf.mxu0
    %v1684 = vadd.f32 %v1595, %v1683
    %v1685 = vpop.f32.mrf.mxu0
    %v1686 = vadd.f32 %v1597, %v1685
    %1687 = vmatmul.bf16.gmra.mxu0 %v293
    %v1688 = vpop.f32.mrf.mxu0
    %v1689 = vadd.f32 %v1600, %v1688
    %v1690 = vpop.f32.mrf.mxu0
    %v1691 = vadd.f32 %v1602, %v1690
    %1692 = vmatmul.bf16.gmra.mxu0 %v297
    %v1693 = vpop.f32.mrf.mxu0
    %v1694 = vadd.f32 %v1605, %v1693
    %v1695 = vpop.f32.mrf.mxu0
    %v1696 = vadd.f32 %v1607, %v1695
    %1697 = vmatmul.bf16.gmra.mxu0 %v301
    %v1698 = vpop.f32.mrf.mxu0
    %v1699 = vadd.f32 %v1610, %v1698
    %v1700 = vpop.f32.mrf.mxu0
    %v1701 = vadd.f32 %v1612, %v1700
    %1702 = vmatmul.bf16.gmra.mxu0 %v305
    %v1703 = vpop.f32.mrf.mxu0
    %v1704 = vadd.f32 %v1615, %v1703
    %v1705 = vpop.f32.mrf.mxu0
    %v1706 = vadd.f32 %v1617, %v1705
    %1707 = vdwg.mxu0
    %1708 = vmatpush.bf16.msra.mxu0 %v954
    %1709 = vmatpush.bf16.msra.mxu0 %v950
    %1710 = vmatpush.bf16.msra.mxu0 %v946
    %1711 = vmatpush.bf16.msra.mxu0 %v942
    %1712 = vmatpush.bf16.msra.mxu0 %v938
    %1713 = vmatpush.bf16.msra.mxu0 %v934
    %1714 = vmatpush.bf16.msra.mxu0 %v930
    %1715 = vmatpush.bf16.msra.mxu0 %v926
    %1716 = vmatmul.bf16.gmra.mxu0 %v246
    %v1717 = vpop.f32.mrf.mxu0
    %v1718 = vadd.f32 %v1629, %v1717
    %v1719 = vpop.f32.mrf.mxu0
    %v1720 = vadd.f32 %v1631, %v1719
    %1721 = vmatmul.bf16.gmra.mxu0 %v250
    %v1722 = vpop.f32.mrf.mxu0
    %v1723 = vadd.f32 %v1634, %v1722
    %v1724 = vpop.f32.mrf.mxu0
    %v1725 = vadd.f32 %v1636, %v1724
    %1726 = vmatmul.bf16.gmra.mxu0 %v254
    %v1727 = vpop.f32.mrf.mxu0
    %v1728 = vadd.f32 %v1639, %v1727
    %v1729 = vpop.f32.mrf.mxu0
    %v1730 = vadd.f32 %v1641, %v1729
    %1731 = vmatmul.bf16.gmra.mxu0 %v258
    %v1732 = vpop.f32.mrf.mxu0
    %v1733 = vadd.f32 %v1644, %v1732
    %v1734 = vpop.f32.mrf.mxu0
    %v1735 = vadd.f32 %v1646, %v1734
    %1736 = vmatmul.bf16.gmra.mxu0 %v262
    %v1737 = vpop.f32.mrf.mxu0
    %v1738 = vadd.f32 %v1649, %v1737
    %v1739 = vpop.f32.mrf.mxu0
    %v1740 = vadd.f32 %v1651, %v1739
    %1741 = vmatmul.bf16.gmra.mxu0 %v266
    %v1742 = vpop.f32.mrf.mxu0
    %v1743 = vadd.f32 %v1654, %v1742
    %v1744 = vpop.f32.mrf.mxu0
    %v1745 = vadd.f32 %v1656, %v1744
    %1746 = vmatmul.bf16.gmra.mxu0 %v270
    %v1747 = vpop.f32.mrf.mxu0
    %v1748 = vadd.f32 %v1659, %v1747
    %v1749 = vpop.f32.mrf.mxu0
    %v1750 = vadd.f32 %v1661, %v1749
    %1751 = vmatmul.bf16.gmra.mxu0 %v274
    %v1752 = vpop.f32.mrf.mxu0
    %v1753 = vadd.f32 %v1664, %v1752
    %v1754 = vpop.f32.mrf.mxu0
    %v1755 = vadd.f32 %v1666, %v1754
    %1756 = vmatmul.bf16.gmra.mxu0 %v278
    %v1757 = vpop.f32.mrf.mxu0
    %v1758 = vadd.f32 %v1669, %v1757
    %v1759 = vpop.f32.mrf.mxu0
    %v1760 = vadd.f32 %v1671, %v1759
    %1761 = vmatmul.bf16.gmra.mxu0 %v282
    %v1762 = vpop.f32.mrf.mxu0
    %v1763 = vadd.f32 %v1674, %v1762
    %v1764 = vpop.f32.mrf.mxu0
    %v1765 = vadd.f32 %v1676, %v1764
    %1766 = vmatmul.bf16.gmra.mxu0 %v286
    %v1767 = vpop.f32.mrf.mxu0
    %v1768 = vadd.f32 %v1679, %v1767
    %v1769 = vpop.f32.mrf.mxu0
    %v1770 = vadd.f32 %v1681, %v1769
    %1771 = vmatmul.bf16.gmra.mxu0 %v290
    %v1772 = vpop.f32.mrf.mxu0
    %v1773 = vadd.f32 %v1684, %v1772
    %v1774 = vpop.f32.mrf.mxu0
    %v1775 = vadd.f32 %v1686, %v1774
    %1776 = vmatmul.bf16.gmra.mxu0 %v294
    %v1777 = vpop.f32.mrf.mxu0
    %v1778 = vadd.f32 %v1689, %v1777
    %v1779 = vpop.f32.mrf.mxu0
    %v1780 = vadd.f32 %v1691, %v1779
    %1781 = vmatmul.bf16.gmra.mxu0 %v298
    %v1782 = vpop.f32.mrf.mxu0
    %v1783 = vadd.f32 %v1694, %v1782
    %v1784 = vpop.f32.mrf.mxu0
    %v1785 = vadd.f32 %v1696, %v1784
    %1786 = vmatmul.bf16.gmra.mxu0 %v302
    %v1787 = vpop.f32.mrf.mxu0
    %v1788 = vadd.f32 %v1699, %v1787
    %v1789 = vpop.f32.mrf.mxu0
    %v1790 = vadd.f32 %v1701, %v1789
    %1791 = vmatmul.bf16.gmra.mxu0 %v306
    %v1792 = vpop.f32.mrf.mxu0
    %v1793 = vadd.f32 %v1704, %v1792
    %v1794 = vpop.f32.mrf.mxu0
    %v1795 = vadd.f32 %v1706, %v1794
    %1796 = vdwg.mxu0
    %1797 = vmatpush.bf16.msra.mxu0 %v859
    %1798 = vmatpush.bf16.msra.mxu0 %v855
    %1799 = vmatpush.bf16.msra.mxu0 %v851
    %1800 = vmatpush.bf16.msra.mxu0 %v847
    %1801 = vmatpush.bf16.msra.mxu0 %v843
    %1802 = vmatpush.bf16.msra.mxu0 %v839
    %1803 = vmatpush.bf16.msra.mxu0 %v835
    %1804 = vmatpush.bf16.msra.mxu0 %v831
    %1805 = vmatmul.bf16.gmra.mxu0 %v243
    %v1806 = vpop.f32.mrf.mxu0
    %v1807 = vadd.f32 %v439, %v1806
    %v1808 = vpop.f32.mrf.mxu0
    %v1809 = vadd.f32 %v439, %v1808
    %1810 = vmatmul.bf16.gmra.mxu0 %v247
    %v1811 = vpop.f32.mrf.mxu0
    %v1812 = vadd.f32 %v439, %v1811
    %v1813 = vpop.f32.mrf.mxu0
    %v1814 = vadd.f32 %v439, %v1813
    %1815 = vmatmul.bf16.gmra.mxu0 %v251
    %v1816 = vpop.f32.mrf.mxu0
    %v1817 = vadd.f32 %v439, %v1816
    %v1818 = vpop.f32.mrf.mxu0
    %v1819 = vadd.f32 %v439, %v1818
    %1820 = vmatmul.bf16.gmra.mxu0 %v255
    %v1821 = vpop.f32.mrf.mxu0
    %v1822 = vadd.f32 %v439, %v1821
    %v1823 = vpop.f32.mrf.mxu0
    %v1824 = vadd.f32 %v439, %v1823
    %1825 = vmatmul.bf16.gmra.mxu0 %v259
    %v1826 = vpop.f32.mrf.mxu0
    %v1827 = vadd.f32 %v439, %v1826
    %v1828 = vpop.f32.mrf.mxu0
    %v1829 = vadd.f32 %v439, %v1828
    %1830 = vmatmul.bf16.gmra.mxu0 %v263
    %v1831 = vpop.f32.mrf.mxu0
    %v1832 = vadd.f32 %v439, %v1831
    %v1833 = vpop.f32.mrf.mxu0
    %v1834 = vadd.f32 %v439, %v1833
    %1835 = vmatmul.bf16.gmra.mxu0 %v267
    %v1836 = vpop.f32.mrf.mxu0
    %v1837 = vadd.f32 %v439, %v1836
    %v1838 = vpop.f32.mrf.mxu0
    %v1839 = vadd.f32 %v439, %v1838
    %1840 = vmatmul.bf16.gmra.mxu0 %v271
    %v1841 = vpop.f32.mrf.mxu0
    %v1842 = vadd.f32 %v439, %v1841
    %v1843 = vpop.f32.mrf.mxu0
    %v1844 = vadd.f32 %v439, %v1843
    %1845 = vmatmul.bf16.gmra.mxu0 %v275
    %v1846 = vpop.f32.mrf.mxu0
    %v1847 = vadd.f32 %v439, %v1846
    %v1848 = vpop.f32.mrf.mxu0
    %v1849 = vadd.f32 %v439, %v1848
    %1850 = vmatmul.bf16.gmra.mxu0 %v279
    %v1851 = vpop.f32.mrf.mxu0
    %v1852 = vadd.f32 %v439, %v1851
    %v1853 = vpop.f32.mrf.mxu0
    %v1854 = vadd.f32 %v439, %v1853
    %1855 = vmatmul.bf16.gmra.mxu0 %v283
    %v1856 = vpop.f32.mrf.mxu0
    %v1857 = vadd.f32 %v439, %v1856
    %v1858 = vpop.f32.mrf.mxu0
    %v1859 = vadd.f32 %v439, %v1858
    %1860 = vmatmul.bf16.gmra.mxu0 %v287
    %v1861 = vpop.f32.mrf.mxu0
    %v1862 = vadd.f32 %v439, %v1861
    %v1863 = vpop.f32.mrf.mxu0
    %v1864 = vadd.f32 %v439, %v1863
    %1865 = vmatmul.bf16.gmra.mxu0 %v291
    %v1866 = vpop.f32.mrf.mxu0
    %v1867 = vadd.f32 %v439, %v1866
    %v1868 = vpop.f32.mrf.mxu0
    %v1869 = vadd.f32 %v439, %v1868
    %1870 = vmatmul.bf16.gmra.mxu0 %v295
    %v1871 = vpop.f32.mrf.mxu0
    %v1872 = vadd.f32 %v439, %v1871
    %v1873 = vpop.f32.mrf.mxu0
    %v1874 = vadd.f32 %v439, %v1873
    %1875 = vmatmul.bf16.gmra.mxu0 %v299
    %v1876 = vpop.f32.mrf.mxu0
    %v1877 = vadd.f32 %v439, %v1876
    %v1878 = vpop.f32.mrf.mxu0
    %v1879 = vadd.f32 %v439, %v1878
    %1880 = vmatmul.bf16.gmra.mxu0 %v303
    %v1881 = vpop.f32.mrf.mxu0
    %v1882 = vadd.f32 %v439, %v1881
    %v1883 = vpop.f32.mrf.mxu0
    %v1884 = vadd.f32 %v439, %v1883
    %1885 = vdwg.mxu0
    %1886 = vmatpush.bf16.msra.mxu0 %v891
    %1887 = vmatpush.bf16.msra.mxu0 %v887
    %1888 = vmatpush.bf16.msra.mxu0 %v883
    %1889 = vmatpush.bf16.msra.mxu0 %v879
    %1890 = vmatpush.bf16.msra.mxu0 %v875
    %1891 = vmatpush.bf16.msra.mxu0 %v871
    %1892 = vmatpush.bf16.msra.mxu0 %v867
    %1893 = vmatpush.bf16.msra.mxu0 %v863
    %1894 = vmatmul.bf16.gmra.mxu0 %v244
    %v1895 = vpop.f32.mrf.mxu0
    %v1896 = vadd.f32 %v1807, %v1895
    %v1897 = vpop.f32.mrf.mxu0
    %v1898 = vadd.f32 %v1809, %v1897
    %1899 = vmatmul.bf16.gmra.mxu0 %v248
    %v1900 = vpop.f32.mrf.mxu0
    %v1901 = vadd.f32 %v1812, %v1900
    %v1902 = vpop.f32.mrf.mxu0
    %v1903 = vadd.f32 %v1814, %v1902
    %1904 = vmatmul.bf16.gmra.mxu0 %v252
    %v1905 = vpop.f32.mrf.mxu0
    %v1906 = vadd.f32 %v1817, %v1905
    %v1907 = vpop.f32.mrf.mxu0
    %v1908 = vadd.f32 %v1819, %v1907
    %1909 = vmatmul.bf16.gmra.mxu0 %v256
    %v1910 = vpop.f32.mrf.mxu0
    %v1911 = vadd.f32 %v1822, %v1910
    %v1912 = vpop.f32.mrf.mxu0
    %v1913 = vadd.f32 %v1824, %v1912
    %1914 = vmatmul.bf16.gmra.mxu0 %v260
    %v1915 = vpop.f32.mrf.mxu0
    %v1916 = vadd.f32 %v1827, %v1915
    %v1917 = vpop.f32.mrf.mxu0
    %v1918 = vadd.f32 %v1829, %v1917
    %1919 = vmatmul.bf16.gmra.mxu0 %v264
    %v1920 = vpop.f32.mrf.mxu0
    %v1921 = vadd.f32 %v1832, %v1920
    %v1922 = vpop.f32.mrf.mxu0
    %v1923 = vadd.f32 %v1834, %v1922
    %1924 = vmatmul.bf16.gmra.mxu0 %v268
    %v1925 = vpop.f32.mrf.mxu0
    %v1926 = vadd.f32 %v1837, %v1925
    %v1927 = vpop.f32.mrf.mxu0
    %v1928 = vadd.f32 %v1839, %v1927
    %1929 = vmatmul.bf16.gmra.mxu0 %v272
    %v1930 = vpop.f32.mrf.mxu0
    %v1931 = vadd.f32 %v1842, %v1930
    %v1932 = vpop.f32.mrf.mxu0
    %v1933 = vadd.f32 %v1844, %v1932
    %1934 = vmatmul.bf16.gmra.mxu0 %v276
    %v1935 = vpop.f32.mrf.mxu0
    %v1936 = vadd.f32 %v1847, %v1935
    %v1937 = vpop.f32.mrf.mxu0
    %v1938 = vadd.f32 %v1849, %v1937
    %1939 = vmatmul.bf16.gmra.mxu0 %v280
    %v1940 = vpop.f32.mrf.mxu0
    %v1941 = vadd.f32 %v1852, %v1940
    %v1942 = vpop.f32.mrf.mxu0
    %v1943 = vadd.f32 %v1854, %v1942
    %1944 = vmatmul.bf16.gmra.mxu0 %v284
    %v1945 = vpop.f32.mrf.mxu0
    %v1946 = vadd.f32 %v1857, %v1945
    %v1947 = vpop.f32.mrf.mxu0
    %v1948 = vadd.f32 %v1859, %v1947
    %1949 = vmatmul.bf16.gmra.mxu0 %v288
    %v1950 = vpop.f32.mrf.mxu0
    %v1951 = vadd.f32 %v1862, %v1950
    %v1952 = vpop.f32.mrf.mxu0
    %v1953 = vadd.f32 %v1864, %v1952
    %1954 = vmatmul.bf16.gmra.mxu0 %v292
    %v1955 = vpop.f32.mrf.mxu0
    %v1956 = vadd.f32 %v1867, %v1955
    %v1957 = vpop.f32.mrf.mxu0
    %v1958 = vadd.f32 %v1869, %v1957
    %1959 = vmatmul.bf16.gmra.mxu0 %v296
    %v1960 = vpop.f32.mrf.mxu0
    %v1961 = vadd.f32 %v1872, %v1960
    %v1962 = vpop.f32.mrf.mxu0
    %v1963 = vadd.f32 %v1874, %v1962
    %1964 = vmatmul.bf16.gmra.mxu0 %v300
    %v1965 = vpop.f32.mrf.mxu0
    %v1966 = vadd.f32 %v1877, %v1965
    %v1967 = vpop.f32.mrf.mxu0
    %v1968 = vadd.f32 %v1879, %v1967
    %1969 = vmatmul.bf16.gmra.mxu0 %v304
    %v1970 = vpop.f32.mrf.mxu0
    %v1971 = vadd.f32 %v1882, %v1970
    %v1972 = vpop.f32.mrf.mxu0
    %v1973 = vadd.f32 %v1884, %v1972
    %1974 = vdwg.mxu0
    %1975 = vmatpush.bf16.msra.mxu0 %v923
    %1976 = vmatpush.bf16.msra.mxu0 %v919
    %1977 = vmatpush.bf16.msra.mxu0 %v915
    %1978 = vmatpush.bf16.msra.mxu0 %v911
    %1979 = vmatpush.bf16.msra.mxu0 %v907
    %1980 = vmatpush.bf16.msra.mxu0 %v903
    %1981 = vmatpush.bf16.msra.mxu0 %v899
    %1982 = vmatpush.bf16.msra.mxu0 %v895
    %1983 = vmatmul.bf16.gmra.mxu0 %v245
    %v1984 = vpop.f32.mrf.mxu0
    %v1985 = vadd.f32 %v1896, %v1984
    %v1986 = vpop.f32.mrf.mxu0
    %v1987 = vadd.f32 %v1898, %v1986
    %1988 = vmatmul.bf16.gmra.mxu0 %v249
    %v1989 = vpop.f32.mrf.mxu0
    %v1990 = vadd.f32 %v1901, %v1989
    %v1991 = vpop.f32.mrf.mxu0
    %v1992 = vadd.f32 %v1903, %v1991
    %1993 = vmatmul.bf16.gmra.mxu0 %v253
    %v1994 = vpop.f32.mrf.mxu0
    %v1995 = vadd.f32 %v1906, %v1994
    %v1996 = vpop.f32.mrf.mxu0
    %v1997 = vadd.f32 %v1908, %v1996
    %1998 = vmatmul.bf16.gmra.mxu0 %v257
    %v1999 = vpop.f32.mrf.mxu0
    %v2000 = vadd.f32 %v1911, %v1999
    %v2001 = vpop.f32.mrf.mxu0
    %v2002 = vadd.f32 %v1913, %v2001
    %2003 = vmatmul.bf16.gmra.mxu0 %v261
    %v2004 = vpop.f32.mrf.mxu0
    %v2005 = vadd.f32 %v1916, %v2004
    %v2006 = vpop.f32.mrf.mxu0
    %v2007 = vadd.f32 %v1918, %v2006
    %2008 = vmatmul.bf16.gmra.mxu0 %v265
    %v2009 = vpop.f32.mrf.mxu0
    %v2010 = vadd.f32 %v1921, %v2009
    %v2011 = vpop.f32.mrf.mxu0
    %v2012 = vadd.f32 %v1923, %v2011
    %2013 = vmatmul.bf16.gmra.mxu0 %v269
    %v2014 = vpop.f32.mrf.mxu0
    %v2015 = vadd.f32 %v1926, %v2014
    %v2016 = vpop.f32.mrf.mxu0
    %v2017 = vadd.f32 %v1928, %v2016
    %2018 = vmatmul.bf16.gmra.mxu0 %v273
    %v2019 = vpop.f32.mrf.mxu0
    %v2020 = vadd.f32 %v1931, %v2019
    %v2021 = vpop.f32.mrf.mxu0
    %v2022 = vadd.f32 %v1933, %v2021
    %2023 = vmatmul.bf16.gmra.mxu0 %v277
    %v2024 = vpop.f32.mrf.mxu0
    %v2025 = vadd.f32 %v1936, %v2024
    %v2026 = vpop.f32.mrf.mxu0
    %v2027 = vadd.f32 %v1938, %v2026
    %2028 = vmatmul.bf16.gmra.mxu0 %v281
    %v2029 = vpop.f32.mrf.mxu0
    %v2030 = vadd.f32 %v1941, %v2029
    %v2031 = vpop.f32.mrf.mxu0
    %v2032 = vadd.f32 %v1943, %v2031
    %2033 = vmatmul.bf16.gmra.mxu0 %v285
    %v2034 = vpop.f32.mrf.mxu0
    %v2035 = vadd.f32 %v1946, %v2034
    %v2036 = vpop.f32.mrf.mxu0
    %v2037 = vadd.f32 %v1948, %v2036
    %2038 = vmatmul.bf16.gmra.mxu0 %v289
    %v2039 = vpop.f32.mrf.mxu0
    %v2040 = vadd.f32 %v1951, %v2039
    %v2041 = vpop.f32.mrf.mxu0
    %v2042 = vadd.f32 %v1953, %v2041
    %2043 = vmatmul.bf16.gmra.mxu0 %v293
    %v2044 = vpop.f32.mrf.mxu0
    %v2045 = vadd.f32 %v1956, %v2044
    %v2046 = vpop.f32.mrf.mxu0
    %v2047 = vadd.f32 %v1958, %v2046
    %2048 = vmatmul.bf16.gmra.mxu0 %v297
    %v2049 = vpop.f32.mrf.mxu0
    %v2050 = vadd.f32 %v1961, %v2049
    %v2051 = vpop.f32.mrf.mxu0
    %v2052 = vadd.f32 %v1963, %v2051
    %2053 = vmatmul.bf16.gmra.mxu0 %v301
    %v2054 = vpop.f32.mrf.mxu0
    %v2055 = vadd.f32 %v1966, %v2054
    %v2056 = vpop.f32.mrf.mxu0
    %v2057 = vadd.f32 %v1968, %v2056
    %2058 = vmatmul.bf16.gmra.mxu0 %v305
    %v2059 = vpop.f32.mrf.mxu0
    %v2060 = vadd.f32 %v1971, %v2059
    %v2061 = vpop.f32.mrf.mxu0
    %v2062 = vadd.f32 %v1973, %v2061
    %2063 = vdwg.mxu0
    %2064 = vmatpush.bf16.msra.mxu0 %v955
    %2065 = vmatpush.bf16.msra.mxu0 %v951
    %2066 = vmatpush.bf16.msra.mxu0 %v947
    %2067 = vmatpush.bf16.msra.mxu0 %v943
    %2068 = vmatpush.bf16.msra.mxu0 %v939
    %2069 = vmatpush.bf16.msra.mxu0 %v935
    %2070 = vmatpush.bf16.msra.mxu0 %v931
    %2071 = vmatpush.bf16.msra.mxu0 %v927
    %2072 = vmatmul.bf16.gmra.mxu0 %v246
    %v2073 = vpop.f32.mrf.mxu0
    %v2074 = vadd.f32 %v1985, %v2073
    %v2075 = vpop.f32.mrf.mxu0
    %v2076 = vadd.f32 %v1987, %v2075
    %2077 = vmatmul.bf16.gmra.mxu0 %v250
    %v2078 = vpop.f32.mrf.mxu0
    %v2079 = vadd.f32 %v1990, %v2078
    %v2080 = vpop.f32.mrf.mxu0
    %v2081 = vadd.f32 %v1992, %v2080
    %2082 = vmatmul.bf16.gmra.mxu0 %v254
    %v2083 = vpop.f32.mrf.mxu0
    %v2084 = vadd.f32 %v1995, %v2083
    %v2085 = vpop.f32.mrf.mxu0
    %v2086 = vadd.f32 %v1997, %v2085
    %2087 = vmatmul.bf16.gmra.mxu0 %v258
    %v2088 = vpop.f32.mrf.mxu0
    %v2089 = vadd.f32 %v2000, %v2088
    %v2090 = vpop.f32.mrf.mxu0
    %v2091 = vadd.f32 %v2002, %v2090
    %2092 = vmatmul.bf16.gmra.mxu0 %v262
    %v2093 = vpop.f32.mrf.mxu0
    %v2094 = vadd.f32 %v2005, %v2093
    %v2095 = vpop.f32.mrf.mxu0
    %v2096 = vadd.f32 %v2007, %v2095
    %2097 = vmatmul.bf16.gmra.mxu0 %v266
    %v2098 = vpop.f32.mrf.mxu0
    %v2099 = vadd.f32 %v2010, %v2098
    %v2100 = vpop.f32.mrf.mxu0
    %v2101 = vadd.f32 %v2012, %v2100
    %2102 = vmatmul.bf16.gmra.mxu0 %v270
    %v2103 = vpop.f32.mrf.mxu0
    %v2104 = vadd.f32 %v2015, %v2103
    %v2105 = vpop.f32.mrf.mxu0
    %v2106 = vadd.f32 %v2017, %v2105
    %2107 = vmatmul.bf16.gmra.mxu0 %v274
    %v2108 = vpop.f32.mrf.mxu0
    %v2109 = vadd.f32 %v2020, %v2108
    %v2110 = vpop.f32.mrf.mxu0
    %v2111 = vadd.f32 %v2022, %v2110
    %2112 = vmatmul.bf16.gmra.mxu0 %v278
    %v2113 = vpop.f32.mrf.mxu0
    %v2114 = vadd.f32 %v2025, %v2113
    %v2115 = vpop.f32.mrf.mxu0
    %v2116 = vadd.f32 %v2027, %v2115
    %2117 = vmatmul.bf16.gmra.mxu0 %v282
    %v2118 = vpop.f32.mrf.mxu0
    %v2119 = vadd.f32 %v2030, %v2118
    %v2120 = vpop.f32.mrf.mxu0
    %v2121 = vadd.f32 %v2032, %v2120
    %2122 = vmatmul.bf16.gmra.mxu0 %v286
    %v2123 = vpop.f32.mrf.mxu0
    %v2124 = vadd.f32 %v2035, %v2123
    %v2125 = vpop.f32.mrf.mxu0
    %v2126 = vadd.f32 %v2037, %v2125
    %2127 = vmatmul.bf16.gmra.mxu0 %v290
    %v2128 = vpop.f32.mrf.mxu0
    %v2129 = vadd.f32 %v2040, %v2128
    %v2130 = vpop.f32.mrf.mxu0
    %v2131 = vadd.f32 %v2042, %v2130
    %2132 = vmatmul.bf16.gmra.mxu0 %v294
    %v2133 = vpop.f32.mrf.mxu0
    %v2134 = vadd.f32 %v2045, %v2133
    %v2135 = vpop.f32.mrf.mxu0
    %v2136 = vadd.f32 %v2047, %v2135
    %2137 = vmatmul.bf16.gmra.mxu0 %v298
    %v2138 = vpop.f32.mrf.mxu0
    %v2139 = vadd.f32 %v2050, %v2138
    %v2140 = vpop.f32.mrf.mxu0
    %v2141 = vadd.f32 %v2052, %v2140
    %2142 = vmatmul.bf16.gmra.mxu0 %v302
    %v2143 = vpop.f32.mrf.mxu0
    %v2144 = vadd.f32 %v2055, %v2143
    %v2145 = vpop.f32.mrf.mxu0
    %v2146 = vadd.f32 %v2057, %v2145
    %2147 = vmatmul.bf16.gmra.mxu0 %v306
    %v2148 = vpop.f32.mrf.mxu0
    %v2149 = vadd.f32 %v2060, %v2148
    %v2150 = vpop.f32.mrf.mxu0
    %v2151 = vadd.f32 %v2062, %v2150
    %2152 = vdwg.mxu0
    %2153 = vmatpush.bf16.msra.mxu0 %v860
    %2154 = vmatpush.bf16.msra.mxu0 %v856
    %2155 = vmatpush.bf16.msra.mxu0 %v852
    %2156 = vmatpush.bf16.msra.mxu0 %v848
    %2157 = vmatpush.bf16.msra.mxu0 %v844
    %2158 = vmatpush.bf16.msra.mxu0 %v840
    %2159 = vmatpush.bf16.msra.mxu0 %v836
    %2160 = vmatpush.bf16.msra.mxu0 %v832
    %2161 = vmatmul.bf16.gmra.mxu0 %v243
    %v2162 = vpop.f32.mrf.mxu0
    %v2163 = vadd.f32 %v440, %v2162
    %v2164 = vpop.f32.mrf.mxu0
    %v2165 = vadd.f32 %v440, %v2164
    %2166 = vmatmul.bf16.gmra.mxu0 %v247
    %v2167 = vpop.f32.mrf.mxu0
    %v2168 = vadd.f32 %v440, %v2167
    %v2169 = vpop.f32.mrf.mxu0
    %v2170 = vadd.f32 %v440, %v2169
    %2171 = vmatmul.bf16.gmra.mxu0 %v251
    %v2172 = vpop.f32.mrf.mxu0
    %v2173 = vadd.f32 %v440, %v2172
    %v2174 = vpop.f32.mrf.mxu0
    %v2175 = vadd.f32 %v440, %v2174
    %2176 = vmatmul.bf16.gmra.mxu0 %v255
    %v2177 = vpop.f32.mrf.mxu0
    %v2178 = vadd.f32 %v440, %v2177
    %v2179 = vpop.f32.mrf.mxu0
    %v2180 = vadd.f32 %v440, %v2179
    %2181 = vmatmul.bf16.gmra.mxu0 %v259
    %v2182 = vpop.f32.mrf.mxu0
    %v2183 = vadd.f32 %v440, %v2182
    %v2184 = vpop.f32.mrf.mxu0
    %v2185 = vadd.f32 %v440, %v2184
    %2186 = vmatmul.bf16.gmra.mxu0 %v263
    %v2187 = vpop.f32.mrf.mxu0
    %v2188 = vadd.f32 %v440, %v2187
    %v2189 = vpop.f32.mrf.mxu0
    %v2190 = vadd.f32 %v440, %v2189
    %2191 = vmatmul.bf16.gmra.mxu0 %v267
    %v2192 = vpop.f32.mrf.mxu0
    %v2193 = vadd.f32 %v440, %v2192
    %v2194 = vpop.f32.mrf.mxu0
    %v2195 = vadd.f32 %v440, %v2194
    %2196 = vmatmul.bf16.gmra.mxu0 %v271
    %v2197 = vpop.f32.mrf.mxu0
    %v2198 = vadd.f32 %v440, %v2197
    %v2199 = vpop.f32.mrf.mxu0
    %v2200 = vadd.f32 %v440, %v2199
    %2201 = vmatmul.bf16.gmra.mxu0 %v275
    %v2202 = vpop.f32.mrf.mxu0
    %v2203 = vadd.f32 %v440, %v2202
    %v2204 = vpop.f32.mrf.mxu0
    %v2205 = vadd.f32 %v440, %v2204
    %2206 = vmatmul.bf16.gmra.mxu0 %v279
    %v2207 = vpop.f32.mrf.mxu0
    %v2208 = vadd.f32 %v440, %v2207
    %v2209 = vpop.f32.mrf.mxu0
    %v2210 = vadd.f32 %v440, %v2209
    %2211 = vmatmul.bf16.gmra.mxu0 %v283
    %v2212 = vpop.f32.mrf.mxu0
    %v2213 = vadd.f32 %v440, %v2212
    %v2214 = vpop.f32.mrf.mxu0
    %v2215 = vadd.f32 %v440, %v2214
    %2216 = vmatmul.bf16.gmra.mxu0 %v287
    %v2217 = vpop.f32.mrf.mxu0
    %v2218 = vadd.f32 %v440, %v2217
    %v2219 = vpop.f32.mrf.mxu0
    %v2220 = vadd.f32 %v440, %v2219
    %2221 = vmatmul.bf16.gmra.mxu0 %v291
    %v2222 = vpop.f32.mrf.mxu0
    %v2223 = vadd.f32 %v440, %v2222
    %v2224 = vpop.f32.mrf.mxu0
    %v2225 = vadd.f32 %v440, %v2224
    %2226 = vmatmul.bf16.gmra.mxu0 %v295
    %v2227 = vpop.f32.mrf.mxu0
    %v2228 = vadd.f32 %v440, %v2227
    %v2229 = vpop.f32.mrf.mxu0
    %v2230 = vadd.f32 %v440, %v2229
    %2231 = vmatmul.bf16.gmra.mxu0 %v299
    %v2232 = vpop.f32.mrf.mxu0
    %v2233 = vadd.f32 %v440, %v2232
    %v2234 = vpop.f32.mrf.mxu0
    %v2235 = vadd.f32 %v440, %v2234
    %2236 = vmatmul.bf16.gmra.mxu0 %v303
    %v2237 = vpop.f32.mrf.mxu0
    %v2238 = vadd.f32 %v440, %v2237
    %v2239 = vpop.f32.mrf.mxu0
    %v2240 = vadd.f32 %v440, %v2239
    %2241 = vdwg.mxu0
    %2242 = vmatpush.bf16.msra.mxu0 %v892
    %2243 = vmatpush.bf16.msra.mxu0 %v888
    %2244 = vmatpush.bf16.msra.mxu0 %v884
    %2245 = vmatpush.bf16.msra.mxu0 %v880
    %2246 = vmatpush.bf16.msra.mxu0 %v876
    %2247 = vmatpush.bf16.msra.mxu0 %v872
    %2248 = vmatpush.bf16.msra.mxu0 %v868
    %2249 = vmatpush.bf16.msra.mxu0 %v864
    %2250 = vmatmul.bf16.gmra.mxu0 %v244
    %v2251 = vpop.f32.mrf.mxu0
    %v2252 = vadd.f32 %v2163, %v2251
    %v2253 = vpop.f32.mrf.mxu0
    %v2254 = vadd.f32 %v2165, %v2253
    %2255 = vmatmul.bf16.gmra.mxu0 %v248
    %v2256 = vpop.f32.mrf.mxu0
    %v2257 = vadd.f32 %v2168, %v2256
    %v2258 = vpop.f32.mrf.mxu0
    %v2259 = vadd.f32 %v2170, %v2258
    %2260 = vmatmul.bf16.gmra.mxu0 %v252
    %v2261 = vpop.f32.mrf.mxu0
    %v2262 = vadd.f32 %v2173, %v2261
    %v2263 = vpop.f32.mrf.mxu0
    %v2264 = vadd.f32 %v2175, %v2263
    %2265 = vmatmul.bf16.gmra.mxu0 %v256
    %v2266 = vpop.f32.mrf.mxu0
    %v2267 = vadd.f32 %v2178, %v2266
    %v2268 = vpop.f32.mrf.mxu0
    %v2269 = vadd.f32 %v2180, %v2268
    %2270 = vmatmul.bf16.gmra.mxu0 %v260
    %v2271 = vpop.f32.mrf.mxu0
    %v2272 = vadd.f32 %v2183, %v2271
    %v2273 = vpop.f32.mrf.mxu0
    %v2274 = vadd.f32 %v2185, %v2273
    %2275 = vmatmul.bf16.gmra.mxu0 %v264
    %v2276 = vpop.f32.mrf.mxu0
    %v2277 = vadd.f32 %v2188, %v2276
    %v2278 = vpop.f32.mrf.mxu0
    %v2279 = vadd.f32 %v2190, %v2278
    %2280 = vmatmul.bf16.gmra.mxu0 %v268
    %v2281 = vpop.f32.mrf.mxu0
    %v2282 = vadd.f32 %v2193, %v2281
    %v2283 = vpop.f32.mrf.mxu0
    %v2284 = vadd.f32 %v2195, %v2283
    %2285 = vmatmul.bf16.gmra.mxu0 %v272
    %v2286 = vpop.f32.mrf.mxu0
    %v2287 = vadd.f32 %v2198, %v2286
    %v2288 = vpop.f32.mrf.mxu0
    %v2289 = vadd.f32 %v2200, %v2288
    %2290 = vmatmul.bf16.gmra.mxu0 %v276
    %v2291 = vpop.f32.mrf.mxu0
    %v2292 = vadd.f32 %v2203, %v2291
    %v2293 = vpop.f32.mrf.mxu0
    %v2294 = vadd.f32 %v2205, %v2293
    %2295 = vmatmul.bf16.gmra.mxu0 %v280
    %v2296 = vpop.f32.mrf.mxu0
    %v2297 = vadd.f32 %v2208, %v2296
    %v2298 = vpop.f32.mrf.mxu0
    %v2299 = vadd.f32 %v2210, %v2298
    %2300 = vmatmul.bf16.gmra.mxu0 %v284
    %v2301 = vpop.f32.mrf.mxu0
    %v2302 = vadd.f32 %v2213, %v2301
    %v2303 = vpop.f32.mrf.mxu0
    %v2304 = vadd.f32 %v2215, %v2303
    %2305 = vmatmul.bf16.gmra.mxu0 %v288
    %v2306 = vpop.f32.mrf.mxu0
    %v2307 = vadd.f32 %v2218, %v2306
    %v2308 = vpop.f32.mrf.mxu0
    %v2309 = vadd.f32 %v2220, %v2308
    %2310 = vmatmul.bf16.gmra.mxu0 %v292
    %v2311 = vpop.f32.mrf.mxu0
    %v2312 = vadd.f32 %v2223, %v2311
    %v2313 = vpop.f32.mrf.mxu0
    %v2314 = vadd.f32 %v2225, %v2313
    %2315 = vmatmul.bf16.gmra.mxu0 %v296
    %v2316 = vpop.f32.mrf.mxu0
    %v2317 = vadd.f32 %v2228, %v2316
    %v2318 = vpop.f32.mrf.mxu0
    %v2319 = vadd.f32 %v2230, %v2318
    %2320 = vmatmul.bf16.gmra.mxu0 %v300
    %v2321 = vpop.f32.mrf.mxu0
    %v2322 = vadd.f32 %v2233, %v2321
    %v2323 = vpop.f32.mrf.mxu0
    %v2324 = vadd.f32 %v2235, %v2323
    %2325 = vmatmul.bf16.gmra.mxu0 %v304
    %v2326 = vpop.f32.mrf.mxu0
    %v2327 = vadd.f32 %v2238, %v2326
    %v2328 = vpop.f32.mrf.mxu0
    %v2329 = vadd.f32 %v2240, %v2328
    %2330 = vdwg.mxu0
    %2331 = vmatpush.bf16.msra.mxu0 %v924
    %2332 = vmatpush.bf16.msra.mxu0 %v920
    %2333 = vmatpush.bf16.msra.mxu0 %v916
    %2334 = vmatpush.bf16.msra.mxu0 %v912
    %2335 = vmatpush.bf16.msra.mxu0 %v908
    %2336 = vmatpush.bf16.msra.mxu0 %v904
    %2337 = vmatpush.bf16.msra.mxu0 %v900
    %2338 = vmatpush.bf16.msra.mxu0 %v896
    %2339 = vmatmul.bf16.gmra.mxu0 %v245
    %v2340 = vpop.f32.mrf.mxu0
    %v2341 = vadd.f32 %v2252, %v2340
    %v2342 = vpop.f32.mrf.mxu0
    %v2343 = vadd.f32 %v2254, %v2342
    %2344 = vmatmul.bf16.gmra.mxu0 %v249
    %v2345 = vpop.f32.mrf.mxu0
    %v2346 = vadd.f32 %v2257, %v2345
    %v2347 = vpop.f32.mrf.mxu0
    %v2348 = vadd.f32 %v2259, %v2347
    %2349 = vmatmul.bf16.gmra.mxu0 %v253
    %v2350 = vpop.f32.mrf.mxu0
    %v2351 = vadd.f32 %v2262, %v2350
    %v2352 = vpop.f32.mrf.mxu0
    %v2353 = vadd.f32 %v2264, %v2352
    %2354 = vmatmul.bf16.gmra.mxu0 %v257
    %v2355 = vpop.f32.mrf.mxu0
    %v2356 = vadd.f32 %v2267, %v2355
    %v2357 = vpop.f32.mrf.mxu0
    %v2358 = vadd.f32 %v2269, %v2357
    %2359 = vmatmul.bf16.gmra.mxu0 %v261
    %v2360 = vpop.f32.mrf.mxu0
    %v2361 = vadd.f32 %v2272, %v2360
    %v2362 = vpop.f32.mrf.mxu0
    %v2363 = vadd.f32 %v2274, %v2362
    %2364 = vmatmul.bf16.gmra.mxu0 %v265
    %v2365 = vpop.f32.mrf.mxu0
    %v2366 = vadd.f32 %v2277, %v2365
    %v2367 = vpop.f32.mrf.mxu0
    %v2368 = vadd.f32 %v2279, %v2367
    %2369 = vmatmul.bf16.gmra.mxu0 %v269
    %v2370 = vpop.f32.mrf.mxu0
    %v2371 = vadd.f32 %v2282, %v2370
    %v2372 = vpop.f32.mrf.mxu0
    %v2373 = vadd.f32 %v2284, %v2372
    %2374 = vmatmul.bf16.gmra.mxu0 %v273
    %v2375 = vpop.f32.mrf.mxu0
    %v2376 = vadd.f32 %v2287, %v2375
    %v2377 = vpop.f32.mrf.mxu0
    %v2378 = vadd.f32 %v2289, %v2377
    %2379 = vmatmul.bf16.gmra.mxu0 %v277
    %v2380 = vpop.f32.mrf.mxu0
    %v2381 = vadd.f32 %v2292, %v2380
    %v2382 = vpop.f32.mrf.mxu0
    %v2383 = vadd.f32 %v2294, %v2382
    %2384 = vmatmul.bf16.gmra.mxu0 %v281
    %v2385 = vpop.f32.mrf.mxu0
    %v2386 = vadd.f32 %v2297, %v2385
    %v2387 = vpop.f32.mrf.mxu0
    %v2388 = vadd.f32 %v2299, %v2387
    %2389 = vmatmul.bf16.gmra.mxu0 %v285
    %v2390 = vpop.f32.mrf.mxu0
    %v2391 = vadd.f32 %v2302, %v2390
    %v2392 = vpop.f32.mrf.mxu0
    %v2393 = vadd.f32 %v2304, %v2392
    %2394 = vmatmul.bf16.gmra.mxu0 %v289
    %v2395 = vpop.f32.mrf.mxu0
    %v2396 = vadd.f32 %v2307, %v2395
    %v2397 = vpop.f32.mrf.mxu0
    %v2398 = vadd.f32 %v2309, %v2397
    %2399 = vmatmul.bf16.gmra.mxu0 %v293
    %v2400 = vpop.f32.mrf.mxu0
    %v2401 = vadd.f32 %v2312, %v2400
    %v2402 = vpop.f32.mrf.mxu0
    %v2403 = vadd.f32 %v2314, %v2402
    %2404 = vmatmul.bf16.gmra.mxu0 %v297
    %v2405 = vpop.f32.mrf.mxu0
    %v2406 = vadd.f32 %v2317, %v2405
    %v2407 = vpop.f32.mrf.mxu0
    %v2408 = vadd.f32 %v2319, %v2407
    %2409 = vmatmul.bf16.gmra.mxu0 %v301
    %v2410 = vpop.f32.mrf.mxu0
    %v2411 = vadd.f32 %v2322, %v2410
    %v2412 = vpop.f32.mrf.mxu0
    %v2413 = vadd.f32 %v2324, %v2412
    %2414 = vmatmul.bf16.gmra.mxu0 %v305
    %v2415 = vpop.f32.mrf.mxu0
    %v2416 = vadd.f32 %v2327, %v2415
    %v2417 = vpop.f32.mrf.mxu0
    %v2418 = vadd.f32 %v2329, %v2417
    %2419 = vdwg.mxu0
    %2420 = vmatpush.bf16.msra.mxu0 %v956
    %2421 = vmatpush.bf16.msra.mxu0 %v952
    %2422 = vmatpush.bf16.msra.mxu0 %v948
    %2423 = vmatpush.bf16.msra.mxu0 %v944
    %2424 = vmatpush.bf16.msra.mxu0 %v940
    %2425 = vmatpush.bf16.msra.mxu0 %v936
    %2426 = vmatpush.bf16.msra.mxu0 %v932
    %2427 = vmatpush.bf16.msra.mxu0 %v928
    %2428 = vmatmul.bf16.gmra.mxu0 %v246
    %v2429 = vpop.f32.mrf.mxu0
    %v2430 = vadd.f32 %v2341, %v2429
    %v2431 = vpop.f32.mrf.mxu0
    %v2432 = vadd.f32 %v2343, %v2431
    %2433 = vmatmul.bf16.gmra.mxu0 %v250
    %v2434 = vpop.f32.mrf.mxu0
    %v2435 = vadd.f32 %v2346, %v2434
    %v2436 = vpop.f32.mrf.mxu0
    %v2437 = vadd.f32 %v2348, %v2436
    %2438 = vmatmul.bf16.gmra.mxu0 %v254
    %v2439 = vpop.f32.mrf.mxu0
    %v2440 = vadd.f32 %v2351, %v2439
    %v2441 = vpop.f32.mrf.mxu0
    %v2442 = vadd.f32 %v2353, %v2441
    %2443 = vmatmul.bf16.gmra.mxu0 %v258
    %v2444 = vpop.f32.mrf.mxu0
    %v2445 = vadd.f32 %v2356, %v2444
    %v2446 = vpop.f32.mrf.mxu0
    %v2447 = vadd.f32 %v2358, %v2446
    %2448 = vmatmul.bf16.gmra.mxu0 %v262
    %v2449 = vpop.f32.mrf.mxu0
    %v2450 = vadd.f32 %v2361, %v2449
    %v2451 = vpop.f32.mrf.mxu0
    %v2452 = vadd.f32 %v2363, %v2451
    %2453 = vmatmul.bf16.gmra.mxu0 %v266
    %v2454 = vpop.f32.mrf.mxu0
    %v2455 = vadd.f32 %v2366, %v2454
    %v2456 = vpop.f32.mrf.mxu0
    %v2457 = vadd.f32 %v2368, %v2456
    %2458 = vmatmul.bf16.gmra.mxu0 %v270
    %v2459 = vpop.f32.mrf.mxu0
    %v2460 = vadd.f32 %v2371, %v2459
    %v2461 = vpop.f32.mrf.mxu0
    %v2462 = vadd.f32 %v2373, %v2461
    %2463 = vmatmul.bf16.gmra.mxu0 %v274
    %v2464 = vpop.f32.mrf.mxu0
    %v2465 = vadd.f32 %v2376, %v2464
    %v2466 = vpop.f32.mrf.mxu0
    %v2467 = vadd.f32 %v2378, %v2466
    %2468 = vmatmul.bf16.gmra.mxu0 %v278
    %v2469 = vpop.f32.mrf.mxu0
    %v2470 = vadd.f32 %v2381, %v2469
    %v2471 = vpop.f32.mrf.mxu0
    %v2472 = vadd.f32 %v2383, %v2471
    %2473 = vmatmul.bf16.gmra.mxu0 %v282
    %v2474 = vpop.f32.mrf.mxu0
    %v2475 = vadd.f32 %v2386, %v2474
    %v2476 = vpop.f32.mrf.mxu0
    %v2477 = vadd.f32 %v2388, %v2476
    %2478 = vmatmul.bf16.gmra.mxu0 %v286
    %v2479 = vpop.f32.mrf.mxu0
    %v2480 = vadd.f32 %v2391, %v2479
    %v2481 = vpop.f32.mrf.mxu0
    %v2482 = vadd.f32 %v2393, %v2481
    %2483 = vmatmul.bf16.gmra.mxu0 %v290
    %v2484 = vpop.f32.mrf.mxu0
    %v2485 = vadd.f32 %v2396, %v2484
    %v2486 = vpop.f32.mrf.mxu0
    %v2487 = vadd.f32 %v2398, %v2486
    %2488 = vmatmul.bf16.gmra.mxu0 %v294
    %v2489 = vpop.f32.mrf.mxu0
    %v2490 = vadd.f32 %v2401, %v2489
    %v2491 = vpop.f32.mrf.mxu0
    %v2492 = vadd.f32 %v2403, %v2491
    %2493 = vmatmul.bf16.gmra.mxu0 %v298
    %v2494 = vpop.f32.mrf.mxu0
    %v2495 = vadd.f32 %v2406, %v2494
    %v2496 = vpop.f32.mrf.mxu0
    %v2497 = vadd.f32 %v2408, %v2496
    %2498 = vmatmul.bf16.gmra.mxu0 %v302
    %v2499 = vpop.f32.mrf.mxu0
    %v2500 = vadd.f32 %v2411, %v2499
    %v2501 = vpop.f32.mrf.mxu0
    %v2502 = vadd.f32 %v2413, %v2501
    %2503 = vmatmul.bf16.gmra.mxu0 %v306
    %v2504 = vpop.f32.mrf.mxu0
    %v2505 = vadd.f32 %v2416, %v2504
    %v2506 = vpop.f32.mrf.mxu0
    %v2507 = vadd.f32 %v2418, %v2506
    %2508 = vdwg.mxu0
    %v2509 = vmax.f32 %v1362, 0.0
    %v2510 = vmax.f32 %v1718, 0.0
    %v2511 = vmax.f32 %v2074, 0.0
    %v2512 = vmax.f32 %v2430, 0.0
    %v2513 = vmax.f32 %v1364, 0.0
    %v2514 = vmax.f32 %v1720, 0.0
    %v2515 = vmax.f32 %v2076, 0.0
    %v2516 = vmax.f32 %v2432, 0.0
    %v2517 = vmax.f32 %v1367, 0.0
    %v2518 = vmax.f32 %v1723, 0.0
    %v2519 = vmax.f32 %v2079, 0.0
    %v2520 = vmax.f32 %v2435, 0.0
    %v2521 = vmax.f32 %v1369, 0.0
    %v2522 = vmax.f32 %v1725, 0.0
    %v2523 = vmax.f32 %v2081, 0.0
    %v2524 = vmax.f32 %v2437, 0.0
    %v2525 = vmax.f32 %v1372, 0.0
    %v2526 = vmax.f32 %v1728, 0.0
    %v2527 = vmax.f32 %v2084, 0.0
    %v2528 = vmax.f32 %v2440, 0.0
    %v2529 = vmax.f32 %v1374, 0.0
    %v2530 = vmax.f32 %v1730, 0.0
    %v2531 = vmax.f32 %v2086, 0.0
    %v2532 = vmax.f32 %v2442, 0.0
    %v2533 = vmax.f32 %v1377, 0.0
    %v2534 = vmax.f32 %v1733, 0.0
    %v2535 = vmax.f32 %v2089, 0.0
    %v2536 = vmax.f32 %v2445, 0.0
    %v2537 = vmax.f32 %v1379, 0.0
    %v2538 = vmax.f32 %v1735, 0.0
    %v2539 = vmax.f32 %v2091, 0.0
    %v2540 = vmax.f32 %v2447, 0.0
    %v2541 = vmax.f32 %v1382, 0.0
    %v2542 = vmax.f32 %v1738, 0.0
    %v2543 = vmax.f32 %v2094, 0.0
    %v2544 = vmax.f32 %v2450, 0.0
    %v2545 = vmax.f32 %v1384, 0.0
    %v2546 = vmax.f32 %v1740, 0.0
    %v2547 = vmax.f32 %v2096, 0.0
    %v2548 = vmax.f32 %v2452, 0.0
    %v2549 = vmax.f32 %v1387, 0.0
    %v2550 = vmax.f32 %v1743, 0.0
    %v2551 = vmax.f32 %v2099, 0.0
    %v2552 = vmax.f32 %v2455, 0.0
    %v2553 = vmax.f32 %v1389, 0.0
    %v2554 = vmax.f32 %v1745, 0.0
    %v2555 = vmax.f32 %v2101, 0.0
    %v2556 = vmax.f32 %v2457, 0.0
    %v2557 = vmax.f32 %v1392, 0.0
    %v2558 = vmax.f32 %v1748, 0.0
    %v2559 = vmax.f32 %v2104, 0.0
    %v2560 = vmax.f32 %v2460, 0.0
    %v2561 = vmax.f32 %v1394, 0.0
    %v2562 = vmax.f32 %v1750, 0.0
    %v2563 = vmax.f32 %v2106, 0.0
    %v2564 = vmax.f32 %v2462, 0.0
    %v2565 = vmax.f32 %v1397, 0.0
    %v2566 = vmax.f32 %v1753, 0.0
    %v2567 = vmax.f32 %v2109, 0.0
    %v2568 = vmax.f32 %v2465, 0.0
    %v2569 = vmax.f32 %v1399, 0.0
    %v2570 = vmax.f32 %v1755, 0.0
    %v2571 = vmax.f32 %v2111, 0.0
    %v2572 = vmax.f32 %v2467, 0.0
    %v2573 = vmax.f32 %v1402, 0.0
    %v2574 = vmax.f32 %v1758, 0.0
    %v2575 = vmax.f32 %v2114, 0.0
    %v2576 = vmax.f32 %v2470, 0.0
    %v2577 = vmax.f32 %v1404, 0.0
    %v2578 = vmax.f32 %v1760, 0.0
    %v2579 = vmax.f32 %v2116, 0.0
    %v2580 = vmax.f32 %v2472, 0.0
    %v2581 = vmax.f32 %v1407, 0.0
    %v2582 = vmax.f32 %v1763, 0.0
    %v2583 = vmax.f32 %v2119, 0.0
    %v2584 = vmax.f32 %v2475, 0.0
    %v2585 = vmax.f32 %v1409, 0.0
    %v2586 = vmax.f32 %v1765, 0.0
    %v2587 = vmax.f32 %v2121, 0.0
    %v2588 = vmax.f32 %v2477, 0.0
    %v2589 = vmax.f32 %v1412, 0.0
    %v2590 = vmax.f32 %v1768, 0.0
    %v2591 = vmax.f32 %v2124, 0.0
    %v2592 = vmax.f32 %v2480, 0.0
    %v2593 = vmax.f32 %v1414, 0.0
    %v2594 = vmax.f32 %v1770, 0.0
    %v2595 = vmax.f32 %v2126, 0.0
    %v2596 = vmax.f32 %v2482, 0.0
    %v2597 = vmax.f32 %v1417, 0.0
    %v2598 = vmax.f32 %v1773, 0.0
    %v2599 = vmax.f32 %v2129, 0.0
    %v2600 = vmax.f32 %v2485, 0.0
    %v2601 = vmax.f32 %v1419, 0.0
    %v2602 = vmax.f32 %v1775, 0.0
    %v2603 = vmax.f32 %v2131, 0.0
    %v2604 = vmax.f32 %v2487, 0.0
    %v2605 = vmax.f32 %v1422, 0.0
    %v2606 = vmax.f32 %v1778, 0.0
    %v2607 = vmax.f32 %v2134, 0.0
    %v2608 = vmax.f32 %v2490, 0.0
    %v2609 = vmax.f32 %v1424, 0.0
    %v2610 = vmax.f32 %v1780, 0.0
    %v2611 = vmax.f32 %v2136, 0.0
    %v2612 = vmax.f32 %v2492, 0.0
    %v2613 = vmax.f32 %v1427, 0.0
    %v2614 = vmax.f32 %v1783, 0.0
    %v2615 = vmax.f32 %v2139, 0.0
    %v2616 = vmax.f32 %v2495, 0.0
    %v2617 = vmax.f32 %v1429, 0.0
    %v2618 = vmax.f32 %v1785, 0.0
    %v2619 = vmax.f32 %v2141, 0.0
    %v2620 = vmax.f32 %v2497, 0.0
    %v2621 = vmax.f32 %v1432, 0.0
    %v2622 = vmax.f32 %v1788, 0.0
    %v2623 = vmax.f32 %v2144, 0.0
    %v2624 = vmax.f32 %v2500, 0.0
    %v2625 = vmax.f32 %v1434, 0.0
    %v2626 = vmax.f32 %v1790, 0.0
    %v2627 = vmax.f32 %v2146, 0.0
    %v2628 = vmax.f32 %v2502, 0.0
    %v2629 = vmax.f32 %v1437, 0.0
    %v2630 = vmax.f32 %v1793, 0.0
    %v2631 = vmax.f32 %v2149, 0.0
    %v2632 = vmax.f32 %v2505, 0.0
    %v2633 = vmax.f32 %v1439, 0.0
    %v2634 = vmax.f32 %v1795, 0.0
    %v2635 = vmax.f32 %v2151, 0.0
    %v2636 = vmax.f32 %v2507, 0.0
    %v2637 = vpack.c.bf16 %v2513, %v2509
    %v2638 = vpack.c.bf16 %v2514, %v2510
    %v2639 = vpack.c.bf16 %v2515, %v2511
    %v2640 = vpack.c.bf16 %v2516, %v2512
    %v2641 = vpack.c.bf16 %v2521, %v2517
    %v2642 = vpack.c.bf16 %v2522, %v2518
    %v2643 = vpack.c.bf16 %v2523, %v2519
    %v2644 = vpack.c.bf16 %v2524, %v2520
    %v2645 = vpack.c.bf16 %v2529, %v2525
    %v2646 = vpack.c.bf16 %v2530, %v2526
    %v2647 = vpack.c.bf16 %v2531, %v2527
    %v2648 = vpack.c.bf16 %v2532, %v2528
    %v2649 = vpack.c.bf16 %v2537, %v2533
    %v2650 = vpack.c.bf16 %v2538, %v2534
    %v2651 = vpack.c.bf16 %v2539, %v2535
    %v2652 = vpack.c.bf16 %v2540, %v2536
    %v2653 = vpack.c.bf16 %v2545, %v2541
    %v2654 = vpack.c.bf16 %v2546, %v2542
    %v2655 = vpack.c.bf16 %v2547, %v2543
    %v2656 = vpack.c.bf16 %v2548, %v2544
    %v2657 = vpack.c.bf16 %v2553, %v2549
    %v2658 = vpack.c.bf16 %v2554, %v2550
    %v2659 = vpack.c.bf16 %v2555, %v2551
    %v2660 = vpack.c.bf16 %v2556, %v2552
    %v2661 = vpack.c.bf16 %v2561, %v2557
    %v2662 = vpack.c.bf16 %v2562, %v2558
    %v2663 = vpack.c.bf16 %v2563, %v2559
    %v2664 = vpack.c.bf16 %v2564, %v2560
    %v2665 = vpack.c.bf16 %v2569, %v2565
    %v2666 = vpack.c.bf16 %v2570, %v2566
    %v2667 = vpack.c.bf16 %v2571, %v2567
    %v2668 = vpack.c.bf16 %v2572, %v2568
    %v2669 = vpack.c.bf16 %v2577, %v2573
    %v2670 = vpack.c.bf16 %v2578, %v2574
    %v2671 = vpack.c.bf16 %v2579, %v2575
    %v2672 = vpack.c.bf16 %v2580, %v2576
    %v2673 = vpack.c.bf16 %v2585, %v2581
    %v2674 = vpack.c.bf16 %v2586, %v2582
    %v2675 = vpack.c.bf16 %v2587, %v2583
    %v2676 = vpack.c.bf16 %v2588, %v2584
    %v2677 = vpack.c.bf16 %v2593, %v2589
    %v2678 = vpack.c.bf16 %v2594, %v2590
    %v2679 = vpack.c.bf16 %v2595, %v2591
    %v2680 = vpack.c.bf16 %v2596, %v2592
    %v2681 = vpack.c.bf16 %v2601, %v2597
    %v2682 = vpack.c.bf16 %v2602, %v2598
    %v2683 = vpack.c.bf16 %v2603, %v2599
    %v2684 = vpack.c.bf16 %v2604, %v2600
    %v2685 = vpack.c.bf16 %v2609, %v2605
    %v2686 = vpack.c.bf16 %v2610, %v2606
    %v2687 = vpack.c.bf16 %v2611, %v2607
    %v2688 = vpack.c.bf16 %v2612, %v2608
    %v2689 = vpack.c.bf16 %v2617, %v2613
    %v2690 = vpack.c.bf16 %v2618, %v2614
    %v2691 = vpack.c.bf16 %v2619, %v2615
    %v2692 = vpack.c.bf16 %v2620, %v2616
    %v2693 = vpack.c.bf16 %v2625, %v2621
    %v2694 = vpack.c.bf16 %v2626, %v2622
    %v2695 = vpack.c.bf16 %v2627, %v2623
    %v2696 = vpack.c.bf16 %v2628, %v2624
    %v2697 = vpack.c.bf16 %v2633, %v2629
    %v2698 = vpack.c.bf16 %v2634, %v2630
    %v2699 = vpack.c.bf16 %v2635, %v2631
    %v2700 = vpack.c.bf16 %v2636, %v2632
    %v2701 = vld [vmem:[#allocation8] sm:$0xff]
    %v2702 = vld [vmem:[#allocation8 + $0x8] sm:$0xff]
    %v2703 = vld [vmem:[#allocation8 + $0x10] sm:$0xff]
    %v2704 = vld [vmem:[#allocation8 + $0x18] sm:$0xff]
    %v2705 = vld [vmem:[#allocation8 + $0x20] sm:$0xff]
    %v2706 = vld [vmem:[#allocation8 + $0x28] sm:$0xff]
    %v2707 = vld [vmem:[#allocation8 + $0x30] sm:$0xff]
    %v2708 = vld [vmem:[#allocation8 + $0x38] sm:$0xff]
    %v2709 = vld [vmem:[#allocation8 + $0x40] sm:$0xff]
    %v2710 = vld [vmem:[#allocation8 + $0x48] sm:$0xff]
    %v2711 = vld [vmem:[#allocation8 + $0x50] sm:$0xff]
    %v2712 = vld [vmem:[#allocation8 + $0x58] sm:$0xff]
    %v2713 = vld [vmem:[#allocation8 + $0x60] sm:$0xff]
    %v2714 = vld [vmem:[#allocation8 + $0x68] sm:$0xff]
    %v2715 = vld [vmem:[#allocation8 + $0x70] sm:$0xff]
    %v2716 = vld [vmem:[#allocation8 + $0x78] sm:$0xff]
    %v2717 = vld [vmem:[#allocation8 + $0x80] sm:$0xff]
    %v2718 = vld [vmem:[#allocation8 + $0x88] sm:$0xff]
    %v2719 = vld [vmem:[#allocation8 + $0x90] sm:$0xff]
    %v2720 = vld [vmem:[#allocation8 + $0x98] sm:$0xff]
    %v2721 = vld [vmem:[#allocation8 + $0xa0] sm:$0xff]
    %v2722 = vld [vmem:[#allocation8 + $0xa8] sm:$0xff]
    %v2723 = vld [vmem:[#allocation8 + $0xb0] sm:$0xff]
    %v2724 = vld [vmem:[#allocation8 + $0xb8] sm:$0xff]
    %v2725 = vld [vmem:[#allocation8 + $0xc0] sm:$0xff]
    %v2726 = vld [vmem:[#allocation8 + $0xc8] sm:$0xff]
    %v2727 = vld [vmem:[#allocation8 + $0xd0] sm:$0xff]
    %v2728 = vld [vmem:[#allocation8 + $0xd8] sm:$0xff]
    %v2729 = vld [vmem:[#allocation8 + $0xe0] sm:$0xff]
    %v2730 = vld [vmem:[#allocation8 + $0xe8] sm:$0xff]
    %v2731 = vld [vmem:[#allocation8 + $0xf0] sm:$0xff]
    %v2732 = vld [vmem:[#allocation8 + $0xf8] sm:$0xff]
    %v2733 = vld [vmem:[#allocation8 + $0x100] sm:$0xff]
    %v2734 = vld [vmem:[#allocation8 + $0x108] sm:$0xff]
    %v2735 = vld [vmem:[#allocation8 + $0x110] sm:$0xff]
    %v2736 = vld [vmem:[#allocation8 + $0x118] sm:$0xff]
    %v2737 = vld [vmem:[#allocation8 + $0x120] sm:$0xff]
    %v2738 = vld [vmem:[#allocation8 + $0x128] sm:$0xff]
    %v2739 = vld [vmem:[#allocation8 + $0x130] sm:$0xff]
    %v2740 = vld [vmem:[#allocation8 + $0x138] sm:$0xff]
    %v2741 = vld [vmem:[#allocation8 + $0x140] sm:$0xff]
    %v2742 = vld [vmem:[#allocation8 + $0x148] sm:$0xff]
    %v2743 = vld [vmem:[#allocation8 + $0x150] sm:$0xff]
    %v2744 = vld [vmem:[#allocation8 + $0x158] sm:$0xff]
    %v2745 = vld [vmem:[#allocation8 + $0x160] sm:$0xff]
    %v2746 = vld [vmem:[#allocation8 + $0x168] sm:$0xff]
    %v2747 = vld [vmem:[#allocation8 + $0x170] sm:$0xff]
    %v2748 = vld [vmem:[#allocation8 + $0x178] sm:$0xff]
    %v2749 = vld [vmem:[#allocation8 + $0x180] sm:$0xff]
    %v2750 = vld [vmem:[#allocation8 + $0x188] sm:$0xff]
    %v2751 = vld [vmem:[#allocation8 + $0x190] sm:$0xff]
    %v2752 = vld [vmem:[#allocation8 + $0x198] sm:$0xff]
    %v2753 = vld [vmem:[#allocation8 + $0x1a0] sm:$0xff]
    %v2754 = vld [vmem:[#allocation8 + $0x1a8] sm:$0xff]
    %v2755 = vld [vmem:[#allocation8 + $0x1b0] sm:$0xff]
    %v2756 = vld [vmem:[#allocation8 + $0x1b8] sm:$0xff]
    %v2757 = vld [vmem:[#allocation8 + $0x1c0] sm:$0xff]
    %v2758 = vld [vmem:[#allocation8 + $0x1c8] sm:$0xff]
    %v2759 = vld [vmem:[#allocation8 + $0x1d0] sm:$0xff]
    %v2760 = vld [vmem:[#allocation8 + $0x1d8] sm:$0xff]
    %v2761 = vld [vmem:[#allocation8 + $0x1e0] sm:$0xff]
    %v2762 = vld [vmem:[#allocation8 + $0x1e8] sm:$0xff]
    %v2763 = vld [vmem:[#allocation8 + $0x1f0] sm:$0xff]
    %v2764 = vld [vmem:[#allocation8 + $0x1f8] sm:$0xff]
    %v2765 = vld [vmem:[#allocation8 + $0x200] sm:$0xff]
    %v2766 = vld [vmem:[#allocation8 + $0x208] sm:$0xff]
    %v2767 = vld [vmem:[#allocation8 + $0x210] sm:$0xff]
    %v2768 = vld [vmem:[#allocation8 + $0x218] sm:$0xff]
    %v2769 = vld [vmem:[#allocation8 + $0x220] sm:$0xff]
    %v2770 = vld [vmem:[#allocation8 + $0x228] sm:$0xff]
    %v2771 = vld [vmem:[#allocation8 + $0x230] sm:$0xff]
    %v2772 = vld [vmem:[#allocation8 + $0x238] sm:$0xff]
    %v2773 = vld [vmem:[#allocation8 + $0x240] sm:$0xff]
    %v2774 = vld [vmem:[#allocation8 + $0x248] sm:$0xff]
    %v2775 = vld [vmem:[#allocation8 + $0x250] sm:$0xff]
    %v2776 = vld [vmem:[#allocation8 + $0x258] sm:$0xff]
    %v2777 = vld [vmem:[#allocation8 + $0x260] sm:$0xff]
    %v2778 = vld [vmem:[#allocation8 + $0x268] sm:$0xff]
    %v2779 = vld [vmem:[#allocation8 + $0x270] sm:$0xff]
    %v2780 = vld [vmem:[#allocation8 + $0x278] sm:$0xff]
    %v2781 = vld [vmem:[#allocation8 + $0x280] sm:$0xff]
    %v2782 = vld [vmem:[#allocation8 + $0x288] sm:$0xff]
    %v2783 = vld [vmem:[#allocation8 + $0x290] sm:$0xff]
    %v2784 = vld [vmem:[#allocation8 + $0x298] sm:$0xff]
    %v2785 = vld [vmem:[#allocation8 + $0x2a0] sm:$0xff]
    %v2786 = vld [vmem:[#allocation8 + $0x2a8] sm:$0xff]
    %v2787 = vld [vmem:[#allocation8 + $0x2b0] sm:$0xff]
    %v2788 = vld [vmem:[#allocation8 + $0x2b8] sm:$0xff]
    %v2789 = vld [vmem:[#allocation8 + $0x2c0] sm:$0xff]
    %v2790 = vld [vmem:[#allocation8 + $0x2c8] sm:$0xff]
    %v2791 = vld [vmem:[#allocation8 + $0x2d0] sm:$0xff]
    %v2792 = vld [vmem:[#allocation8 + $0x2d8] sm:$0xff]
    %v2793 = vld [vmem:[#allocation8 + $0x2e0] sm:$0xff]
    %v2794 = vld [vmem:[#allocation8 + $0x2e8] sm:$0xff]
    %v2795 = vld [vmem:[#allocation8 + $0x2f0] sm:$0xff]
    %v2796 = vld [vmem:[#allocation8 + $0x2f8] sm:$0xff]
    %v2797 = vld [vmem:[#allocation8 + $0x300] sm:$0xff]
    %v2798 = vld [vmem:[#allocation8 + $0x308] sm:$0xff]
    %v2799 = vld [vmem:[#allocation8 + $0x310] sm:$0xff]
    %v2800 = vld [vmem:[#allocation8 + $0x318] sm:$0xff]
    %v2801 = vld [vmem:[#allocation8 + $0x320] sm:$0xff]
    %v2802 = vld [vmem:[#allocation8 + $0x328] sm:$0xff]
    %v2803 = vld [vmem:[#allocation8 + $0x330] sm:$0xff]
    %v2804 = vld [vmem:[#allocation8 + $0x338] sm:$0xff]
    %v2805 = vld [vmem:[#allocation8 + $0x340] sm:$0xff]
    %v2806 = vld [vmem:[#allocation8 + $0x348] sm:$0xff]
    %v2807 = vld [vmem:[#allocation8 + $0x350] sm:$0xff]
    %v2808 = vld [vmem:[#allocation8 + $0x358] sm:$0xff]
    %v2809 = vld [vmem:[#allocation8 + $0x360] sm:$0xff]
    %v2810 = vld [vmem:[#allocation8 + $0x368] sm:$0xff]
    %v2811 = vld [vmem:[#allocation8 + $0x370] sm:$0xff]
    %v2812 = vld [vmem:[#allocation8 + $0x378] sm:$0xff]
    %v2813 = vld [vmem:[#allocation8 + $0x380] sm:$0xff]
    %v2814 = vld [vmem:[#allocation8 + $0x388] sm:$0xff]
    %v2815 = vld [vmem:[#allocation8 + $0x390] sm:$0xff]
    %v2816 = vld [vmem:[#allocation8 + $0x398] sm:$0xff]
    %v2817 = vld [vmem:[#allocation8 + $0x3a0] sm:$0xff]
    %v2818 = vld [vmem:[#allocation8 + $0x3a8] sm:$0xff]
    %v2819 = vld [vmem:[#allocation8 + $0x3b0] sm:$0xff]
    %v2820 = vld [vmem:[#allocation8 + $0x3b8] sm:$0xff]
    %v2821 = vld [vmem:[#allocation8 + $0x3c0] sm:$0xff]
    %v2822 = vld [vmem:[#allocation8 + $0x3c8] sm:$0xff]
    %v2823 = vld [vmem:[#allocation8 + $0x3d0] sm:$0xff]
    %v2824 = vld [vmem:[#allocation8 + $0x3d8] sm:$0xff]
    %v2825 = vld [vmem:[#allocation8 + $0x3e0] sm:$0xff]
    %v2826 = vld [vmem:[#allocation8 + $0x3e8] sm:$0xff]
    %v2827 = vld [vmem:[#allocation8 + $0x3f0] sm:$0xff]
    %v2828 = vld [vmem:[#allocation8 + $0x3f8] sm:$0xff]
    %v2829 = vld [vmem:[#allocation10] sm:$0xf]
    %v2831 = vperm.slane %v2829, 0
    %v2832 = vperm.slane %v2829, 1
    %v2833 = vperm.slane %v2829, 2
    %v2834 = vperm.slane %v2829, 3
    %v2967 = vunpack.c.l.b16 %v2701
    %v2968 = vunpack.c.h.b16 %v2701
    %v2969 = vunpack.c.l.b16 %v2702
    %v2970 = vunpack.c.h.b16 %v2702
    %v2971 = vunpack.c.l.b16 %v2703
    %v2972 = vunpack.c.h.b16 %v2703
    %v2973 = vunpack.c.l.b16 %v2704
    %v2974 = vunpack.c.h.b16 %v2704
    %v2975 = vunpack.c.l.b16 %v2705
    %v2976 = vunpack.c.h.b16 %v2705
    %v2977 = vunpack.c.l.b16 %v2706
    %v2978 = vunpack.c.h.b16 %v2706
    %v2979 = vunpack.c.l.b16 %v2707
    %v2980 = vunpack.c.h.b16 %v2707
    %v2981 = vunpack.c.l.b16 %v2708
    %v2982 = vunpack.c.h.b16 %v2708
    %v2983 = vunpack.c.l.b16 %v2709
    %v2984 = vunpack.c.h.b16 %v2709
    %v2985 = vunpack.c.l.b16 %v2710
    %v2986 = vunpack.c.h.b16 %v2710
    %v2987 = vunpack.c.l.b16 %v2711
    %v2988 = vunpack.c.h.b16 %v2711
    %v2989 = vunpack.c.l.b16 %v2712
    %v2990 = vunpack.c.h.b16 %v2712
    %v2991 = vunpack.c.l.b16 %v2713
    %v2992 = vunpack.c.h.b16 %v2713
    %v2993 = vunpack.c.l.b16 %v2714
    %v2994 = vunpack.c.h.b16 %v2714
    %v2995 = vunpack.c.l.b16 %v2715
    %v2996 = vunpack.c.h.b16 %v2715
    %v2997 = vunpack.c.l.b16 %v2716
    %v2998 = vunpack.c.h.b16 %v2716
    %v2999 = vunpack.c.l.b16 %v2717
    %v3000 = vunpack.c.h.b16 %v2717
    %v3001 = vunpack.c.l.b16 %v2718
    %v3002 = vunpack.c.h.b16 %v2718
    %v3003 = vunpack.c.l.b16 %v2719
    %v3004 = vunpack.c.h.b16 %v2719
    %v3005 = vunpack.c.l.b16 %v2720
    %v3006 = vunpack.c.h.b16 %v2720
    %v3007 = vunpack.c.l.b16 %v2721
    %v3008 = vunpack.c.h.b16 %v2721
    %v3009 = vunpack.c.l.b16 %v2722
    %v3010 = vunpack.c.h.b16 %v2722
    %v3011 = vunpack.c.l.b16 %v2723
    %v3012 = vunpack.c.h.b16 %v2723
    %v3013 = vunpack.c.l.b16 %v2724
    %v3014 = vunpack.c.h.b16 %v2724
    %v3015 = vunpack.c.l.b16 %v2725
    %v3016 = vunpack.c.h.b16 %v2725
    %v3017 = vunpack.c.l.b16 %v2726
    %v3018 = vunpack.c.h.b16 %v2726
    %v3019 = vunpack.c.l.b16 %v2727
    %v3020 = vunpack.c.h.b16 %v2727
    %v3021 = vunpack.c.l.b16 %v2728
    %v3022 = vunpack.c.h.b16 %v2728
    %v3023 = vunpack.c.l.b16 %v2729
    %v3024 = vunpack.c.h.b16 %v2729
    %v3025 = vunpack.c.l.b16 %v2730
    %v3026 = vunpack.c.h.b16 %v2730
    %v3027 = vunpack.c.l.b16 %v2731
    %v3028 = vunpack.c.h.b16 %v2731
    %v3029 = vunpack.c.l.b16 %v2732
    %v3030 = vunpack.c.h.b16 %v2732
    %v3031 = vunpack.c.l.b16 %v2733
    %v3032 = vunpack.c.h.b16 %v2733
    %v3033 = vunpack.c.l.b16 %v2734
    %v3034 = vunpack.c.h.b16 %v2734
    %v3035 = vunpack.c.l.b16 %v2735
    %v3036 = vunpack.c.h.b16 %v2735
    %v3037 = vunpack.c.l.b16 %v2736
    %v3038 = vunpack.c.h.b16 %v2736
    %v3039 = vunpack.c.l.b16 %v2737
    %v3040 = vunpack.c.h.b16 %v2737
    %v3041 = vunpack.c.l.b16 %v2738
    %v3042 = vunpack.c.h.b16 %v2738
    %v3043 = vunpack.c.l.b16 %v2739
    %v3044 = vunpack.c.h.b16 %v2739
    %v3045 = vunpack.c.l.b16 %v2740
    %v3046 = vunpack.c.h.b16 %v2740
    %v3047 = vunpack.c.l.b16 %v2741
    %v3048 = vunpack.c.h.b16 %v2741
    %v3049 = vunpack.c.l.b16 %v2742
    %v3050 = vunpack.c.h.b16 %v2742
    %v3051 = vunpack.c.l.b16 %v2743
    %v3052 = vunpack.c.h.b16 %v2743
    %v3053 = vunpack.c.l.b16 %v2744
    %v3054 = vunpack.c.h.b16 %v2744
    %v3055 = vunpack.c.l.b16 %v2745
    %v3056 = vunpack.c.h.b16 %v2745
    %v3057 = vunpack.c.l.b16 %v2746
    %v3058 = vunpack.c.h.b16 %v2746
    %v3059 = vunpack.c.l.b16 %v2747
    %v3060 = vunpack.c.h.b16 %v2747
    %v3061 = vunpack.c.l.b16 %v2748
    %v3062 = vunpack.c.h.b16 %v2748
    %v3063 = vunpack.c.l.b16 %v2749
    %v3064 = vunpack.c.h.b16 %v2749
    %v3065 = vunpack.c.l.b16 %v2750
    %v3066 = vunpack.c.h.b16 %v2750
    %v3067 = vunpack.c.l.b16 %v2751
    %v3068 = vunpack.c.h.b16 %v2751
    %v3069 = vunpack.c.l.b16 %v2752
    %v3070 = vunpack.c.h.b16 %v2752
    %v3071 = vunpack.c.l.b16 %v2753
    %v3072 = vunpack.c.h.b16 %v2753
    %v3073 = vunpack.c.l.b16 %v2754
    %v3074 = vunpack.c.h.b16 %v2754
    %v3075 = vunpack.c.l.b16 %v2755
    %v3076 = vunpack.c.h.b16 %v2755
    %v3077 = vunpack.c.l.b16 %v2756
    %v3078 = vunpack.c.h.b16 %v2756
    %v3079 = vunpack.c.l.b16 %v2757
    %v3080 = vunpack.c.h.b16 %v2757
    %v3081 = vunpack.c.l.b16 %v2758
    %v3082 = vunpack.c.h.b16 %v2758
    %v3083 = vunpack.c.l.b16 %v2759
    %v3084 = vunpack.c.h.b16 %v2759
    %v3085 = vunpack.c.l.b16 %v2760
    %v3086 = vunpack.c.h.b16 %v2760
    %v3087 = vunpack.c.l.b16 %v2761
    %v3088 = vunpack.c.h.b16 %v2761
    %v3089 = vunpack.c.l.b16 %v2762
    %v3090 = vunpack.c.h.b16 %v2762
    %v3091 = vunpack.c.l.b16 %v2763
    %v3092 = vunpack.c.h.b16 %v2763
    %v3093 = vunpack.c.l.b16 %v2764
    %v3094 = vunpack.c.h.b16 %v2764
    %v3095 = vunpack.c.l.b16 %v2765
    %v3096 = vunpack.c.h.b16 %v2765
    %v3097 = vunpack.c.l.b16 %v2766
    %v3098 = vunpack.c.h.b16 %v2766
    %v3099 = vunpack.c.l.b16 %v2767
    %v3100 = vunpack.c.h.b16 %v2767
    %v3101 = vunpack.c.l.b16 %v2768
    %v3102 = vunpack.c.h.b16 %v2768
    %v3103 = vunpack.c.l.b16 %v2769
    %v3104 = vunpack.c.h.b16 %v2769
    %v3105 = vunpack.c.l.b16 %v2770
    %v3106 = vunpack.c.h.b16 %v2770
    %v3107 = vunpack.c.l.b16 %v2771
    %v3108 = vunpack.c.h.b16 %v2771
    %v3109 = vunpack.c.l.b16 %v2772
    %v3110 = vunpack.c.h.b16 %v2772
    %v3111 = vunpack.c.l.b16 %v2773
    %v3112 = vunpack.c.h.b16 %v2773
    %v3113 = vunpack.c.l.b16 %v2774
    %v3114 = vunpack.c.h.b16 %v2774
    %v3115 = vunpack.c.l.b16 %v2775
    %v3116 = vunpack.c.h.b16 %v2775
    %v3117 = vunpack.c.l.b16 %v2776
    %v3118 = vunpack.c.h.b16 %v2776
    %v3119 = vunpack.c.l.b16 %v2777
    %v3120 = vunpack.c.h.b16 %v2777
    %v3121 = vunpack.c.l.b16 %v2778
    %v3122 = vunpack.c.h.b16 %v2778
    %v3123 = vunpack.c.l.b16 %v2779
    %v3124 = vunpack.c.h.b16 %v2779
    %v3125 = vunpack.c.l.b16 %v2780
    %v3126 = vunpack.c.h.b16 %v2780
    %v3127 = vunpack.c.l.b16 %v2781
    %v3128 = vunpack.c.h.b16 %v2781
    %v3129 = vunpack.c.l.b16 %v2782
    %v3130 = vunpack.c.h.b16 %v2782
    %v3131 = vunpack.c.l.b16 %v2783
    %v3132 = vunpack.c.h.b16 %v2783
    %v3133 = vunpack.c.l.b16 %v2784
    %v3134 = vunpack.c.h.b16 %v2784
    %v3135 = vunpack.c.l.b16 %v2785
    %v3136 = vunpack.c.h.b16 %v2785
    %v3137 = vunpack.c.l.b16 %v2786
    %v3138 = vunpack.c.h.b16 %v2786
    %v3139 = vunpack.c.l.b16 %v2787
    %v3140 = vunpack.c.h.b16 %v2787
    %v3141 = vunpack.c.l.b16 %v2788
    %v3142 = vunpack.c.h.b16 %v2788
    %v3143 = vunpack.c.l.b16 %v2789
    %v3144 = vunpack.c.h.b16 %v2789
    %v3145 = vunpack.c.l.b16 %v2790
    %v3146 = vunpack.c.h.b16 %v2790
    %v3147 = vunpack.c.l.b16 %v2791
    %v3148 = vunpack.c.h.b16 %v2791
    %v3149 = vunpack.c.l.b16 %v2792
    %v3150 = vunpack.c.h.b16 %v2792
    %v3151 = vunpack.c.l.b16 %v2793
    %v3152 = vunpack.c.h.b16 %v2793
    %v3153 = vunpack.c.l.b16 %v2794
    %v3154 = vunpack.c.h.b16 %v2794
    %v3155 = vunpack.c.l.b16 %v2795
    %v3156 = vunpack.c.h.b16 %v2795
    %v3157 = vunpack.c.l.b16 %v2796
    %v3158 = vunpack.c.h.b16 %v2796
    %v3159 = vunpack.c.l.b16 %v2797
    %v3160 = vunpack.c.h.b16 %v2797
    %v3161 = vunpack.c.l.b16 %v2798
    %v3162 = vunpack.c.h.b16 %v2798
    %v3163 = vunpack.c.l.b16 %v2799
    %v3164 = vunpack.c.h.b16 %v2799
    %v3165 = vunpack.c.l.b16 %v2800
    %v3166 = vunpack.c.h.b16 %v2800
    %v3167 = vunpack.c.l.b16 %v2801
    %v3168 = vunpack.c.h.b16 %v2801
    %v3169 = vunpack.c.l.b16 %v2802
    %v3170 = vunpack.c.h.b16 %v2802
    %v3171 = vunpack.c.l.b16 %v2803
    %v3172 = vunpack.c.h.b16 %v2803
    %v3173 = vunpack.c.l.b16 %v2804
    %v3174 = vunpack.c.h.b16 %v2804
    %v3175 = vunpack.c.l.b16 %v2805
    %v3176 = vunpack.c.h.b16 %v2805
    %v3177 = vunpack.c.l.b16 %v2806
    %v3178 = vunpack.c.h.b16 %v2806
    %v3179 = vunpack.c.l.b16 %v2807
    %v3180 = vunpack.c.h.b16 %v2807
    %v3181 = vunpack.c.l.b16 %v2808
    %v3182 = vunpack.c.h.b16 %v2808
    %v3183 = vunpack.c.l.b16 %v2809
    %v3184 = vunpack.c.h.b16 %v2809
    %v3185 = vunpack.c.l.b16 %v2810
    %v3186 = vunpack.c.h.b16 %v2810
    %v3187 = vunpack.c.l.b16 %v2811
    %v3188 = vunpack.c.h.b16 %v2811
    %v3189 = vunpack.c.l.b16 %v2812
    %v3190 = vunpack.c.h.b16 %v2812
    %v3191 = vunpack.c.l.b16 %v2813
    %v3192 = vunpack.c.h.b16 %v2813
    %v3193 = vunpack.c.l.b16 %v2814
    %v3194 = vunpack.c.h.b16 %v2814
    %v3195 = vunpack.c.l.b16 %v2815
    %v3196 = vunpack.c.h.b16 %v2815
    %v3197 = vunpack.c.l.b16 %v2816
    %v3198 = vunpack.c.h.b16 %v2816
    %v3199 = vunpack.c.l.b16 %v2817
    %v3200 = vunpack.c.h.b16 %v2817
    %v3201 = vunpack.c.l.b16 %v2818
    %v3202 = vunpack.c.h.b16 %v2818
    %v3203 = vunpack.c.l.b16 %v2819
    %v3204 = vunpack.c.h.b16 %v2819
    %v3205 = vunpack.c.l.b16 %v2820
    %v3206 = vunpack.c.h.b16 %v2820
    %v3207 = vunpack.c.l.b16 %v2821
    %v3208 = vunpack.c.h.b16 %v2821
    %v3209 = vunpack.c.l.b16 %v2822
    %v3210 = vunpack.c.h.b16 %v2822
    %v3211 = vunpack.c.l.b16 %v2823
    %v3212 = vunpack.c.h.b16 %v2823
    %v3213 = vunpack.c.l.b16 %v2824
    %v3214 = vunpack.c.h.b16 %v2824
    %v3215 = vunpack.c.l.b16 %v2825
    %v3216 = vunpack.c.h.b16 %v2825
    %v3217 = vunpack.c.l.b16 %v2826
    %v3218 = vunpack.c.h.b16 %v2826
    %v3219 = vunpack.c.l.b16 %v2827
    %v3220 = vunpack.c.h.b16 %v2827
    %v3221 = vunpack.c.l.b16 %v2828
    %v3222 = vunpack.c.h.b16 %v2828
    %v3223 = vpack.c.b16 %v2971, %v2967
    %v3224 = vpack.c.b16 %v2972, %v2968
    %v3225 = vpack.c.b16 %v2973, %v2969
    %v3226 = vpack.c.b16 %v2974, %v2970
    %v3227 = vpack.c.b16 %v2979, %v2975
    %v3228 = vpack.c.b16 %v2980, %v2976
    %v3229 = vpack.c.b16 %v2981, %v2977
    %v3230 = vpack.c.b16 %v2982, %v2978
    %v3231 = vpack.c.b16 %v2987, %v2983
    %v3232 = vpack.c.b16 %v2988, %v2984
    %v3233 = vpack.c.b16 %v2989, %v2985
    %v3234 = vpack.c.b16 %v2990, %v2986
    %v3235 = vpack.c.b16 %v2995, %v2991
    %v3236 = vpack.c.b16 %v2996, %v2992
    %v3237 = vpack.c.b16 %v2997, %v2993
    %v3238 = vpack.c.b16 %v2998, %v2994
    %v3239 = vpack.c.b16 %v3003, %v2999
    %v3240 = vpack.c.b16 %v3004, %v3000
    %v3241 = vpack.c.b16 %v3005, %v3001
    %v3242 = vpack.c.b16 %v3006, %v3002
    %v3243 = vpack.c.b16 %v3011, %v3007
    %v3244 = vpack.c.b16 %v3012, %v3008
    %v3245 = vpack.c.b16 %v3013, %v3009
    %v3246 = vpack.c.b16 %v3014, %v3010
    %v3247 = vpack.c.b16 %v3019, %v3015
    %v3248 = vpack.c.b16 %v3020, %v3016
    %v3249 = vpack.c.b16 %v3021, %v3017
    %v3250 = vpack.c.b16 %v3022, %v3018
    %v3251 = vpack.c.b16 %v3027, %v3023
    %v3252 = vpack.c.b16 %v3028, %v3024
    %v3253 = vpack.c.b16 %v3029, %v3025
    %v3254 = vpack.c.b16 %v3030, %v3026
    %v3255 = vpack.c.b16 %v3035, %v3031
    %v3256 = vpack.c.b16 %v3036, %v3032
    %v3257 = vpack.c.b16 %v3037, %v3033
    %v3258 = vpack.c.b16 %v3038, %v3034
    %v3259 = vpack.c.b16 %v3043, %v3039
    %v3260 = vpack.c.b16 %v3044, %v3040
    %v3261 = vpack.c.b16 %v3045, %v3041
    %v3262 = vpack.c.b16 %v3046, %v3042
    %v3263 = vpack.c.b16 %v3051, %v3047
    %v3264 = vpack.c.b16 %v3052, %v3048
    %v3265 = vpack.c.b16 %v3053, %v3049
    %v3266 = vpack.c.b16 %v3054, %v3050
    %v3267 = vpack.c.b16 %v3059, %v3055
    %v3268 = vpack.c.b16 %v3060, %v3056
    %v3269 = vpack.c.b16 %v3061, %v3057
    %v3270 = vpack.c.b16 %v3062, %v3058
    %v3271 = vpack.c.b16 %v3067, %v3063
    %v3272 = vpack.c.b16 %v3068, %v3064
    %v3273 = vpack.c.b16 %v3069, %v3065
    %v3274 = vpack.c.b16 %v3070, %v3066
    %v3275 = vpack.c.b16 %v3075, %v3071
    %v3276 = vpack.c.b16 %v3076, %v3072
    %v3277 = vpack.c.b16 %v3077, %v3073
    %v3278 = vpack.c.b16 %v3078, %v3074
    %v3279 = vpack.c.b16 %v3083, %v3079
    %v3280 = vpack.c.b16 %v3084, %v3080
    %v3281 = vpack.c.b16 %v3085, %v3081
    %v3282 = vpack.c.b16 %v3086, %v3082
    %v3283 = vpack.c.b16 %v3091, %v3087
    %v3284 = vpack.c.b16 %v3092, %v3088
    %v3285 = vpack.c.b16 %v3093, %v3089
    %v3286 = vpack.c.b16 %v3094, %v3090
    %v3287 = vpack.c.b16 %v3099, %v3095
    %v3288 = vpack.c.b16 %v3100, %v3096
    %v3289 = vpack.c.b16 %v3101, %v3097
    %v3290 = vpack.c.b16 %v3102, %v3098
    %v3291 = vpack.c.b16 %v3107, %v3103
    %v3292 = vpack.c.b16 %v3108, %v3104
    %v3293 = vpack.c.b16 %v3109, %v3105
    %v3294 = vpack.c.b16 %v3110, %v3106
    %v3295 = vpack.c.b16 %v3115, %v3111
    %v3296 = vpack.c.b16 %v3116, %v3112
    %v3297 = vpack.c.b16 %v3117, %v3113
    %v3298 = vpack.c.b16 %v3118, %v3114
    %v3299 = vpack.c.b16 %v3123, %v3119
    %v3300 = vpack.c.b16 %v3124, %v3120
    %v3301 = vpack.c.b16 %v3125, %v3121
    %v3302 = vpack.c.b16 %v3126, %v3122
    %v3303 = vpack.c.b16 %v3131, %v3127
    %v3304 = vpack.c.b16 %v3132, %v3128
    %v3305 = vpack.c.b16 %v3133, %v3129
    %v3306 = vpack.c.b16 %v3134, %v3130
    %v3307 = vpack.c.b16 %v3139, %v3135
    %v3308 = vpack.c.b16 %v3140, %v3136
    %v3309 = vpack.c.b16 %v3141, %v3137
    %v3310 = vpack.c.b16 %v3142, %v3138
    %v3311 = vpack.c.b16 %v3147, %v3143
    %v3312 = vpack.c.b16 %v3148, %v3144
    %v3313 = vpack.c.b16 %v3149, %v3145
    %v3314 = vpack.c.b16 %v3150, %v3146
    %v3315 = vpack.c.b16 %v3155, %v3151
    %v3316 = vpack.c.b16 %v3156, %v3152
    %v3317 = vpack.c.b16 %v3157, %v3153
    %v3318 = vpack.c.b16 %v3158, %v3154
    %v3319 = vpack.c.b16 %v3163, %v3159
    %v3320 = vpack.c.b16 %v3164, %v3160
    %v3321 = vpack.c.b16 %v3165, %v3161
    %v3322 = vpack.c.b16 %v3166, %v3162
    %v3323 = vpack.c.b16 %v3171, %v3167
    %v3324 = vpack.c.b16 %v3172, %v3168
    %v3325 = vpack.c.b16 %v3173, %v3169
    %v3326 = vpack.c.b16 %v3174, %v3170
    %v3327 = vpack.c.b16 %v3179, %v3175
    %v3328 = vpack.c.b16 %v3180, %v3176
    %v3329 = vpack.c.b16 %v3181, %v3177
    %v3330 = vpack.c.b16 %v3182, %v3178
    %v3331 = vpack.c.b16 %v3187, %v3183
    %v3332 = vpack.c.b16 %v3188, %v3184
    %v3333 = vpack.c.b16 %v3189, %v3185
    %v3334 = vpack.c.b16 %v3190, %v3186
    %v3335 = vpack.c.b16 %v3195, %v3191
    %v3336 = vpack.c.b16 %v3196, %v3192
    %v3337 = vpack.c.b16 %v3197, %v3193
    %v3338 = vpack.c.b16 %v3198, %v3194
    %v3339 = vpack.c.b16 %v3203, %v3199
    %v3340 = vpack.c.b16 %v3204, %v3200
    %v3341 = vpack.c.b16 %v3205, %v3201
    %v3342 = vpack.c.b16 %v3206, %v3202
    %v3343 = vpack.c.b16 %v3211, %v3207
    %v3344 = vpack.c.b16 %v3212, %v3208
    %v3345 = vpack.c.b16 %v3213, %v3209
    %v3346 = vpack.c.b16 %v3214, %v3210
    %v3347 = vpack.c.b16 %v3219, %v3215
    %v3348 = vpack.c.b16 %v3220, %v3216
    %v3349 = vpack.c.b16 %v3221, %v3217
    %v3350 = vpack.c.b16 %v3222, %v3218
    %3479 = vmatpush.bf16.msra.mxu0 %v3251
    %3480 = vmatpush.bf16.msra.mxu0 %v3247
    %3481 = vmatpush.bf16.msra.mxu0 %v3243
    %3482 = vmatpush.bf16.msra.mxu0 %v3239
    %3483 = vmatpush.bf16.msra.mxu0 %v3235
    %3484 = vmatpush.bf16.msra.mxu0 %v3231
    %3485 = vmatpush.bf16.msra.mxu0 %v3227
    %3486 = vmatpush.bf16.msra.mxu0 %v3223
    %3487 = vmatmul.bf16.gmra.mxu0 %v2637
    %v3488 = vpop.f32.mrf.mxu0
    %v3489 = vadd.f32 %v2831, %v3488
    %v3490 = vpop.f32.mrf.mxu0
    %v3491 = vadd.f32 %v2831, %v3490
    %3492 = vmatmul.bf16.gmra.mxu0 %v2641
    %v3493 = vpop.f32.mrf.mxu0
    %v3494 = vadd.f32 %v2831, %v3493
    %v3495 = vpop.f32.mrf.mxu0
    %v3496 = vadd.f32 %v2831, %v3495
    %3497 = vmatmul.bf16.gmra.mxu0 %v2645
    %v3498 = vpop.f32.mrf.mxu0
    %v3499 = vadd.f32 %v2831, %v3498
    %v3500 = vpop.f32.mrf.mxu0
    %v3501 = vadd.f32 %v2831, %v3500
    %3502 = vmatmul.bf16.gmra.mxu0 %v2649
    %v3503 = vpop.f32.mrf.mxu0
    %v3504 = vadd.f32 %v2831, %v3503
    %v3505 = vpop.f32.mrf.mxu0
    %v3506 = vadd.f32 %v2831, %v3505
    %3507 = vmatmul.bf16.gmra.mxu0 %v2653
    %v3508 = vpop.f32.mrf.mxu0
    %v3509 = vadd.f32 %v2831, %v3508
    %v3510 = vpop.f32.mrf.mxu0
    %v3511 = vadd.f32 %v2831, %v3510
    %3512 = vmatmul.bf16.gmra.mxu0 %v2657
    %v3513 = vpop.f32.mrf.mxu0
    %v3514 = vadd.f32 %v2831, %v3513
    %v3515 = vpop.f32.mrf.mxu0
    %v3516 = vadd.f32 %v2831, %v3515
    %3517 = vmatmul.bf16.gmra.mxu0 %v2661
    %v3518 = vpop.f32.mrf.mxu0
    %v3519 = vadd.f32 %v2831, %v3518
    %v3520 = vpop.f32.mrf.mxu0
    %v3521 = vadd.f32 %v2831, %v3520
    %3522 = vmatmul.bf16.gmra.mxu0 %v2665
    %v3523 = vpop.f32.mrf.mxu0
    %v3524 = vadd.f32 %v2831, %v3523
    %v3525 = vpop.f32.mrf.mxu0
    %v3526 = vadd.f32 %v2831, %v3525
    %3527 = vmatmul.bf16.gmra.mxu0 %v2669
    %v3528 = vpop.f32.mrf.mxu0
    %v3529 = vadd.f32 %v2831, %v3528
    %v3530 = vpop.f32.mrf.mxu0
    %v3531 = vadd.f32 %v2831, %v3530
    %3532 = vmatmul.bf16.gmra.mxu0 %v2673
    %v3533 = vpop.f32.mrf.mxu0
    %v3534 = vadd.f32 %v2831, %v3533
    %v3535 = vpop.f32.mrf.mxu0
    %v3536 = vadd.f32 %v2831, %v3535
    %3537 = vmatmul.bf16.gmra.mxu0 %v2677
    %v3538 = vpop.f32.mrf.mxu0
    %v3539 = vadd.f32 %v2831, %v3538
    %v3540 = vpop.f32.mrf.mxu0
    %v3541 = vadd.f32 %v2831, %v3540
    %3542 = vmatmul.bf16.gmra.mxu0 %v2681
    %v3543 = vpop.f32.mrf.mxu0
    %v3544 = vadd.f32 %v2831, %v3543
    %v3545 = vpop.f32.mrf.mxu0
    %v3546 = vadd.f32 %v2831, %v3545
    %3547 = vmatmul.bf16.gmra.mxu0 %v2685
    %v3548 = vpop.f32.mrf.mxu0
    %v3549 = vadd.f32 %v2831, %v3548
    %v3550 = vpop.f32.mrf.mxu0
    %v3551 = vadd.f32 %v2831, %v3550
    %3552 = vmatmul.bf16.gmra.mxu0 %v2689
    %v3553 = vpop.f32.mrf.mxu0
    %v3554 = vadd.f32 %v2831, %v3553
    %v3555 = vpop.f32.mrf.mxu0
    %v3556 = vadd.f32 %v2831, %v3555
    %3557 = vmatmul.bf16.gmra.mxu0 %v2693
    %v3558 = vpop.f32.mrf.mxu0
    %v3559 = vadd.f32 %v2831, %v3558
    %v3560 = vpop.f32.mrf.mxu0
    %v3561 = vadd.f32 %v2831, %v3560
    %3562 = vmatmul.bf16.gmra.mxu0 %v2697
    %v3563 = vpop.f32.mrf.mxu0
    %v3564 = vadd.f32 %v2831, %v3563
    %v3565 = vpop.f32.mrf.mxu0
    %v3566 = vadd.f32 %v2831, %v3565
    %3567 = vdwg.mxu0
    %3568 = vmatpush.bf16.msra.mxu0 %v3283
    %3569 = vmatpush.bf16.msra.mxu0 %v3279
    %3570 = vmatpush.bf16.msra.mxu0 %v3275
    %3571 = vmatpush.bf16.msra.mxu0 %v3271
    %3572 = vmatpush.bf16.msra.mxu0 %v3267
    %3573 = vmatpush.bf16.msra.mxu0 %v3263
    %3574 = vmatpush.bf16.msra.mxu0 %v3259
    %3575 = vmatpush.bf16.msra.mxu0 %v3255
    %3576 = vmatmul.bf16.gmra.mxu0 %v2638
    %v3577 = vpop.f32.mrf.mxu0
    %v3578 = vadd.f32 %v3489, %v3577
    %v3579 = vpop.f32.mrf.mxu0
    %v3580 = vadd.f32 %v3491, %v3579
    %3581 = vmatmul.bf16.gmra.mxu0 %v2642
    %v3582 = vpop.f32.mrf.mxu0
    %v3583 = vadd.f32 %v3494, %v3582
    %v3584 = vpop.f32.mrf.mxu0
    %v3585 = vadd.f32 %v3496, %v3584
    %3586 = vmatmul.bf16.gmra.mxu0 %v2646
    %v3587 = vpop.f32.mrf.mxu0
    %v3588 = vadd.f32 %v3499, %v3587
    %v3589 = vpop.f32.mrf.mxu0
    %v3590 = vadd.f32 %v3501, %v3589
    %3591 = vmatmul.bf16.gmra.mxu0 %v2650
    %v3592 = vpop.f32.mrf.mxu0
    %v3593 = vadd.f32 %v3504, %v3592
    %v3594 = vpop.f32.mrf.mxu0
    %v3595 = vadd.f32 %v3506, %v3594
    %3596 = vmatmul.bf16.gmra.mxu0 %v2654
    %v3597 = vpop.f32.mrf.mxu0
    %v3598 = vadd.f32 %v3509, %v3597
    %v3599 = vpop.f32.mrf.mxu0
    %v3600 = vadd.f32 %v3511, %v3599
    %3601 = vmatmul.bf16.gmra.mxu0 %v2658
    %v3602 = vpop.f32.mrf.mxu0
    %v3603 = vadd.f32 %v3514, %v3602
    %v3604 = vpop.f32.mrf.mxu0
    %v3605 = vadd.f32 %v3516, %v3604
    %3606 = vmatmul.bf16.gmra.mxu0 %v2662
    %v3607 = vpop.f32.mrf.mxu0
    %v3608 = vadd.f32 %v3519, %v3607
    %v3609 = vpop.f32.mrf.mxu0
    %v3610 = vadd.f32 %v3521, %v3609
    %3611 = vmatmul.bf16.gmra.mxu0 %v2666
    %v3612 = vpop.f32.mrf.mxu0
    %v3613 = vadd.f32 %v3524, %v3612
    %v3614 = vpop.f32.mrf.mxu0
    %v3615 = vadd.f32 %v3526, %v3614
    %3616 = vmatmul.bf16.gmra.mxu0 %v2670
    %v3617 = vpop.f32.mrf.mxu0
    %v3618 = vadd.f32 %v3529, %v3617
    %v3619 = vpop.f32.mrf.mxu0
    %v3620 = vadd.f32 %v3531, %v3619
    %3621 = vmatmul.bf16.gmra.mxu0 %v2674
    %v3622 = vpop.f32.mrf.mxu0
    %v3623 = vadd.f32 %v3534, %v3622
    %v3624 = vpop.f32.mrf.mxu0
    %v3625 = vadd.f32 %v3536, %v3624
    %3626 = vmatmul.bf16.gmra.mxu0 %v2678
    %v3627 = vpop.f32.mrf.mxu0
    %v3628 = vadd.f32 %v3539, %v3627
    %v3629 = vpop.f32.mrf.mxu0
    %v3630 = vadd.f32 %v3541, %v3629
    %3631 = vmatmul.bf16.gmra.mxu0 %v2682
    %v3632 = vpop.f32.mrf.mxu0
    %v3633 = vadd.f32 %v3544, %v3632
    %v3634 = vpop.f32.mrf.mxu0
    %v3635 = vadd.f32 %v3546, %v3634
    %3636 = vmatmul.bf16.gmra.mxu0 %v2686
    %v3637 = vpop.f32.mrf.mxu0
    %v3638 = vadd.f32 %v3549, %v3637
    %v3639 = vpop.f32.mrf.mxu0
    %v3640 = vadd.f32 %v3551, %v3639
    %3641 = vmatmul.bf16.gmra.mxu0 %v2690
    %v3642 = vpop.f32.mrf.mxu0
    %v3643 = vadd.f32 %v3554, %v3642
    %v3644 = vpop.f32.mrf.mxu0
    %v3645 = vadd.f32 %v3556, %v3644
    %3646 = vmatmul.bf16.gmra.mxu0 %v2694
    %v3647 = vpop.f32.mrf.mxu0
    %v3648 = vadd.f32 %v3559, %v3647
    %v3649 = vpop.f32.mrf.mxu0
    %v3650 = vadd.f32 %v3561, %v3649
    %3651 = vmatmul.bf16.gmra.mxu0 %v2698
    %v3652 = vpop.f32.mrf.mxu0
    %v3653 = vadd.f32 %v3564, %v3652
    %v3654 = vpop.f32.mrf.mxu0
    %v3655 = vadd.f32 %v3566, %v3654
    %3656 = vdwg.mxu0
    %3657 = vmatpush.bf16.msra.mxu0 %v3315
    %3658 = vmatpush.bf16.msra.mxu0 %v3311
    %3659 = vmatpush.bf16.msra.mxu0 %v3307
    %3660 = vmatpush.bf16.msra.mxu0 %v3303
    %3661 = vmatpush.bf16.msra.mxu0 %v3299
    %3662 = vmatpush.bf16.msra.mxu0 %v3295
    %3663 = vmatpush.bf16.msra.mxu0 %v3291
    %3664 = vmatpush.bf16.msra.mxu0 %v3287
    %3665 = vmatmul.bf16.gmra.mxu0 %v2639
    %v3666 = vpop.f32.mrf.mxu0
    %v3667 = vadd.f32 %v3578, %v3666
    %v3668 = vpop.f32.mrf.mxu0
    %v3669 = vadd.f32 %v3580, %v3668
    %3670 = vmatmul.bf16.gmra.mxu0 %v2643
    %v3671 = vpop.f32.mrf.mxu0
    %v3672 = vadd.f32 %v3583, %v3671
    %v3673 = vpop.f32.mrf.mxu0
    %v3674 = vadd.f32 %v3585, %v3673
    %3675 = vmatmul.bf16.gmra.mxu0 %v2647
    %v3676 = vpop.f32.mrf.mxu0
    %v3677 = vadd.f32 %v3588, %v3676
    %v3678 = vpop.f32.mrf.mxu0
    %v3679 = vadd.f32 %v3590, %v3678
    %3680 = vmatmul.bf16.gmra.mxu0 %v2651
    %v3681 = vpop.f32.mrf.mxu0
    %v3682 = vadd.f32 %v3593, %v3681
    %v3683 = vpop.f32.mrf.mxu0
    %v3684 = vadd.f32 %v3595, %v3683
    %3685 = vmatmul.bf16.gmra.mxu0 %v2655
    %v3686 = vpop.f32.mrf.mxu0
    %v3687 = vadd.f32 %v3598, %v3686
    %v3688 = vpop.f32.mrf.mxu0
    %v3689 = vadd.f32 %v3600, %v3688
    %3690 = vmatmul.bf16.gmra.mxu0 %v2659
    %v3691 = vpop.f32.mrf.mxu0
    %v3692 = vadd.f32 %v3603, %v3691
    %v3693 = vpop.f32.mrf.mxu0
    %v3694 = vadd.f32 %v3605, %v3693
    %3695 = vmatmul.bf16.gmra.mxu0 %v2663
    %v3696 = vpop.f32.mrf.mxu0
    %v3697 = vadd.f32 %v3608, %v3696
    %v3698 = vpop.f32.mrf.mxu0
    %v3699 = vadd.f32 %v3610, %v3698
    %3700 = vmatmul.bf16.gmra.mxu0 %v2667
    %v3701 = vpop.f32.mrf.mxu0
    %v3702 = vadd.f32 %v3613, %v3701
    %v3703 = vpop.f32.mrf.mxu0
    %v3704 = vadd.f32 %v3615, %v3703
    %3705 = vmatmul.bf16.gmra.mxu0 %v2671
    %v3706 = vpop.f32.mrf.mxu0
    %v3707 = vadd.f32 %v3618, %v3706
    %v3708 = vpop.f32.mrf.mxu0
    %v3709 = vadd.f32 %v3620, %v3708
    %3710 = vmatmul.bf16.gmra.mxu0 %v2675
    %v3711 = vpop.f32.mrf.mxu0
    %v3712 = vadd.f32 %v3623, %v3711
    %v3713 = vpop.f32.mrf.mxu0
    %v3714 = vadd.f32 %v3625, %v3713
    %3715 = vmatmul.bf16.gmra.mxu0 %v2679
    %v3716 = vpop.f32.mrf.mxu0
    %v3717 = vadd.f32 %v3628, %v3716
    %v3718 = vpop.f32.mrf.mxu0
    %v3719 = vadd.f32 %v3630, %v3718
    %3720 = vmatmul.bf16.gmra.mxu0 %v2683
    %v3721 = vpop.f32.mrf.mxu0
    %v3722 = vadd.f32 %v3633, %v3721
    %v3723 = vpop.f32.mrf.mxu0
    %v3724 = vadd.f32 %v3635, %v3723
    %3725 = vmatmul.bf16.gmra.mxu0 %v2687
    %v3726 = vpop.f32.mrf.mxu0
    %v3727 = vadd.f32 %v3638, %v3726
    %v3728 = vpop.f32.mrf.mxu0
    %v3729 = vadd.f32 %v3640, %v3728
    %3730 = vmatmul.bf16.gmra.mxu0 %v2691
    %v3731 = vpop.f32.mrf.mxu0
    %v3732 = vadd.f32 %v3643, %v3731
    %v3733 = vpop.f32.mrf.mxu0
    %v3734 = vadd.f32 %v3645, %v3733
    %3735 = vmatmul.bf16.gmra.mxu0 %v2695
    %v3736 = vpop.f32.mrf.mxu0
    %v3737 = vadd.f32 %v3648, %v3736
    %v3738 = vpop.f32.mrf.mxu0
    %v3739 = vadd.f32 %v3650, %v3738
    %3740 = vmatmul.bf16.gmra.mxu0 %v2699
    %v3741 = vpop.f32.mrf.mxu0
    %v3742 = vadd.f32 %v3653, %v3741
    %v3743 = vpop.f32.mrf.mxu0
    %v3744 = vadd.f32 %v3655, %v3743
    %3745 = vdwg.mxu0
    %3746 = vmatpush.bf16.msra.mxu0 %v3347
    %3747 = vmatpush.bf16.msra.mxu0 %v3343
    %3748 = vmatpush.bf16.msra.mxu0 %v3339
    %3749 = vmatpush.bf16.msra.mxu0 %v3335
    %3750 = vmatpush.bf16.msra.mxu0 %v3331
    %3751 = vmatpush.bf16.msra.mxu0 %v3327
    %3752 = vmatpush.bf16.msra.mxu0 %v3323
    %3753 = vmatpush.bf16.msra.mxu0 %v3319
    %3754 = vmatmul.bf16.gmra.mxu0 %v2640
    %v3755 = vpop.f32.mrf.mxu0
    %v3756 = vadd.f32 %v3667, %v3755
    %v3757 = vpop.f32.mrf.mxu0
    %v3758 = vadd.f32 %v3669, %v3757
    %3759 = vmatmul.bf16.gmra.mxu0 %v2644
    %v3760 = vpop.f32.mrf.mxu0
    %v3761 = vadd.f32 %v3672, %v3760
    %v3762 = vpop.f32.mrf.mxu0
    %v3763 = vadd.f32 %v3674, %v3762
    %3764 = vmatmul.bf16.gmra.mxu0 %v2648
    %v3765 = vpop.f32.mrf.mxu0
    %v3766 = vadd.f32 %v3677, %v3765
    %v3767 = vpop.f32.mrf.mxu0
    %v3768 = vadd.f32 %v3679, %v3767
    %3769 = vmatmul.bf16.gmra.mxu0 %v2652
    %v3770 = vpop.f32.mrf.mxu0
    %v3771 = vadd.f32 %v3682, %v3770
    %v3772 = vpop.f32.mrf.mxu0
    %v3773 = vadd.f32 %v3684, %v3772
    %3774 = vmatmul.bf16.gmra.mxu0 %v2656
    %v3775 = vpop.f32.mrf.mxu0
    %v3776 = vadd.f32 %v3687, %v3775
    %v3777 = vpop.f32.mrf.mxu0
    %v3778 = vadd.f32 %v3689, %v3777
    %3779 = vmatmul.bf16.gmra.mxu0 %v2660
    %v3780 = vpop.f32.mrf.mxu0
    %v3781 = vadd.f32 %v3692, %v3780
    %v3782 = vpop.f32.mrf.mxu0
    %v3783 = vadd.f32 %v3694, %v3782
    %3784 = vmatmul.bf16.gmra.mxu0 %v2664
    %v3785 = vpop.f32.mrf.mxu0
    %v3786 = vadd.f32 %v3697, %v3785
    %v3787 = vpop.f32.mrf.mxu0
    %v3788 = vadd.f32 %v3699, %v3787
    %3789 = vmatmul.bf16.gmra.mxu0 %v2668
    %v3790 = vpop.f32.mrf.mxu0
    %v3791 = vadd.f32 %v3702, %v3790
    %v3792 = vpop.f32.mrf.mxu0
    %v3793 = vadd.f32 %v3704, %v3792
    %3794 = vmatmul.bf16.gmra.mxu0 %v2672
    %v3795 = vpop.f32.mrf.mxu0
    %v3796 = vadd.f32 %v3707, %v3795
    %v3797 = vpop.f32.mrf.mxu0
    %v3798 = vadd.f32 %v3709, %v3797
    %3799 = vmatmul.bf16.gmra.mxu0 %v2676
    %v3800 = vpop.f32.mrf.mxu0
    %v3801 = vadd.f32 %v3712, %v3800
    %v3802 = vpop.f32.mrf.mxu0
    %v3803 = vadd.f32 %v3714, %v3802
    %3804 = vmatmul.bf16.gmra.mxu0 %v2680
    %v3805 = vpop.f32.mrf.mxu0
    %v3806 = vadd.f32 %v3717, %v3805
    %v3807 = vpop.f32.mrf.mxu0
    %v3808 = vadd.f32 %v3719, %v3807
    %3809 = vmatmul.bf16.gmra.mxu0 %v2684
    %v3810 = vpop.f32.mrf.mxu0
    %v3811 = vadd.f32 %v3722, %v3810
    %v3812 = vpop.f32.mrf.mxu0
    %v3813 = vadd.f32 %v3724, %v3812
    %3814 = vmatmul.bf16.gmra.mxu0 %v2688
    %v3815 = vpop.f32.mrf.mxu0
    %v3816 = vadd.f32 %v3727, %v3815
    %v3817 = vpop.f32.mrf.mxu0
    %v3818 = vadd.f32 %v3729, %v3817
    %3819 = vmatmul.bf16.gmra.mxu0 %v2692
    %v3820 = vpop.f32.mrf.mxu0
    %v3821 = vadd.f32 %v3732, %v3820
    %v3822 = vpop.f32.mrf.mxu0
    %v3823 = vadd.f32 %v3734, %v3822
    %3824 = vmatmul.bf16.gmra.mxu0 %v2696
    %v3825 = vpop.f32.mrf.mxu0
    %v3826 = vadd.f32 %v3737, %v3825
    %v3827 = vpop.f32.mrf.mxu0
    %v3828 = vadd.f32 %v3739, %v3827
    %3829 = vmatmul.bf16.gmra.mxu0 %v2700
    %v3830 = vpop.f32.mrf.mxu0
    %v3831 = vadd.f32 %v3742, %v3830
    %v3832 = vpop.f32.mrf.mxu0
    %v3833 = vadd.f32 %v3744, %v3832
    %3834 = vdwg.mxu0
    %3835 = vmatpush.bf16.msra.mxu0 %v3252
    %3836 = vmatpush.bf16.msra.mxu0 %v3248
    %3837 = vmatpush.bf16.msra.mxu0 %v3244
    %3838 = vmatpush.bf16.msra.mxu0 %v3240
    %3839 = vmatpush.bf16.msra.mxu0 %v3236
    %3840 = vmatpush.bf16.msra.mxu0 %v3232
    %3841 = vmatpush.bf16.msra.mxu0 %v3228
    %3842 = vmatpush.bf16.msra.mxu0 %v3224
    %3843 = vmatmul.bf16.gmra.mxu0 %v2637
    %v3844 = vpop.f32.mrf.mxu0
    %v3845 = vadd.f32 %v2832, %v3844
    %v3846 = vpop.f32.mrf.mxu0
    %v3847 = vadd.f32 %v2832, %v3846
    %3848 = vmatmul.bf16.gmra.mxu0 %v2641
    %v3849 = vpop.f32.mrf.mxu0
    %v3850 = vadd.f32 %v2832, %v3849
    %v3851 = vpop.f32.mrf.mxu0
    %v3852 = vadd.f32 %v2832, %v3851
    %3853 = vmatmul.bf16.gmra.mxu0 %v2645
    %v3854 = vpop.f32.mrf.mxu0
    %v3855 = vadd.f32 %v2832, %v3854
    %v3856 = vpop.f32.mrf.mxu0
    %v3857 = vadd.f32 %v2832, %v3856
    %3858 = vmatmul.bf16.gmra.mxu0 %v2649
    %v3859 = vpop.f32.mrf.mxu0
    %v3860 = vadd.f32 %v2832, %v3859
    %v3861 = vpop.f32.mrf.mxu0
    %v3862 = vadd.f32 %v2832, %v3861
    %3863 = vmatmul.bf16.gmra.mxu0 %v2653
    %v3864 = vpop.f32.mrf.mxu0
    %v3865 = vadd.f32 %v2832, %v3864
    %v3866 = vpop.f32.mrf.mxu0
    %v3867 = vadd.f32 %v2832, %v3866
    %3868 = vmatmul.bf16.gmra.mxu0 %v2657
    %v3869 = vpop.f32.mrf.mxu0
    %v3870 = vadd.f32 %v2832, %v3869
    %v3871 = vpop.f32.mrf.mxu0
    %v3872 = vadd.f32 %v2832, %v3871
    %3873 = vmatmul.bf16.gmra.mxu0 %v2661
    %v3874 = vpop.f32.mrf.mxu0
    %v3875 = vadd.f32 %v2832, %v3874
    %v3876 = vpop.f32.mrf.mxu0
    %v3877 = vadd.f32 %v2832, %v3876
    %3878 = vmatmul.bf16.gmra.mxu0 %v2665
    %v3879 = vpop.f32.mrf.mxu0
    %v3880 = vadd.f32 %v2832, %v3879
    %v3881 = vpop.f32.mrf.mxu0
    %v3882 = vadd.f32 %v2832, %v3881
    %3883 = vmatmul.bf16.gmra.mxu0 %v2669
    %v3884 = vpop.f32.mrf.mxu0
    %v3885 = vadd.f32 %v2832, %v3884
    %v3886 = vpop.f32.mrf.mxu0
    %v3887 = vadd.f32 %v2832, %v3886
    %3888 = vmatmul.bf16.gmra.mxu0 %v2673
    %v3889 = vpop.f32.mrf.mxu0
    %v3890 = vadd.f32 %v2832, %v3889
    %v3891 = vpop.f32.mrf.mxu0
    %v3892 = vadd.f32 %v2832, %v3891
    %3893 = vmatmul.bf16.gmra.mxu0 %v2677
    %v3894 = vpop.f32.mrf.mxu0
    %v3895 = vadd.f32 %v2832, %v3894
    %v3896 = vpop.f32.mrf.mxu0
    %v3897 = vadd.f32 %v2832, %v3896
    %3898 = vmatmul.bf16.gmra.mxu0 %v2681
    %v3899 = vpop.f32.mrf.mxu0
    %v3900 = vadd.f32 %v2832, %v3899
    %v3901 = vpop.f32.mrf.mxu0
    %v3902 = vadd.f32 %v2832, %v3901
    %3903 = vmatmul.bf16.gmra.mxu0 %v2685
    %v3904 = vpop.f32.mrf.mxu0
    %v3905 = vadd.f32 %v2832, %v3904
    %v3906 = vpop.f32.mrf.mxu0
    %v3907 = vadd.f32 %v2832, %v3906
    %3908 = vmatmul.bf16.gmra.mxu0 %v2689
    %v3909 = vpop.f32.mrf.mxu0
    %v3910 = vadd.f32 %v2832, %v3909
    %v3911 = vpop.f32.mrf.mxu0
    %v3912 = vadd.f32 %v2832, %v3911
    %3913 = vmatmul.bf16.gmra.mxu0 %v2693
    %v3914 = vpop.f32.mrf.mxu0
    %v3915 = vadd.f32 %v2832, %v3914
    %v3916 = vpop.f32.mrf.mxu0
    %v3917 = vadd.f32 %v2832, %v3916
    %3918 = vmatmul.bf16.gmra.mxu0 %v2697
    %v3919 = vpop.f32.mrf.mxu0
    %v3920 = vadd.f32 %v2832, %v3919
    %v3921 = vpop.f32.mrf.mxu0
    %v3922 = vadd.f32 %v2832, %v3921
    %3923 = vdwg.mxu0
    %3924 = vmatpush.bf16.msra.mxu0 %v3284
    %3925 = vmatpush.bf16.msra.mxu0 %v3280
    %3926 = vmatpush.bf16.msra.mxu0 %v3276
    %3927 = vmatpush.bf16.msra.mxu0 %v3272
    %3928 = vmatpush.bf16.msra.mxu0 %v3268
    %3929 = vmatpush.bf16.msra.mxu0 %v3264
    %3930 = vmatpush.bf16.msra.mxu0 %v3260
    %3931 = vmatpush.bf16.msra.mxu0 %v3256
    %3932 = vmatmul.bf16.gmra.mxu0 %v2638
    %v3933 = vpop.f32.mrf.mxu0
    %v3934 = vadd.f32 %v3845, %v3933
    %v3935 = vpop.f32.mrf.mxu0
    %v3936 = vadd.f32 %v3847, %v3935
    %3937 = vmatmul.bf16.gmra.mxu0 %v2642
    %v3938 = vpop.f32.mrf.mxu0
    %v3939 = vadd.f32 %v3850, %v3938
    %v3940 = vpop.f32.mrf.mxu0
    %v3941 = vadd.f32 %v3852, %v3940
    %3942 = vmatmul.bf16.gmra.mxu0 %v2646
    %v3943 = vpop.f32.mrf.mxu0
    %v3944 = vadd.f32 %v3855, %v3943
    %v3945 = vpop.f32.mrf.mxu0
    %v3946 = vadd.f32 %v3857, %v3945
    %3947 = vmatmul.bf16.gmra.mxu0 %v2650
    %v3948 = vpop.f32.mrf.mxu0
    %v3949 = vadd.f32 %v3860, %v3948
    %v3950 = vpop.f32.mrf.mxu0
    %v3951 = vadd.f32 %v3862, %v3950
    %3952 = vmatmul.bf16.gmra.mxu0 %v2654
    %v3953 = vpop.f32.mrf.mxu0
    %v3954 = vadd.f32 %v3865, %v3953
    %v3955 = vpop.f32.mrf.mxu0
    %v3956 = vadd.f32 %v3867, %v3955
    %3957 = vmatmul.bf16.gmra.mxu0 %v2658
    %v3958 = vpop.f32.mrf.mxu0
    %v3959 = vadd.f32 %v3870, %v3958
    %v3960 = vpop.f32.mrf.mxu0
    %v3961 = vadd.f32 %v3872, %v3960
    %3962 = vmatmul.bf16.gmra.mxu0 %v2662
    %v3963 = vpop.f32.mrf.mxu0
    %v3964 = vadd.f32 %v3875, %v3963
    %v3965 = vpop.f32.mrf.mxu0
    %v3966 = vadd.f32 %v3877, %v3965
    %3967 = vmatmul.bf16.gmra.mxu0 %v2666
    %v3968 = vpop.f32.mrf.mxu0
    %v3969 = vadd.f32 %v3880, %v3968
    %v3970 = vpop.f32.mrf.mxu0
    %v3971 = vadd.f32 %v3882, %v3970
    %3972 = vmatmul.bf16.gmra.mxu0 %v2670
    %v3973 = vpop.f32.mrf.mxu0
    %v3974 = vadd.f32 %v3885, %v3973
    %v3975 = vpop.f32.mrf.mxu0
    %v3976 = vadd.f32 %v3887, %v3975
    %3977 = vmatmul.bf16.gmra.mxu0 %v2674
    %v3978 = vpop.f32.mrf.mxu0
    %v3979 = vadd.f32 %v3890, %v3978
    %v3980 = vpop.f32.mrf.mxu0
    %v3981 = vadd.f32 %v3892, %v3980
    %3982 = vmatmul.bf16.gmra.mxu0 %v2678
    %v3983 = vpop.f32.mrf.mxu0
    %v3984 = vadd.f32 %v3895, %v3983
    %v3985 = vpop.f32.mrf.mxu0
    %v3986 = vadd.f32 %v3897, %v3985
    %3987 = vmatmul.bf16.gmra.mxu0 %v2682
    %v3988 = vpop.f32.mrf.mxu0
    %v3989 = vadd.f32 %v3900, %v3988
    %v3990 = vpop.f32.mrf.mxu0
    %v3991 = vadd.f32 %v3902, %v3990
    %3992 = vmatmul.bf16.gmra.mxu0 %v2686
    %v3993 = vpop.f32.mrf.mxu0
    %v3994 = vadd.f32 %v3905, %v3993
    %v3995 = vpop.f32.mrf.mxu0
    %v3996 = vadd.f32 %v3907, %v3995
    %3997 = vmatmul.bf16.gmra.mxu0 %v2690
    %v3998 = vpop.f32.mrf.mxu0
    %v3999 = vadd.f32 %v3910, %v3998
    %v4000 = vpop.f32.mrf.mxu0
    %v4001 = vadd.f32 %v3912, %v4000
    %4002 = vmatmul.bf16.gmra.mxu0 %v2694
    %v4003 = vpop.f32.mrf.mxu0
    %v4004 = vadd.f32 %v3915, %v4003
    %v4005 = vpop.f32.mrf.mxu0
    %v4006 = vadd.f32 %v3917, %v4005
    %4007 = vmatmul.bf16.gmra.mxu0 %v2698
    %v4008 = vpop.f32.mrf.mxu0
    %v4009 = vadd.f32 %v3920, %v4008
    %v4010 = vpop.f32.mrf.mxu0
    %v4011 = vadd.f32 %v3922, %v4010
    %4012 = vdwg.mxu0
    %4013 = vmatpush.bf16.msra.mxu0 %v3316
    %4014 = vmatpush.bf16.msra.mxu0 %v3312
    %4015 = vmatpush.bf16.msra.mxu0 %v3308
    %4016 = vmatpush.bf16.msra.mxu0 %v3304
    %4017 = vmatpush.bf16.msra.mxu0 %v3300
    %4018 = vmatpush.bf16.msra.mxu0 %v3296
    %4019 = vmatpush.bf16.msra.mxu0 %v3292
    %4020 = vmatpush.bf16.msra.mxu0 %v3288
    %4021 = vmatmul.bf16.gmra.mxu0 %v2639
    %v4022 = vpop.f32.mrf.mxu0
    %v4023 = vadd.f32 %v3934, %v4022
    %v4024 = vpop.f32.mrf.mxu0
    %v4025 = vadd.f32 %v3936, %v4024
    %4026 = vmatmul.bf16.gmra.mxu0 %v2643
    %v4027 = vpop.f32.mrf.mxu0
    %v4028 = vadd.f32 %v3939, %v4027
    %v4029 = vpop.f32.mrf.mxu0
    %v4030 = vadd.f32 %v3941, %v4029
    %4031 = vmatmul.bf16.gmra.mxu0 %v2647
    %v4032 = vpop.f32.mrf.mxu0
    %v4033 = vadd.f32 %v3944, %v4032
    %v4034 = vpop.f32.mrf.mxu0
    %v4035 = vadd.f32 %v3946, %v4034
    %4036 = vmatmul.bf16.gmra.mxu0 %v2651
    %v4037 = vpop.f32.mrf.mxu0
    %v4038 = vadd.f32 %v3949, %v4037
    %v4039 = vpop.f32.mrf.mxu0
    %v4040 = vadd.f32 %v3951, %v4039
    %4041 = vmatmul.bf16.gmra.mxu0 %v2655
    %v4042 = vpop.f32.mrf.mxu0
    %v4043 = vadd.f32 %v3954, %v4042
    %v4044 = vpop.f32.mrf.mxu0
    %v4045 = vadd.f32 %v3956, %v4044
    %4046 = vmatmul.bf16.gmra.mxu0 %v2659
    %v4047 = vpop.f32.mrf.mxu0
    %v4048 = vadd.f32 %v3959, %v4047
    %v4049 = vpop.f32.mrf.mxu0
    %v4050 = vadd.f32 %v3961, %v4049
    %4051 = vmatmul.bf16.gmra.mxu0 %v2663
    %v4052 = vpop.f32.mrf.mxu0
    %v4053 = vadd.f32 %v3964, %v4052
    %v4054 = vpop.f32.mrf.mxu0
    %v4055 = vadd.f32 %v3966, %v4054
    %4056 = vmatmul.bf16.gmra.mxu0 %v2667
    %v4057 = vpop.f32.mrf.mxu0
    %v4058 = vadd.f32 %v3969, %v4057
    %v4059 = vpop.f32.mrf.mxu0
    %v4060 = vadd.f32 %v3971, %v4059
    %4061 = vmatmul.bf16.gmra.mxu0 %v2671
    %v4062 = vpop.f32.mrf.mxu0
    %v4063 = vadd.f32 %v3974, %v4062
    %v4064 = vpop.f32.mrf.mxu0
    %v4065 = vadd.f32 %v3976, %v4064
    %4066 = vmatmul.bf16.gmra.mxu0 %v2675
    %v4067 = vpop.f32.mrf.mxu0
    %v4068 = vadd.f32 %v3979, %v4067
    %v4069 = vpop.f32.mrf.mxu0
    %v4070 = vadd.f32 %v3981, %v4069
    %4071 = vmatmul.bf16.gmra.mxu0 %v2679
    %v4072 = vpop.f32.mrf.mxu0
    %v4073 = vadd.f32 %v3984, %v4072
    %v4074 = vpop.f32.mrf.mxu0
    %v4075 = vadd.f32 %v3986, %v4074
    %4076 = vmatmul.bf16.gmra.mxu0 %v2683
    %v4077 = vpop.f32.mrf.mxu0
    %v4078 = vadd.f32 %v3989, %v4077
    %v4079 = vpop.f32.mrf.mxu0
    %v4080 = vadd.f32 %v3991, %v4079
    %4081 = vmatmul.bf16.gmra.mxu0 %v2687
    %v4082 = vpop.f32.mrf.mxu0
    %v4083 = vadd.f32 %v3994, %v4082
    %v4084 = vpop.f32.mrf.mxu0
    %v4085 = vadd.f32 %v3996, %v4084
    %4086 = vmatmul.bf16.gmra.mxu0 %v2691
    %v4087 = vpop.f32.mrf.mxu0
    %v4088 = vadd.f32 %v3999, %v4087
    %v4089 = vpop.f32.mrf.mxu0
    %v4090 = vadd.f32 %v4001, %v4089
    %4091 = vmatmul.bf16.gmra.mxu0 %v2695
    %v4092 = vpop.f32.mrf.mxu0
    %v4093 = vadd.f32 %v4004, %v4092
    %v4094 = vpop.f32.mrf.mxu0
    %v4095 = vadd.f32 %v4006, %v4094
    %4096 = vmatmul.bf16.gmra.mxu0 %v2699
    %v4097 = vpop.f32.mrf.mxu0
    %v4098 = vadd.f32 %v4009, %v4097
    %v4099 = vpop.f32.mrf.mxu0
    %v4100 = vadd.f32 %v4011, %v4099
    %4101 = vdwg.mxu0
    %4102 = vmatpush.bf16.msra.mxu0 %v3348
    %4103 = vmatpush.bf16.msra.mxu0 %v3344
    %4104 = vmatpush.bf16.msra.mxu0 %v3340
    %4105 = vmatpush.bf16.msra.mxu0 %v3336
    %4106 = vmatpush.bf16.msra.mxu0 %v3332
    %4107 = vmatpush.bf16.msra.mxu0 %v3328
    %4108 = vmatpush.bf16.msra.mxu0 %v3324
    %4109 = vmatpush.bf16.msra.mxu0 %v3320
    %4110 = vmatmul.bf16.gmra.mxu0 %v2640
    %v4111 = vpop.f32.mrf.mxu0
    %v4112 = vadd.f32 %v4023, %v4111
    %v4113 = vpop.f32.mrf.mxu0
    %v4114 = vadd.f32 %v4025, %v4113
    %4115 = vmatmul.bf16.gmra.mxu0 %v2644
    %v4116 = vpop.f32.mrf.mxu0
    %v4117 = vadd.f32 %v4028, %v4116
    %v4118 = vpop.f32.mrf.mxu0
    %v4119 = vadd.f32 %v4030, %v4118
    %4120 = vmatmul.bf16.gmra.mxu0 %v2648
    %v4121 = vpop.f32.mrf.mxu0
    %v4122 = vadd.f32 %v4033, %v4121
    %v4123 = vpop.f32.mrf.mxu0
    %v4124 = vadd.f32 %v4035, %v4123
    %4125 = vmatmul.bf16.gmra.mxu0 %v2652
    %v4126 = vpop.f32.mrf.mxu0
    %v4127 = vadd.f32 %v4038, %v4126
    %v4128 = vpop.f32.mrf.mxu0
    %v4129 = vadd.f32 %v4040, %v4128
    %4130 = vmatmul.bf16.gmra.mxu0 %v2656
    %v4131 = vpop.f32.mrf.mxu0
    %v4132 = vadd.f32 %v4043, %v4131
    %v4133 = vpop.f32.mrf.mxu0
    %v4134 = vadd.f32 %v4045, %v4133
    %4135 = vmatmul.bf16.gmra.mxu0 %v2660
    %v4136 = vpop.f32.mrf.mxu0
    %v4137 = vadd.f32 %v4048, %v4136
    %v4138 = vpop.f32.mrf.mxu0
    %v4139 = vadd.f32 %v4050, %v4138
    %4140 = vmatmul.bf16.gmra.mxu0 %v2664
    %v4141 = vpop.f32.mrf.mxu0
    %v4142 = vadd.f32 %v4053, %v4141
    %v4143 = vpop.f32.mrf.mxu0
    %v4144 = vadd.f32 %v4055, %v4143
    %4145 = vmatmul.bf16.gmra.mxu0 %v2668
    %v4146 = vpop.f32.mrf.mxu0
    %v4147 = vadd.f32 %v4058, %v4146
    %v4148 = vpop.f32.mrf.mxu0
    %v4149 = vadd.f32 %v4060, %v4148
    %4150 = vmatmul.bf16.gmra.mxu0 %v2672
    %v4151 = vpop.f32.mrf.mxu0
    %v4152 = vadd.f32 %v4063, %v4151
    %v4153 = vpop.f32.mrf.mxu0
    %v4154 = vadd.f32 %v4065, %v4153
    %4155 = vmatmul.bf16.gmra.mxu0 %v2676
    %v4156 = vpop.f32.mrf.mxu0
    %v4157 = vadd.f32 %v4068, %v4156
    %v4158 = vpop.f32.mrf.mxu0
    %v4159 = vadd.f32 %v4070, %v4158
    %4160 = vmatmul.bf16.gmra.mxu0 %v2680
    %v4161 = vpop.f32.mrf.mxu0
    %v4162 = vadd.f32 %v4073, %v4161
    %v4163 = vpop.f32.mrf.mxu0
    %v4164 = vadd.f32 %v4075, %v4163
    %4165 = vmatmul.bf16.gmra.mxu0 %v2684
    %v4166 = vpop.f32.mrf.mxu0
    %v4167 = vadd.f32 %v4078, %v4166
    %v4168 = vpop.f32.mrf.mxu0
    %v4169 = vadd.f32 %v4080, %v4168
    %4170 = vmatmul.bf16.gmra.mxu0 %v2688
    %v4171 = vpop.f32.mrf.mxu0
    %v4172 = vadd.f32 %v4083, %v4171
    %v4173 = vpop.f32.mrf.mxu0
    %v4174 = vadd.f32 %v4085, %v4173
    %4175 = vmatmul.bf16.gmra.mxu0 %v2692
    %v4176 = vpop.f32.mrf.mxu0
    %v4177 = vadd.f32 %v4088, %v4176
    %v4178 = vpop.f32.mrf.mxu0
    %v4179 = vadd.f32 %v4090, %v4178
    %4180 = vmatmul.bf16.gmra.mxu0 %v2696
    %v4181 = vpop.f32.mrf.mxu0
    %v4182 = vadd.f32 %v4093, %v4181
    %v4183 = vpop.f32.mrf.mxu0
    %v4184 = vadd.f32 %v4095, %v4183
    %4185 = vmatmul.bf16.gmra.mxu0 %v2700
    %v4186 = vpop.f32.mrf.mxu0
    %v4187 = vadd.f32 %v4098, %v4186
    %v4188 = vpop.f32.mrf.mxu0
    %v4189 = vadd.f32 %v4100, %v4188
    %4190 = vdwg.mxu0
    %4191 = vmatpush.bf16.msra.mxu0 %v3253
    %4192 = vmatpush.bf16.msra.mxu0 %v3249
    %4193 = vmatpush.bf16.msra.mxu0 %v3245
    %4194 = vmatpush.bf16.msra.mxu0 %v3241
    %4195 = vmatpush.bf16.msra.mxu0 %v3237
    %4196 = vmatpush.bf16.msra.mxu0 %v3233
    %4197 = vmatpush.bf16.msra.mxu0 %v3229
    %4198 = vmatpush.bf16.msra.mxu0 %v3225
    %4199 = vmatmul.bf16.gmra.mxu0 %v2637
    %v4200 = vpop.f32.mrf.mxu0
    %v4201 = vadd.f32 %v2833, %v4200
    %v4202 = vpop.f32.mrf.mxu0
    %v4203 = vadd.f32 %v2833, %v4202
    %4204 = vmatmul.bf16.gmra.mxu0 %v2641
    %v4205 = vpop.f32.mrf.mxu0
    %v4206 = vadd.f32 %v2833, %v4205
    %v4207 = vpop.f32.mrf.mxu0
    %v4208 = vadd.f32 %v2833, %v4207
    %4209 = vmatmul.bf16.gmra.mxu0 %v2645
    %v4210 = vpop.f32.mrf.mxu0
    %v4211 = vadd.f32 %v2833, %v4210
    %v4212 = vpop.f32.mrf.mxu0
    %v4213 = vadd.f32 %v2833, %v4212
    %4214 = vmatmul.bf16.gmra.mxu0 %v2649
    %v4215 = vpop.f32.mrf.mxu0
    %v4216 = vadd.f32 %v2833, %v4215
    %v4217 = vpop.f32.mrf.mxu0
    %v4218 = vadd.f32 %v2833, %v4217
    %4219 = vmatmul.bf16.gmra.mxu0 %v2653
    %v4220 = vpop.f32.mrf.mxu0
    %v4221 = vadd.f32 %v2833, %v4220
    %v4222 = vpop.f32.mrf.mxu0
    %v4223 = vadd.f32 %v2833, %v4222
    %4224 = vmatmul.bf16.gmra.mxu0 %v2657
    %v4225 = vpop.f32.mrf.mxu0
    %v4226 = vadd.f32 %v2833, %v4225
    %v4227 = vpop.f32.mrf.mxu0
    %v4228 = vadd.f32 %v2833, %v4227
    %4229 = vmatmul.bf16.gmra.mxu0 %v2661
    %v4230 = vpop.f32.mrf.mxu0
    %v4231 = vadd.f32 %v2833, %v4230
    %v4232 = vpop.f32.mrf.mxu0
    %v4233 = vadd.f32 %v2833, %v4232
    %4234 = vmatmul.bf16.gmra.mxu0 %v2665
    %v4235 = vpop.f32.mrf.mxu0
    %v4236 = vadd.f32 %v2833, %v4235
    %v4237 = vpop.f32.mrf.mxu0
    %v4238 = vadd.f32 %v2833, %v4237
    %4239 = vmatmul.bf16.gmra.mxu0 %v2669
    %v4240 = vpop.f32.mrf.mxu0
    %v4241 = vadd.f32 %v2833, %v4240
    %v4242 = vpop.f32.mrf.mxu0
    %v4243 = vadd.f32 %v2833, %v4242
    %4244 = vmatmul.bf16.gmra.mxu0 %v2673
    %v4245 = vpop.f32.mrf.mxu0
    %v4246 = vadd.f32 %v2833, %v4245
    %v4247 = vpop.f32.mrf.mxu0
    %v4248 = vadd.f32 %v2833, %v4247
    %4249 = vmatmul.bf16.gmra.mxu0 %v2677
    %v4250 = vpop.f32.mrf.mxu0
    %v4251 = vadd.f32 %v2833, %v4250
    %v4252 = vpop.f32.mrf.mxu0
    %v4253 = vadd.f32 %v2833, %v4252
    %4254 = vmatmul.bf16.gmra.mxu0 %v2681
    %v4255 = vpop.f32.mrf.mxu0
    %v4256 = vadd.f32 %v2833, %v4255
    %v4257 = vpop.f32.mrf.mxu0
    %v4258 = vadd.f32 %v2833, %v4257
    %4259 = vmatmul.bf16.gmra.mxu0 %v2685
    %v4260 = vpop.f32.mrf.mxu0
    %v4261 = vadd.f32 %v2833, %v4260
    %v4262 = vpop.f32.mrf.mxu0
    %v4263 = vadd.f32 %v2833, %v4262
    %4264 = vmatmul.bf16.gmra.mxu0 %v2689
    %v4265 = vpop.f32.mrf.mxu0
    %v4266 = vadd.f32 %v2833, %v4265
    %v4267 = vpop.f32.mrf.mxu0
    %v4268 = vadd.f32 %v2833, %v4267
    %4269 = vmatmul.bf16.gmra.mxu0 %v2693
    %v4270 = vpop.f32.mrf.mxu0
    %v4271 = vadd.f32 %v2833, %v4270
    %v4272 = vpop.f32.mrf.mxu0
    %v4273 = vadd.f32 %v2833, %v4272
    %4274 = vmatmul.bf16.gmra.mxu0 %v2697
    %v4275 = vpop.f32.mrf.mxu0
    %v4276 = vadd.f32 %v2833, %v4275
    %v4277 = vpop.f32.mrf.mxu0
    %v4278 = vadd.f32 %v2833, %v4277
    %4279 = vdwg.mxu0
    %4280 = vmatpush.bf16.msra.mxu0 %v3285
    %4281 = vmatpush.bf16.msra.mxu0 %v3281
    %4282 = vmatpush.bf16.msra.mxu0 %v3277
    %4283 = vmatpush.bf16.msra.mxu0 %v3273
    %4284 = vmatpush.bf16.msra.mxu0 %v3269
    %4285 = vmatpush.bf16.msra.mxu0 %v3265
    %4286 = vmatpush.bf16.msra.mxu0 %v3261
    %4287 = vmatpush.bf16.msra.mxu0 %v3257
    %4288 = vmatmul.bf16.gmra.mxu0 %v2638
    %v4289 = vpop.f32.mrf.mxu0
    %v4290 = vadd.f32 %v4201, %v4289
    %v4291 = vpop.f32.mrf.mxu0
    %v4292 = vadd.f32 %v4203, %v4291
    %4293 = vmatmul.bf16.gmra.mxu0 %v2642
    %v4294 = vpop.f32.mrf.mxu0
    %v4295 = vadd.f32 %v4206, %v4294
    %v4296 = vpop.f32.mrf.mxu0
    %v4297 = vadd.f32 %v4208, %v4296
    %4298 = vmatmul.bf16.gmra.mxu0 %v2646
    %v4299 = vpop.f32.mrf.mxu0
    %v4300 = vadd.f32 %v4211, %v4299
    %v4301 = vpop.f32.mrf.mxu0
    %v4302 = vadd.f32 %v4213, %v4301
    %4303 = vmatmul.bf16.gmra.mxu0 %v2650
    %v4304 = vpop.f32.mrf.mxu0
    %v4305 = vadd.f32 %v4216, %v4304
    %v4306 = vpop.f32.mrf.mxu0
    %v4307 = vadd.f32 %v4218, %v4306
    %4308 = vmatmul.bf16.gmra.mxu0 %v2654
    %v4309 = vpop.f32.mrf.mxu0
    %v4310 = vadd.f32 %v4221, %v4309
    %v4311 = vpop.f32.mrf.mxu0
    %v4312 = vadd.f32 %v4223, %v4311
    %4313 = vmatmul.bf16.gmra.mxu0 %v2658
    %v4314 = vpop.f32.mrf.mxu0
    %v4315 = vadd.f32 %v4226, %v4314
    %v4316 = vpop.f32.mrf.mxu0
    %v4317 = vadd.f32 %v4228, %v4316
    %4318 = vmatmul.bf16.gmra.mxu0 %v2662
    %v4319 = vpop.f32.mrf.mxu0
    %v4320 = vadd.f32 %v4231, %v4319
    %v4321 = vpop.f32.mrf.mxu0
    %v4322 = vadd.f32 %v4233, %v4321
    %4323 = vmatmul.bf16.gmra.mxu0 %v2666
    %v4324 = vpop.f32.mrf.mxu0
    %v4325 = vadd.f32 %v4236, %v4324
    %v4326 = vpop.f32.mrf.mxu0
    %v4327 = vadd.f32 %v4238, %v4326
    %4328 = vmatmul.bf16.gmra.mxu0 %v2670
    %v4329 = vpop.f32.mrf.mxu0
    %v4330 = vadd.f32 %v4241, %v4329
    %v4331 = vpop.f32.mrf.mxu0
    %v4332 = vadd.f32 %v4243, %v4331
    %4333 = vmatmul.bf16.gmra.mxu0 %v2674
    %v4334 = vpop.f32.mrf.mxu0
    %v4335 = vadd.f32 %v4246, %v4334
    %v4336 = vpop.f32.mrf.mxu0
    %v4337 = vadd.f32 %v4248, %v4336
    %4338 = vmatmul.bf16.gmra.mxu0 %v2678
    %v4339 = vpop.f32.mrf.mxu0
    %v4340 = vadd.f32 %v4251, %v4339
    %v4341 = vpop.f32.mrf.mxu0
    %v4342 = vadd.f32 %v4253, %v4341
    %4343 = vmatmul.bf16.gmra.mxu0 %v2682
    %v4344 = vpop.f32.mrf.mxu0
    %v4345 = vadd.f32 %v4256, %v4344
    %v4346 = vpop.f32.mrf.mxu0
    %v4347 = vadd.f32 %v4258, %v4346
    %4348 = vmatmul.bf16.gmra.mxu0 %v2686
    %v4349 = vpop.f32.mrf.mxu0
    %v4350 = vadd.f32 %v4261, %v4349
    %v4351 = vpop.f32.mrf.mxu0
    %v4352 = vadd.f32 %v4263, %v4351
    %4353 = vmatmul.bf16.gmra.mxu0 %v2690
    %v4354 = vpop.f32.mrf.mxu0
    %v4355 = vadd.f32 %v4266, %v4354
    %v4356 = vpop.f32.mrf.mxu0
    %v4357 = vadd.f32 %v4268, %v4356
    %4358 = vmatmul.bf16.gmra.mxu0 %v2694
    %v4359 = vpop.f32.mrf.mxu0
    %v4360 = vadd.f32 %v4271, %v4359
    %v4361 = vpop.f32.mrf.mxu0
    %v4362 = vadd.f32 %v4273, %v4361
    %4363 = vmatmul.bf16.gmra.mxu0 %v2698
    %v4364 = vpop.f32.mrf.mxu0
    %v4365 = vadd.f32 %v4276, %v4364
    %v4366 = vpop.f32.mrf.mxu0
    %v4367 = vadd.f32 %v4278, %v4366
    %4368 = vdwg.mxu0
    %4369 = vmatpush.bf16.msra.mxu0 %v3317
    %4370 = vmatpush.bf16.msra.mxu0 %v3313
    %4371 = vmatpush.bf16.msra.mxu0 %v3309
    %4372 = vmatpush.bf16.msra.mxu0 %v3305
    %4373 = vmatpush.bf16.msra.mxu0 %v3301
    %4374 = vmatpush.bf16.msra.mxu0 %v3297
    %4375 = vmatpush.bf16.msra.mxu0 %v3293
    %4376 = vmatpush.bf16.msra.mxu0 %v3289
    %4377 = vmatmul.bf16.gmra.mxu0 %v2639
    %v4378 = vpop.f32.mrf.mxu0
    %v4379 = vadd.f32 %v4290, %v4378
    %v4380 = vpop.f32.mrf.mxu0
    %v4381 = vadd.f32 %v4292, %v4380
    %4382 = vmatmul.bf16.gmra.mxu0 %v2643
    %v4383 = vpop.f32.mrf.mxu0
    %v4384 = vadd.f32 %v4295, %v4383
    %v4385 = vpop.f32.mrf.mxu0
    %v4386 = vadd.f32 %v4297, %v4385
    %4387 = vmatmul.bf16.gmra.mxu0 %v2647
    %v4388 = vpop.f32.mrf.mxu0
    %v4389 = vadd.f32 %v4300, %v4388
    %v4390 = vpop.f32.mrf.mxu0
    %v4391 = vadd.f32 %v4302, %v4390
    %4392 = vmatmul.bf16.gmra.mxu0 %v2651
    %v4393 = vpop.f32.mrf.mxu0
    %v4394 = vadd.f32 %v4305, %v4393
    %v4395 = vpop.f32.mrf.mxu0
    %v4396 = vadd.f32 %v4307, %v4395
    %4397 = vmatmul.bf16.gmra.mxu0 %v2655
    %v4398 = vpop.f32.mrf.mxu0
    %v4399 = vadd.f32 %v4310, %v4398
    %v4400 = vpop.f32.mrf.mxu0
    %v4401 = vadd.f32 %v4312, %v4400
    %4402 = vmatmul.bf16.gmra.mxu0 %v2659
    %v4403 = vpop.f32.mrf.mxu0
    %v4404 = vadd.f32 %v4315, %v4403
    %v4405 = vpop.f32.mrf.mxu0
    %v4406 = vadd.f32 %v4317, %v4405
    %4407 = vmatmul.bf16.gmra.mxu0 %v2663
    %v4408 = vpop.f32.mrf.mxu0
    %v4409 = vadd.f32 %v4320, %v4408
    %v4410 = vpop.f32.mrf.mxu0
    %v4411 = vadd.f32 %v4322, %v4410
    %4412 = vmatmul.bf16.gmra.mxu0 %v2667
    %v4413 = vpop.f32.mrf.mxu0
    %v4414 = vadd.f32 %v4325, %v4413
    %v4415 = vpop.f32.mrf.mxu0
    %v4416 = vadd.f32 %v4327, %v4415
    %4417 = vmatmul.bf16.gmra.mxu0 %v2671
    %v4418 = vpop.f32.mrf.mxu0
    %v4419 = vadd.f32 %v4330, %v4418
    %v4420 = vpop.f32.mrf.mxu0
    %v4421 = vadd.f32 %v4332, %v4420
    %4422 = vmatmul.bf16.gmra.mxu0 %v2675
    %v4423 = vpop.f32.mrf.mxu0
    %v4424 = vadd.f32 %v4335, %v4423
    %v4425 = vpop.f32.mrf.mxu0
    %v4426 = vadd.f32 %v4337, %v4425
    %4427 = vmatmul.bf16.gmra.mxu0 %v2679
    %v4428 = vpop.f32.mrf.mxu0
    %v4429 = vadd.f32 %v4340, %v4428
    %v4430 = vpop.f32.mrf.mxu0
    %v4431 = vadd.f32 %v4342, %v4430
    %4432 = vmatmul.bf16.gmra.mxu0 %v2683
    %v4433 = vpop.f32.mrf.mxu0
    %v4434 = vadd.f32 %v4345, %v4433
    %v4435 = vpop.f32.mrf.mxu0
    %v4436 = vadd.f32 %v4347, %v4435
    %4437 = vmatmul.bf16.gmra.mxu0 %v2687
    %v4438 = vpop.f32.mrf.mxu0
    %v4439 = vadd.f32 %v4350, %v4438
    %v4440 = vpop.f32.mrf.mxu0
    %v4441 = vadd.f32 %v4352, %v4440
    %4442 = vmatmul.bf16.gmra.mxu0 %v2691
    %v4443 = vpop.f32.mrf.mxu0
    %v4444 = vadd.f32 %v4355, %v4443
    %v4445 = vpop.f32.mrf.mxu0
    %v4446 = vadd.f32 %v4357, %v4445
    %4447 = vmatmul.bf16.gmra.mxu0 %v2695
    %v4448 = vpop.f32.mrf.mxu0
    %v4449 = vadd.f32 %v4360, %v4448
    %v4450 = vpop.f32.mrf.mxu0
    %v4451 = vadd.f32 %v4362, %v4450
    %4452 = vmatmul.bf16.gmra.mxu0 %v2699
    %v4453 = vpop.f32.mrf.mxu0
    %v4454 = vadd.f32 %v4365, %v4453
    %v4455 = vpop.f32.mrf.mxu0
    %v4456 = vadd.f32 %v4367, %v4455
    %4457 = vdwg.mxu0
    %4458 = vmatpush.bf16.msra.mxu0 %v3349
    %4459 = vmatpush.bf16.msra.mxu0 %v3345
    %4460 = vmatpush.bf16.msra.mxu0 %v3341
    %4461 = vmatpush.bf16.msra.mxu0 %v3337
    %4462 = vmatpush.bf16.msra.mxu0 %v3333
    %4463 = vmatpush.bf16.msra.mxu0 %v3329
    %4464 = vmatpush.bf16.msra.mxu0 %v3325
    %4465 = vmatpush.bf16.msra.mxu0 %v3321
    %4466 = vmatmul.bf16.gmra.mxu0 %v2640
    %v4467 = vpop.f32.mrf.mxu0
    %v4468 = vadd.f32 %v4379, %v4467
    %v4469 = vpop.f32.mrf.mxu0
    %v4470 = vadd.f32 %v4381, %v4469
    %4471 = vmatmul.bf16.gmra.mxu0 %v2644
    %v4472 = vpop.f32.mrf.mxu0
    %v4473 = vadd.f32 %v4384, %v4472
    %v4474 = vpop.f32.mrf.mxu0
    %v4475 = vadd.f32 %v4386, %v4474
    %4476 = vmatmul.bf16.gmra.mxu0 %v2648
    %v4477 = vpop.f32.mrf.mxu0
    %v4478 = vadd.f32 %v4389, %v4477
    %v4479 = vpop.f32.mrf.mxu0
    %v4480 = vadd.f32 %v4391, %v4479
    %4481 = vmatmul.bf16.gmra.mxu0 %v2652
    %v4482 = vpop.f32.mrf.mxu0
    %v4483 = vadd.f32 %v4394, %v4482
    %v4484 = vpop.f32.mrf.mxu0
    %v4485 = vadd.f32 %v4396, %v4484
    %4486 = vmatmul.bf16.gmra.mxu0 %v2656
    %v4487 = vpop.f32.mrf.mxu0
    %v4488 = vadd.f32 %v4399, %v4487
    %v4489 = vpop.f32.mrf.mxu0
    %v4490 = vadd.f32 %v4401, %v4489
    %4491 = vmatmul.bf16.gmra.mxu0 %v2660
    %v4492 = vpop.f32.mrf.mxu0
    %v4493 = vadd.f32 %v4404, %v4492
    %v4494 = vpop.f32.mrf.mxu0
    %v4495 = vadd.f32 %v4406, %v4494
    %4496 = vmatmul.bf16.gmra.mxu0 %v2664
    %v4497 = vpop.f32.mrf.mxu0
    %v4498 = vadd.f32 %v4409, %v4497
    %v4499 = vpop.f32.mrf.mxu0
    %v4500 = vadd.f32 %v4411, %v4499
    %4501 = vmatmul.bf16.gmra.mxu0 %v2668
    %v4502 = vpop.f32.mrf.mxu0
    %v4503 = vadd.f32 %v4414, %v4502
    %v4504 = vpop.f32.mrf.mxu0
    %v4505 = vadd.f32 %v4416, %v4504
    %4506 = vmatmul.bf16.gmra.mxu0 %v2672
    %v4507 = vpop.f32.mrf.mxu0
    %v4508 = vadd.f32 %v4419, %v4507
    %v4509 = vpop.f32.mrf.mxu0
    %v4510 = vadd.f32 %v4421, %v4509
    %4511 = vmatmul.bf16.gmra.mxu0 %v2676
    %v4512 = vpop.f32.mrf.mxu0
    %v4513 = vadd.f32 %v4424, %v4512
    %v4514 = vpop.f32.mrf.mxu0
    %v4515 = vadd.f32 %v4426, %v4514
    %4516 = vmatmul.bf16.gmra.mxu0 %v2680
    %v4517 = vpop.f32.mrf.mxu0
    %v4518 = vadd.f32 %v4429, %v4517
    %v4519 = vpop.f32.mrf.mxu0
    %v4520 = vadd.f32 %v4431, %v4519
    %4521 = vmatmul.bf16.gmra.mxu0 %v2684
    %v4522 = vpop.f32.mrf.mxu0
    %v4523 = vadd.f32 %v4434, %v4522
    %v4524 = vpop.f32.mrf.mxu0
    %v4525 = vadd.f32 %v4436, %v4524
    %4526 = vmatmul.bf16.gmra.mxu0 %v2688
    %v4527 = vpop.f32.mrf.mxu0
    %v4528 = vadd.f32 %v4439, %v4527
    %v4529 = vpop.f32.mrf.mxu0
    %v4530 = vadd.f32 %v4441, %v4529
    %4531 = vmatmul.bf16.gmra.mxu0 %v2692
    %v4532 = vpop.f32.mrf.mxu0
    %v4533 = vadd.f32 %v4444, %v4532
    %v4534 = vpop.f32.mrf.mxu0
    %v4535 = vadd.f32 %v4446, %v4534
    %4536 = vmatmul.bf16.gmra.mxu0 %v2696
    %v4537 = vpop.f32.mrf.mxu0
    %v4538 = vadd.f32 %v4449, %v4537
    %v4539 = vpop.f32.mrf.mxu0
    %v4540 = vadd.f32 %v4451, %v4539
    %4541 = vmatmul.bf16.gmra.mxu0 %v2700
    %v4542 = vpop.f32.mrf.mxu0
    %v4543 = vadd.f32 %v4454, %v4542
    %v4544 = vpop.f32.mrf.mxu0
    %v4545 = vadd.f32 %v4456, %v4544
    %4546 = vdwg.mxu0
    %4547 = vmatpush.bf16.msra.mxu0 %v3254
    %4548 = vmatpush.bf16.msra.mxu0 %v3250
    %4549 = vmatpush.bf16.msra.mxu0 %v3246
    %4550 = vmatpush.bf16.msra.mxu0 %v3242
    %4551 = vmatpush.bf16.msra.mxu0 %v3238
    %4552 = vmatpush.bf16.msra.mxu0 %v3234
    %4553 = vmatpush.bf16.msra.mxu0 %v3230
    %4554 = vmatpush.bf16.msra.mxu0 %v3226
    %4555 = vmatmul.bf16.gmra.mxu0 %v2637
    %v4556 = vpop.f32.mrf.mxu0
    %v4557 = vadd.f32 %v2834, %v4556
    %v4558 = vpop.f32.mrf.mxu0
    %v4559 = vadd.f32 %v2834, %v4558
    %4560 = vmatmul.bf16.gmra.mxu0 %v2641
    %v4561 = vpop.f32.mrf.mxu0
    %v4562 = vadd.f32 %v2834, %v4561
    %v4563 = vpop.f32.mrf.mxu0
    %v4564 = vadd.f32 %v2834, %v4563
    %4565 = vmatmul.bf16.gmra.mxu0 %v2645
    %v4566 = vpop.f32.mrf.mxu0
    %v4567 = vadd.f32 %v2834, %v4566
    %v4568 = vpop.f32.mrf.mxu0
    %v4569 = vadd.f32 %v2834, %v4568
    %4570 = vmatmul.bf16.gmra.mxu0 %v2649
    %v4571 = vpop.f32.mrf.mxu0
    %v4572 = vadd.f32 %v2834, %v4571
    %v4573 = vpop.f32.mrf.mxu0
    %v4574 = vadd.f32 %v2834, %v4573
    %4575 = vmatmul.bf16.gmra.mxu0 %v2653
    %v4576 = vpop.f32.mrf.mxu0
    %v4577 = vadd.f32 %v2834, %v4576
    %v4578 = vpop.f32.mrf.mxu0
    %v4579 = vadd.f32 %v2834, %v4578
    %4580 = vmatmul.bf16.gmra.mxu0 %v2657
    %v4581 = vpop.f32.mrf.mxu0
    %v4582 = vadd.f32 %v2834, %v4581
    %v4583 = vpop.f32.mrf.mxu0
    %v4584 = vadd.f32 %v2834, %v4583
    %4585 = vmatmul.bf16.gmra.mxu0 %v2661
    %v4586 = vpop.f32.mrf.mxu0
    %v4587 = vadd.f32 %v2834, %v4586
    %v4588 = vpop.f32.mrf.mxu0
    %v4589 = vadd.f32 %v2834, %v4588
    %4590 = vmatmul.bf16.gmra.mxu0 %v2665
    %v4591 = vpop.f32.mrf.mxu0
    %v4592 = vadd.f32 %v2834, %v4591
    %v4593 = vpop.f32.mrf.mxu0
    %v4594 = vadd.f32 %v2834, %v4593
    %4595 = vmatmul.bf16.gmra.mxu0 %v2669
    %v4596 = vpop.f32.mrf.mxu0
    %v4597 = vadd.f32 %v2834, %v4596
    %v4598 = vpop.f32.mrf.mxu0
    %v4599 = vadd.f32 %v2834, %v4598
    %4600 = vmatmul.bf16.gmra.mxu0 %v2673
    %v4601 = vpop.f32.mrf.mxu0
    %v4602 = vadd.f32 %v2834, %v4601
    %v4603 = vpop.f32.mrf.mxu0
    %v4604 = vadd.f32 %v2834, %v4603
    %4605 = vmatmul.bf16.gmra.mxu0 %v2677
    %v4606 = vpop.f32.mrf.mxu0
    %v4607 = vadd.f32 %v2834, %v4606
    %v4608 = vpop.f32.mrf.mxu0
    %v4609 = vadd.f32 %v2834, %v4608
    %4610 = vmatmul.bf16.gmra.mxu0 %v2681
    %v4611 = vpop.f32.mrf.mxu0
    %v4612 = vadd.f32 %v2834, %v4611
    %v4613 = vpop.f32.mrf.mxu0
    %v4614 = vadd.f32 %v2834, %v4613
    %4615 = vmatmul.bf16.gmra.mxu0 %v2685
    %v4616 = vpop.f32.mrf.mxu0
    %v4617 = vadd.f32 %v2834, %v4616
    %v4618 = vpop.f32.mrf.mxu0
    %v4619 = vadd.f32 %v2834, %v4618
    %4620 = vmatmul.bf16.gmra.mxu0 %v2689
    %v4621 = vpop.f32.mrf.mxu0
    %v4622 = vadd.f32 %v2834, %v4621
    %v4623 = vpop.f32.mrf.mxu0
    %v4624 = vadd.f32 %v2834, %v4623
    %4625 = vmatmul.bf16.gmra.mxu0 %v2693
    %v4626 = vpop.f32.mrf.mxu0
    %v4627 = vadd.f32 %v2834, %v4626
    %v4628 = vpop.f32.mrf.mxu0
    %v4629 = vadd.f32 %v2834, %v4628
    %4630 = vmatmul.bf16.gmra.mxu0 %v2697
    %v4631 = vpop.f32.mrf.mxu0
    %v4632 = vadd.f32 %v2834, %v4631
    %v4633 = vpop.f32.mrf.mxu0
    %v4634 = vadd.f32 %v2834, %v4633
    %4635 = vdwg.mxu0
    %4636 = vmatpush.bf16.msra.mxu0 %v3286
    %4637 = vmatpush.bf16.msra.mxu0 %v3282
    %4638 = vmatpush.bf16.msra.mxu0 %v3278
    %4639 = vmatpush.bf16.msra.mxu0 %v3274
    %4640 = vmatpush.bf16.msra.mxu0 %v3270
    %4641 = vmatpush.bf16.msra.mxu0 %v3266
    %4642 = vmatpush.bf16.msra.mxu0 %v3262
    %4643 = vmatpush.bf16.msra.mxu0 %v3258
    %4644 = vmatmul.bf16.gmra.mxu0 %v2638
    %v4645 = vpop.f32.mrf.mxu0
    %v4646 = vadd.f32 %v4557, %v4645
    %v4647 = vpop.f32.mrf.mxu0
    %v4648 = vadd.f32 %v4559, %v4647
    %4649 = vmatmul.bf16.gmra.mxu0 %v2642
    %v4650 = vpop.f32.mrf.mxu0
    %v4651 = vadd.f32 %v4562, %v4650
    %v4652 = vpop.f32.mrf.mxu0
    %v4653 = vadd.f32 %v4564, %v4652
    %4654 = vmatmul.bf16.gmra.mxu0 %v2646
    %v4655 = vpop.f32.mrf.mxu0
    %v4656 = vadd.f32 %v4567, %v4655
    %v4657 = vpop.f32.mrf.mxu0
    %v4658 = vadd.f32 %v4569, %v4657
    %4659 = vmatmul.bf16.gmra.mxu0 %v2650
    %v4660 = vpop.f32.mrf.mxu0
    %v4661 = vadd.f32 %v4572, %v4660
    %v4662 = vpop.f32.mrf.mxu0
    %v4663 = vadd.f32 %v4574, %v4662
    %4664 = vmatmul.bf16.gmra.mxu0 %v2654
    %v4665 = vpop.f32.mrf.mxu0
    %v4666 = vadd.f32 %v4577, %v4665
    %v4667 = vpop.f32.mrf.mxu0
    %v4668 = vadd.f32 %v4579, %v4667
    %4669 = vmatmul.bf16.gmra.mxu0 %v2658
    %v4670 = vpop.f32.mrf.mxu0
    %v4671 = vadd.f32 %v4582, %v4670
    %v4672 = vpop.f32.mrf.mxu0
    %v4673 = vadd.f32 %v4584, %v4672
    %4674 = vmatmul.bf16.gmra.mxu0 %v2662
    %v4675 = vpop.f32.mrf.mxu0
    %v4676 = vadd.f32 %v4587, %v4675
    %v4677 = vpop.f32.mrf.mxu0
    %v4678 = vadd.f32 %v4589, %v4677
    %4679 = vmatmul.bf16.gmra.mxu0 %v2666
    %v4680 = vpop.f32.mrf.mxu0
    %v4681 = vadd.f32 %v4592, %v4680
    %v4682 = vpop.f32.mrf.mxu0
    %v4683 = vadd.f32 %v4594, %v4682
    %4684 = vmatmul.bf16.gmra.mxu0 %v2670
    %v4685 = vpop.f32.mrf.mxu0
    %v4686 = vadd.f32 %v4597, %v4685
    %v4687 = vpop.f32.mrf.mxu0
    %v4688 = vadd.f32 %v4599, %v4687
    %4689 = vmatmul.bf16.gmra.mxu0 %v2674
    %v4690 = vpop.f32.mrf.mxu0
    %v4691 = vadd.f32 %v4602, %v4690
    %v4692 = vpop.f32.mrf.mxu0
    %v4693 = vadd.f32 %v4604, %v4692
    %4694 = vmatmul.bf16.gmra.mxu0 %v2678
    %v4695 = vpop.f32.mrf.mxu0
    %v4696 = vadd.f32 %v4607, %v4695
    %v4697 = vpop.f32.mrf.mxu0
    %v4698 = vadd.f32 %v4609, %v4697
    %4699 = vmatmul.bf16.gmra.mxu0 %v2682
    %v4700 = vpop.f32.mrf.mxu0
    %v4701 = vadd.f32 %v4612, %v4700
    %v4702 = vpop.f32.mrf.mxu0
    %v4703 = vadd.f32 %v4614, %v4702
    %4704 = vmatmul.bf16.gmra.mxu0 %v2686
    %v4705 = vpop.f32.mrf.mxu0
    %v4706 = vadd.f32 %v4617, %v4705
    %v4707 = vpop.f32.mrf.mxu0
    %v4708 = vadd.f32 %v4619, %v4707
    %4709 = vmatmul.bf16.gmra.mxu0 %v2690
    %v4710 = vpop.f32.mrf.mxu0
    %v4711 = vadd.f32 %v4622, %v4710
    %v4712 = vpop.f32.mrf.mxu0
    %v4713 = vadd.f32 %v4624, %v4712
    %4714 = vmatmul.bf16.gmra.mxu0 %v2694
    %v4715 = vpop.f32.mrf.mxu0
    %v4716 = vadd.f32 %v4627, %v4715
    %v4717 = vpop.f32.mrf.mxu0
    %v4718 = vadd.f32 %v4629, %v4717
    %4719 = vmatmul.bf16.gmra.mxu0 %v2698
    %v4720 = vpop.f32.mrf.mxu0
    %v4721 = vadd.f32 %v4632, %v4720
    %v4722 = vpop.f32.mrf.mxu0
    %v4723 = vadd.f32 %v4634, %v4722
    %4724 = vdwg.mxu0
    %4725 = vmatpush.bf16.msra.mxu0 %v3318
    %4726 = vmatpush.bf16.msra.mxu0 %v3314
    %4727 = vmatpush.bf16.msra.mxu0 %v3310
    %4728 = vmatpush.bf16.msra.mxu0 %v3306
    %4729 = vmatpush.bf16.msra.mxu0 %v3302
    %4730 = vmatpush.bf16.msra.mxu0 %v3298
    %4731 = vmatpush.bf16.msra.mxu0 %v3294
    %4732 = vmatpush.bf16.msra.mxu0 %v3290
    %4733 = vmatmul.bf16.gmra.mxu0 %v2639
    %v4734 = vpop.f32.mrf.mxu0
    %v4735 = vadd.f32 %v4646, %v4734
    %v4736 = vpop.f32.mrf.mxu0
    %v4737 = vadd.f32 %v4648, %v4736
    %4738 = vmatmul.bf16.gmra.mxu0 %v2643
    %v4739 = vpop.f32.mrf.mxu0
    %v4740 = vadd.f32 %v4651, %v4739
    %v4741 = vpop.f32.mrf.mxu0
    %v4742 = vadd.f32 %v4653, %v4741
    %4743 = vmatmul.bf16.gmra.mxu0 %v2647
    %v4744 = vpop.f32.mrf.mxu0
    %v4745 = vadd.f32 %v4656, %v4744
    %v4746 = vpop.f32.mrf.mxu0
    %v4747 = vadd.f32 %v4658, %v4746
    %4748 = vmatmul.bf16.gmra.mxu0 %v2651
    %v4749 = vpop.f32.mrf.mxu0
    %v4750 = vadd.f32 %v4661, %v4749
    %v4751 = vpop.f32.mrf.mxu0
    %v4752 = vadd.f32 %v4663, %v4751
    %4753 = vmatmul.bf16.gmra.mxu0 %v2655
    %v4754 = vpop.f32.mrf.mxu0
    %v4755 = vadd.f32 %v4666, %v4754
    %v4756 = vpop.f32.mrf.mxu0
    %v4757 = vadd.f32 %v4668, %v4756
    %4758 = vmatmul.bf16.gmra.mxu0 %v2659
    %v4759 = vpop.f32.mrf.mxu0
    %v4760 = vadd.f32 %v4671, %v4759
    %v4761 = vpop.f32.mrf.mxu0
    %v4762 = vadd.f32 %v4673, %v4761
    %4763 = vmatmul.bf16.gmra.mxu0 %v2663
    %v4764 = vpop.f32.mrf.mxu0
    %v4765 = vadd.f32 %v4676, %v4764
    %v4766 = vpop.f32.mrf.mxu0
    %v4767 = vadd.f32 %v4678, %v4766
    %4768 = vmatmul.bf16.gmra.mxu0 %v2667
    %v4769 = vpop.f32.mrf.mxu0
    %v4770 = vadd.f32 %v4681, %v4769
    %v4771 = vpop.f32.mrf.mxu0
    %v4772 = vadd.f32 %v4683, %v4771
    %4773 = vmatmul.bf16.gmra.mxu0 %v2671
    %v4774 = vpop.f32.mrf.mxu0
    %v4775 = vadd.f32 %v4686, %v4774
    %v4776 = vpop.f32.mrf.mxu0
    %v4777 = vadd.f32 %v4688, %v4776
    %4778 = vmatmul.bf16.gmra.mxu0 %v2675
    %v4779 = vpop.f32.mrf.mxu0
    %v4780 = vadd.f32 %v4691, %v4779
    %v4781 = vpop.f32.mrf.mxu0
    %v4782 = vadd.f32 %v4693, %v4781
    %4783 = vmatmul.bf16.gmra.mxu0 %v2679
    %v4784 = vpop.f32.mrf.mxu0
    %v4785 = vadd.f32 %v4696, %v4784
    %v4786 = vpop.f32.mrf.mxu0
    %v4787 = vadd.f32 %v4698, %v4786
    %4788 = vmatmul.bf16.gmra.mxu0 %v2683
    %v4789 = vpop.f32.mrf.mxu0
    %v4790 = vadd.f32 %v4701, %v4789
    %v4791 = vpop.f32.mrf.mxu0
    %v4792 = vadd.f32 %v4703, %v4791
    %4793 = vmatmul.bf16.gmra.mxu0 %v2687
    %v4794 = vpop.f32.mrf.mxu0
    %v4795 = vadd.f32 %v4706, %v4794
    %v4796 = vpop.f32.mrf.mxu0
    %v4797 = vadd.f32 %v4708, %v4796
    %4798 = vmatmul.bf16.gmra.mxu0 %v2691
    %v4799 = vpop.f32.mrf.mxu0
    %v4800 = vadd.f32 %v4711, %v4799
    %v4801 = vpop.f32.mrf.mxu0
    %v4802 = vadd.f32 %v4713, %v4801
    %4803 = vmatmul.bf16.gmra.mxu0 %v2695
    %v4804 = vpop.f32.mrf.mxu0
    %v4805 = vadd.f32 %v4716, %v4804
    %v4806 = vpop.f32.mrf.mxu0
    %v4807 = vadd.f32 %v4718, %v4806
    %4808 = vmatmul.bf16.gmra.mxu0 %v2699
    %v4809 = vpop.f32.mrf.mxu0
    %v4810 = vadd.f32 %v4721, %v4809
    %v4811 = vpop.f32.mrf.mxu0
    %v4812 = vadd.f32 %v4723, %v4811
    %4813 = vdwg.mxu0
    %4814 = vmatpush.bf16.msra.mxu0 %v3350
    %4815 = vmatpush.bf16.msra.mxu0 %v3346
    %4816 = vmatpush.bf16.msra.mxu0 %v3342
    %4817 = vmatpush.bf16.msra.mxu0 %v3338
    %4818 = vmatpush.bf16.msra.mxu0 %v3334
    %4819 = vmatpush.bf16.msra.mxu0 %v3330
    %4820 = vmatpush.bf16.msra.mxu0 %v3326
    %4821 = vmatpush.bf16.msra.mxu0 %v3322
    %4822 = vmatmul.bf16.gmra.mxu0 %v2640
    %v4823 = vpop.f32.mrf.mxu0
    %v4824 = vadd.f32 %v4735, %v4823
    %v4825 = vpop.f32.mrf.mxu0
    %v4826 = vadd.f32 %v4737, %v4825
    %4827 = vmatmul.bf16.gmra.mxu0 %v2644
    %v4828 = vpop.f32.mrf.mxu0
    %v4829 = vadd.f32 %v4740, %v4828
    %v4830 = vpop.f32.mrf.mxu0
    %v4831 = vadd.f32 %v4742, %v4830
    %4832 = vmatmul.bf16.gmra.mxu0 %v2648
    %v4833 = vpop.f32.mrf.mxu0
    %v4834 = vadd.f32 %v4745, %v4833
    %v4835 = vpop.f32.mrf.mxu0
    %v4836 = vadd.f32 %v4747, %v4835
    %4837 = vmatmul.bf16.gmra.mxu0 %v2652
    %v4838 = vpop.f32.mrf.mxu0
    %v4839 = vadd.f32 %v4750, %v4838
    %v4840 = vpop.f32.mrf.mxu0
    %v4841 = vadd.f32 %v4752, %v4840
    %4842 = vmatmul.bf16.gmra.mxu0 %v2656
    %v4843 = vpop.f32.mrf.mxu0
    %v4844 = vadd.f32 %v4755, %v4843
    %v4845 = vpop.f32.mrf.mxu0
    %v4846 = vadd.f32 %v4757, %v4845
    %4847 = vmatmul.bf16.gmra.mxu0 %v2660
    %v4848 = vpop.f32.mrf.mxu0
    %v4849 = vadd.f32 %v4760, %v4848
    %v4850 = vpop.f32.mrf.mxu0
    %v4851 = vadd.f32 %v4762, %v4850
    %4852 = vmatmul.bf16.gmra.mxu0 %v2664
    %v4853 = vpop.f32.mrf.mxu0
    %v4854 = vadd.f32 %v4765, %v4853
    %v4855 = vpop.f32.mrf.mxu0
    %v4856 = vadd.f32 %v4767, %v4855
    %4857 = vmatmul.bf16.gmra.mxu0 %v2668
    %v4858 = vpop.f32.mrf.mxu0
    %v4859 = vadd.f32 %v4770, %v4858
    %v4860 = vpop.f32.mrf.mxu0
    %v4861 = vadd.f32 %v4772, %v4860
    %4862 = vmatmul.bf16.gmra.mxu0 %v2672
    %v4863 = vpop.f32.mrf.mxu0
    %v4864 = vadd.f32 %v4775, %v4863
    %v4865 = vpop.f32.mrf.mxu0
    %v4866 = vadd.f32 %v4777, %v4865
    %4867 = vmatmul.bf16.gmra.mxu0 %v2676
    %v4868 = vpop.f32.mrf.mxu0
    %v4869 = vadd.f32 %v4780, %v4868
    %v4870 = vpop.f32.mrf.mxu0
    %v4871 = vadd.f32 %v4782, %v4870
    %4872 = vmatmul.bf16.gmra.mxu0 %v2680
    %v4873 = vpop.f32.mrf.mxu0
    %v4874 = vadd.f32 %v4785, %v4873
    %v4875 = vpop.f32.mrf.mxu0
    %v4876 = vadd.f32 %v4787, %v4875
    %4877 = vmatmul.bf16.gmra.mxu0 %v2684
    %v4878 = vpop.f32.mrf.mxu0
    %v4879 = vadd.f32 %v4790, %v4878
    %v4880 = vpop.f32.mrf.mxu0
    %v4881 = vadd.f32 %v4792, %v4880
    %4882 = vmatmul.bf16.gmra.mxu0 %v2688
    %v4883 = vpop.f32.mrf.mxu0
    %v4884 = vadd.f32 %v4795, %v4883
    %v4885 = vpop.f32.mrf.mxu0
    %v4886 = vadd.f32 %v4797, %v4885
    %4887 = vmatmul.bf16.gmra.mxu0 %v2692
    %v4888 = vpop.f32.mrf.mxu0
    %v4889 = vadd.f32 %v4800, %v4888
    %v4890 = vpop.f32.mrf.mxu0
    %v4891 = vadd.f32 %v4802, %v4890
    %4892 = vmatmul.bf16.gmra.mxu0 %v2696
    %v4893 = vpop.f32.mrf.mxu0
    %v4894 = vadd.f32 %v4805, %v4893
    %v4895 = vpop.f32.mrf.mxu0
    %v4896 = vadd.f32 %v4807, %v4895
    %4897 = vmatmul.bf16.gmra.mxu0 %v2700
    %v4898 = vpop.f32.mrf.mxu0
    %v4899 = vadd.f32 %v4810, %v4898
    %v4900 = vpop.f32.mrf.mxu0
    %v4901 = vadd.f32 %v4812, %v4900
    %4902 = vdwg.mxu0
    %v4903 = vadd.f32 %v3756, %v115
    %v4904 = vadd.f32 %v4112, %v116
    %v4905 = vadd.f32 %v4468, %v117
    %v4906 = vadd.f32 %v4824, %v118
    %v4907 = vadd.f32 %v3758, %v119
    %v4908 = vadd.f32 %v4114, %v120
    %v4909 = vadd.f32 %v4470, %v121
    %v4910 = vadd.f32 %v4826, %v122
    %v4911 = vadd.f32 %v3761, %v123
    %v4912 = vadd.f32 %v4117, %v124
    %v4913 = vadd.f32 %v4473, %v125
    %v4914 = vadd.f32 %v4829, %v126
    %v4915 = vadd.f32 %v3763, %v127
    %v4916 = vadd.f32 %v4119, %v128
    %v4917 = vadd.f32 %v4475, %v129
    %v4918 = vadd.f32 %v4831, %v130
    %v4919 = vadd.f32 %v3766, %v131
    %v4920 = vadd.f32 %v4122, %v132
    %v4921 = vadd.f32 %v4478, %v133
    %v4922 = vadd.f32 %v4834, %v134
    %v4923 = vadd.f32 %v3768, %v135
    %v4924 = vadd.f32 %v4124, %v136
    %v4925 = vadd.f32 %v4480, %v137
    %v4926 = vadd.f32 %v4836, %v138
    %v4927 = vadd.f32 %v3771, %v139
    %v4928 = vadd.f32 %v4127, %v140
    %v4929 = vadd.f32 %v4483, %v141
    %v4930 = vadd.f32 %v4839, %v142
    %v4931 = vadd.f32 %v3773, %v143
    %v4932 = vadd.f32 %v4129, %v144
    %v4933 = vadd.f32 %v4485, %v145
    %v4934 = vadd.f32 %v4841, %v146
    %v4935 = vadd.f32 %v3776, %v147
    %v4936 = vadd.f32 %v4132, %v148
    %v4937 = vadd.f32 %v4488, %v149
    %v4938 = vadd.f32 %v4844, %v150
    %v4939 = vadd.f32 %v3778, %v151
    %v4940 = vadd.f32 %v4134, %v152
    %v4941 = vadd.f32 %v4490, %v153
    %v4942 = vadd.f32 %v4846, %v154
    %v4943 = vadd.f32 %v3781, %v155
    %v4944 = vadd.f32 %v4137, %v156
    %v4945 = vadd.f32 %v4493, %v157
    %v4946 = vadd.f32 %v4849, %v158
    %v4947 = vadd.f32 %v3783, %v159
    %v4948 = vadd.f32 %v4139, %v160
    %v4949 = vadd.f32 %v4495, %v161
    %v4950 = vadd.f32 %v4851, %v162
    %v4951 = vadd.f32 %v3786, %v163
    %v4952 = vadd.f32 %v4142, %v164
    %v4953 = vadd.f32 %v4498, %v165
    %v4954 = vadd.f32 %v4854, %v166
    %v4955 = vadd.f32 %v3788, %v167
    %v4956 = vadd.f32 %v4144, %v168
    %v4957 = vadd.f32 %v4500, %v169
    %v4958 = vadd.f32 %v4856, %v170
    %v4959 = vadd.f32 %v3791, %v171
    %v4960 = vadd.f32 %v4147, %v172
    %v4961 = vadd.f32 %v4503, %v173
    %v4962 = vadd.f32 %v4859, %v174
    %v4963 = vadd.f32 %v3793, %v175
    %v4964 = vadd.f32 %v4149, %v176
    %v4965 = vadd.f32 %v4505, %v177
    %v4966 = vadd.f32 %v4861, %v178
    %v4967 = vadd.f32 %v3796, %v179
    %v4968 = vadd.f32 %v4152, %v180
    %v4969 = vadd.f32 %v4508, %v181
    %v4970 = vadd.f32 %v4864, %v182
    %v4971 = vadd.f32 %v3798, %v183
    %v4972 = vadd.f32 %v4154, %v184
    %v4973 = vadd.f32 %v4510, %v185
    %v4974 = vadd.f32 %v4866, %v186
    %v4975 = vadd.f32 %v3801, %v187
    %v4976 = vadd.f32 %v4157, %v188
    %v4977 = vadd.f32 %v4513, %v189
    %v4978 = vadd.f32 %v4869, %v190
    %v4979 = vadd.f32 %v3803, %v191
    %v4980 = vadd.f32 %v4159, %v192
    %v4981 = vadd.f32 %v4515, %v193
    %v4982 = vadd.f32 %v4871, %v194
    %v4983 = vadd.f32 %v3806, %v195
    %v4984 = vadd.f32 %v4162, %v196
    %v4985 = vadd.f32 %v4518, %v197
    %v4986 = vadd.f32 %v4874, %v198
    %v4987 = vadd.f32 %v3808, %v199
    %v4988 = vadd.f32 %v4164, %v200
    %v4989 = vadd.f32 %v4520, %v201
    %v4990 = vadd.f32 %v4876, %v202
    %v4991 = vadd.f32 %v3811, %v203
    %v4992 = vadd.f32 %v4167, %v204
    %v4993 = vadd.f32 %v4523, %v205
    %v4994 = vadd.f32 %v4879, %v206
    %v4995 = vadd.f32 %v3813, %v207
    %v4996 = vadd.f32 %v4169, %v208
    %v4997 = vadd.f32 %v4525, %v209
    %v4998 = vadd.f32 %v4881, %v210
    %v4999 = vadd.f32 %v3816, %v211
    %v5000 = vadd.f32 %v4172, %v212
    %v5001 = vadd.f32 %v4528, %v213
    %v5002 = vadd.f32 %v4884, %v214
    %v5003 = vadd.f32 %v3818, %v215
    %v5004 = vadd.f32 %v4174, %v216
    %v5005 = vadd.f32 %v4530, %v217
    %v5006 = vadd.f32 %v4886, %v218
    %v5007 = vadd.f32 %v3821, %v219
    %v5008 = vadd.f32 %v4177, %v220
    %v5009 = vadd.f32 %v4533, %v221
    %v5010 = vadd.f32 %v4889, %v222
    %v5011 = vadd.f32 %v3823, %v223
    %v5012 = vadd.f32 %v4179, %v224
    %v5013 = vadd.f32 %v4535, %v225
    %v5014 = vadd.f32 %v4891, %v226
    %v5015 = vadd.f32 %v3826, %v227
    %v5016 = vadd.f32 %v4182, %v228
    %v5017 = vadd.f32 %v4538, %v229
    %v5018 = vadd.f32 %v4894, %v230
    %v5019 = vadd.f32 %v3828, %v231
    %v5020 = vadd.f32 %v4184, %v232
    %v5021 = vadd.f32 %v4540, %v233
    %v5022 = vadd.f32 %v4896, %v234
    %v5023 = vadd.f32 %v3831, %v235
    %v5024 = vadd.f32 %v4187, %v236
    %v5025 = vadd.f32 %v4543, %v237
    %v5026 = vadd.f32 %v4899, %v238
    %v5027 = vadd.f32 %v3833, %v239
    %v5028 = vadd.f32 %v4189, %v240
    %v5029 = vadd.f32 %v4545, %v241
    %v5030 = vadd.f32 %v4901, %v242
    %v5031 = vadd.f32 %v4903, %v4904
    %v5032 = vadd.f32 %v5031, %v4905
    %v5033 = vadd.f32 %v5032, %v4906
    %5034 = vadd.xlane.f32.xlu0 %v5033
    %v5035 = vpop.xlane.xlu0 %5034
    %v5036 = vadd.f32 %v4907, %v4908
    %v5037 = vadd.f32 %v5036, %v4909
    %v5038 = vadd.f32 %v5037, %v4910
    %5039 = vadd.xlane.f32.xlu0 %v5038
    %v5040 = vpop.xlane.xlu0 %5039
    %v5041 = vadd.f32 %v4911, %v4912
    %v5042 = vadd.f32 %v5041, %v4913
    %v5043 = vadd.f32 %v5042, %v4914
    %5044 = vadd.xlane.f32.xlu0 %v5043
    %v5045 = vpop.xlane.xlu0 %5044
    %v5046 = vadd.f32 %v4915, %v4916
    %v5047 = vadd.f32 %v5046, %v4917
    %v5048 = vadd.f32 %v5047, %v4918
    %5049 = vadd.xlane.f32.xlu0 %v5048
    %v5050 = vpop.xlane.xlu0 %5049
    %v5051 = vadd.f32 %v4919, %v4920
    %v5052 = vadd.f32 %v5051, %v4921
    %v5053 = vadd.f32 %v5052, %v4922
    %5054 = vadd.xlane.f32.xlu0 %v5053
    %v5055 = vpop.xlane.xlu0 %5054
    %v5056 = vadd.f32 %v4923, %v4924
    %v5057 = vadd.f32 %v5056, %v4925
    %v5058 = vadd.f32 %v5057, %v4926
    %5059 = vadd.xlane.f32.xlu0 %v5058
    %v5060 = vpop.xlane.xlu0 %5059
    %v5061 = vadd.f32 %v4927, %v4928
    %v5062 = vadd.f32 %v5061, %v4929
    %v5063 = vadd.f32 %v5062, %v4930
    %5064 = vadd.xlane.f32.xlu0 %v5063
    %v5065 = vpop.xlane.xlu0 %5064
    %v5066 = vadd.f32 %v4931, %v4932
    %v5067 = vadd.f32 %v5066, %v4933
    %v5068 = vadd.f32 %v5067, %v4934
    %5069 = vadd.xlane.f32.xlu0 %v5068
    %v5070 = vpop.xlane.xlu0 %5069
    %v5071 = vadd.f32 %v4935, %v4936
    %v5072 = vadd.f32 %v5071, %v4937
    %v5073 = vadd.f32 %v5072, %v4938
    %5074 = vadd.xlane.f32.xlu0 %v5073
    %v5075 = vpop.xlane.xlu0 %5074
    %v5076 = vadd.f32 %v4939, %v4940
    %v5077 = vadd.f32 %v5076, %v4941
    %v5078 = vadd.f32 %v5077, %v4942
    %5079 = vadd.xlane.f32.xlu0 %v5078
    %v5080 = vpop.xlane.xlu0 %5079
    %v5081 = vadd.f32 %v4943, %v4944
    %v5082 = vadd.f32 %v5081, %v4945
    %v5083 = vadd.f32 %v5082, %v4946
    %5084 = vadd.xlane.f32.xlu0 %v5083
    %v5085 = vpop.xlane.xlu0 %5084
    %v5086 = vadd.f32 %v4947, %v4948
    %v5087 = vadd.f32 %v5086, %v4949
    %v5088 = vadd.f32 %v5087, %v4950
    %5089 = vadd.xlane.f32.xlu0 %v5088
    %v5090 = vpop.xlane.xlu0 %5089
    %v5091 = vadd.f32 %v4951, %v4952
    %v5092 = vadd.f32 %v5091, %v4953
    %v5093 = vadd.f32 %v5092, %v4954
    %5094 = vadd.xlane.f32.xlu0 %v5093
    %v5095 = vpop.xlane.xlu0 %5094
    %v5096 = vadd.f32 %v4955, %v4956
    %v5097 = vadd.f32 %v5096, %v4957
    %v5098 = vadd.f32 %v5097, %v4958
    %5099 = vadd.xlane.f32.xlu0 %v5098
    %v5100 = vpop.xlane.xlu0 %5099
    %v5101 = vadd.f32 %v4959, %v4960
    %v5102 = vadd.f32 %v5101, %v4961
    %v5103 = vadd.f32 %v5102, %v4962
    %5104 = vadd.xlane.f32.xlu0 %v5103
    %v5105 = vpop.xlane.xlu0 %5104
    %v5106 = vadd.f32 %v4963, %v4964
    %v5107 = vadd.f32 %v5106, %v4965
    %v5108 = vadd.f32 %v5107, %v4966
    %5109 = vadd.xlane.f32.xlu0 %v5108
    %v5110 = vpop.xlane.xlu0 %5109
    %v5111 = vadd.f32 %v4967, %v4968
    %v5112 = vadd.f32 %v5111, %v4969
    %v5113 = vadd.f32 %v5112, %v4970
    %5114 = vadd.xlane.f32.xlu0 %v5113
    %v5115 = vpop.xlane.xlu0 %5114
    %v5116 = vadd.f32 %v4971, %v4972
    %v5117 = vadd.f32 %v5116, %v4973
    %v5118 = vadd.f32 %v5117, %v4974
    %5119 = vadd.xlane.f32.xlu0 %v5118
    %v5120 = vpop.xlane.xlu0 %5119
    %v5121 = vadd.f32 %v4975, %v4976
    %v5122 = vadd.f32 %v5121, %v4977
    %v5123 = vadd.f32 %v5122, %v4978
    %5124 = vadd.xlane.f32.xlu0 %v5123
    %v5125 = vpop.xlane.xlu0 %5124
    %v5126 = vadd.f32 %v4979, %v4980
    %v5127 = vadd.f32 %v5126, %v4981
    %v5128 = vadd.f32 %v5127, %v4982
    %5129 = vadd.xlane.f32.xlu0 %v5128
    %v5130 = vpop.xlane.xlu0 %5129
    %v5131 = vadd.f32 %v4983, %v4984
    %v5132 = vadd.f32 %v5131, %v4985
    %v5133 = vadd.f32 %v5132, %v4986
    %5134 = vadd.xlane.f32.xlu0 %v5133
    %v5135 = vpop.xlane.xlu0 %5134
    %v5136 = vadd.f32 %v4987, %v4988
    %v5137 = vadd.f32 %v5136, %v4989
    %v5138 = vadd.f32 %v5137, %v4990
    %5139 = vadd.xlane.f32.xlu0 %v5138
    %v5140 = vpop.xlane.xlu0 %5139
    %v5141 = vadd.f32 %v4991, %v4992
    %v5142 = vadd.f32 %v5141, %v4993
    %v5143 = vadd.f32 %v5142, %v4994
    %5144 = vadd.xlane.f32.xlu0 %v5143
    %v5145 = vpop.xlane.xlu0 %5144
    %v5146 = vadd.f32 %v4995, %v4996
    %v5147 = vadd.f32 %v5146, %v4997
    %v5148 = vadd.f32 %v5147, %v4998
    %5149 = vadd.xlane.f32.xlu0 %v5148
    %v5150 = vpop.xlane.xlu0 %5149
    %v5151 = vadd.f32 %v4999, %v5000
    %v5152 = vadd.f32 %v5151, %v5001
    %v5153 = vadd.f32 %v5152, %v5002
    %5154 = vadd.xlane.f32.xlu0 %v5153
    %v5155 = vpop.xlane.xlu0 %5154
    %v5156 = vadd.f32 %v5003, %v5004
    %v5157 = vadd.f32 %v5156, %v5005
    %v5158 = vadd.f32 %v5157, %v5006
    %5159 = vadd.xlane.f32.xlu0 %v5158
    %v5160 = vpop.xlane.xlu0 %5159
    %v5161 = vadd.f32 %v5007, %v5008
    %v5162 = vadd.f32 %v5161, %v5009
    %v5163 = vadd.f32 %v5162, %v5010
    %5164 = vadd.xlane.f32.xlu0 %v5163
    %v5165 = vpop.xlane.xlu0 %5164
    %v5166 = vadd.f32 %v5011, %v5012
    %v5167 = vadd.f32 %v5166, %v5013
    %v5168 = vadd.f32 %v5167, %v5014
    %5169 = vadd.xlane.f32.xlu0 %v5168
    %v5170 = vpop.xlane.xlu0 %5169
    %v5171 = vadd.f32 %v5015, %v5016
    %v5172 = vadd.f32 %v5171, %v5017
    %v5173 = vadd.f32 %v5172, %v5018
    %5174 = vadd.xlane.f32.xlu0 %v5173
    %v5175 = vpop.xlane.xlu0 %5174
    %v5176 = vadd.f32 %v5019, %v5020
    %v5177 = vadd.f32 %v5176, %v5021
    %v5178 = vadd.f32 %v5177, %v5022
    %5179 = vadd.xlane.f32.xlu0 %v5178
    %v5180 = vpop.xlane.xlu0 %5179
    %v5181 = vadd.f32 %v5023, %v5024
    %v5182 = vadd.f32 %v5181, %v5025
    %v5183 = vadd.f32 %v5182, %v5026
    %5184 = vadd.xlane.f32.xlu0 %v5183
    %v5185 = vpop.xlane.xlu0 %5184
    %v5186 = vadd.f32 %v5027, %v5028
    %v5187 = vadd.f32 %v5186, %v5029
    %v5188 = vadd.f32 %v5187, %v5030
    %5189 = vadd.xlane.f32.xlu0 %v5188
    %v5190 = vpop.xlane.xlu0 %5189
    %v5191 = vrcp.pop 512.0
    %v5192 = vmul.f32 512.0, %v5191
    %v5193 = vsub.f32 1.0, %v5192
    %v5194 = vmul.f32 %v5191, %v5193
    %v5195 = vadd.f32 %v5191, %v5194
    %vm5196 = vweird.f32 %v5191
    %v5197 = vsel %vm5196, %v5191, %v5195
    %v5198 = vmul.f32 %v5035, %v5197
    %v5199 = vmul.f32 %v5040, %v5197
    %v5200 = vmul.f32 %v5045, %v5197
    %v5201 = vmul.f32 %v5050, %v5197
    %v5202 = vmul.f32 %v5055, %v5197
    %v5203 = vmul.f32 %v5060, %v5197
    %v5204 = vmul.f32 %v5065, %v5197
    %v5205 = vmul.f32 %v5070, %v5197
    %v5206 = vmul.f32 %v5075, %v5197
    %v5207 = vmul.f32 %v5080, %v5197
    %v5208 = vmul.f32 %v5085, %v5197
    %v5209 = vmul.f32 %v5090, %v5197
    %v5210 = vmul.f32 %v5095, %v5197
    %v5211 = vmul.f32 %v5100, %v5197
    %v5212 = vmul.f32 %v5105, %v5197
    %v5213 = vmul.f32 %v5110, %v5197
    %v5214 = vmul.f32 %v5115, %v5197
    %v5215 = vmul.f32 %v5120, %v5197
    %v5216 = vmul.f32 %v5125, %v5197
    %v5217 = vmul.f32 %v5130, %v5197
    %v5218 = vmul.f32 %v5135, %v5197
    %v5219 = vmul.f32 %v5140, %v5197
    %v5220 = vmul.f32 %v5145, %v5197
    %v5221 = vmul.f32 %v5150, %v5197
    %v5222 = vmul.f32 %v5155, %v5197
    %v5223 = vmul.f32 %v5160, %v5197
    %v5224 = vmul.f32 %v5165, %v5197
    %v5225 = vmul.f32 %v5170, %v5197
    %v5226 = vmul.f32 %v5175, %v5197
    %v5227 = vmul.f32 %v5180, %v5197
    %v5228 = vmul.f32 %v5185, %v5197
    %v5229 = vmul.f32 %v5190, %v5197
    %v5230 = vsub.f32 %v4903, %v5198
    %v5231 = vsub.f32 %v4904, %v5198
    %v5232 = vsub.f32 %v4905, %v5198
    %v5233 = vsub.f32 %v4906, %v5198
    %v5234 = vsub.f32 %v4907, %v5199
    %v5235 = vsub.f32 %v4908, %v5199
    %v5236 = vsub.f32 %v4909, %v5199
    %v5237 = vsub.f32 %v4910, %v5199
    %v5238 = vsub.f32 %v4911, %v5200
    %v5239 = vsub.f32 %v4912, %v5200
    %v5240 = vsub.f32 %v4913, %v5200
    %v5241 = vsub.f32 %v4914, %v5200
    %v5242 = vsub.f32 %v4915, %v5201
    %v5243 = vsub.f32 %v4916, %v5201
    %v5244 = vsub.f32 %v4917, %v5201
    %v5245 = vsub.f32 %v4918, %v5201
    %v5246 = vsub.f32 %v4919, %v5202
    %v5247 = vsub.f32 %v4920, %v5202
    %v5248 = vsub.f32 %v4921, %v5202
    %v5249 = vsub.f32 %v4922, %v5202
    %v5250 = vsub.f32 %v4923, %v5203
    %v5251 = vsub.f32 %v4924, %v5203
    %v5252 = vsub.f32 %v4925, %v5203
    %v5253 = vsub.f32 %v4926, %v5203
    %v5254 = vsub.f32 %v4927, %v5204
    %v5255 = vsub.f32 %v4928, %v5204
    %v5256 = vsub.f32 %v4929, %v5204
    %v5257 = vsub.f32 %v4930, %v5204
    %v5258 = vsub.f32 %v4931, %v5205
    %v5259 = vsub.f32 %v4932, %v5205
    %v5260 = vsub.f32 %v4933, %v5205
    %v5261 = vsub.f32 %v4934, %v5205
    %v5262 = vsub.f32 %v4935, %v5206
    %v5263 = vsub.f32 %v4936, %v5206
    %v5264 = vsub.f32 %v4937, %v5206
    %v5265 = vsub.f32 %v4938, %v5206
    %v5266 = vsub.f32 %v4939, %v5207
    %v5267 = vsub.f32 %v4940, %v5207
    %v5268 = vsub.f32 %v4941, %v5207
    %v5269 = vsub.f32 %v4942, %v5207
    %v5270 = vsub.f32 %v4943, %v5208
    %v5271 = vsub.f32 %v4944, %v5208
    %v5272 = vsub.f32 %v4945, %v5208
    %v5273 = vsub.f32 %v4946, %v5208
    %v5274 = vsub.f32 %v4947, %v5209
    %v5275 = vsub.f32 %v4948, %v5209
    %v5276 = vsub.f32 %v4949, %v5209
    %v5277 = vsub.f32 %v4950, %v5209
    %v5278 = vsub.f32 %v4951, %v5210
    %v5279 = vsub.f32 %v4952, %v5210
    %v5280 = vsub.f32 %v4953, %v5210
    %v5281 = vsub.f32 %v4954, %v5210
    %v5282 = vsub.f32 %v4955, %v5211
    %v5283 = vsub.f32 %v4956, %v5211
    %v5284 = vsub.f32 %v4957, %v5211
    %v5285 = vsub.f32 %v4958, %v5211
    %v5286 = vsub.f32 %v4959, %v5212
    %v5287 = vsub.f32 %v4960, %v5212
    %v5288 = vsub.f32 %v4961, %v5212
    %v5289 = vsub.f32 %v4962, %v5212
    %v5290 = vsub.f32 %v4963, %v5213
    %v5291 = vsub.f32 %v4964, %v5213
    %v5292 = vsub.f32 %v4965, %v5213
    %v5293 = vsub.f32 %v4966, %v5213
    %v5294 = vsub.f32 %v4967, %v5214
    %v5295 = vsub.f32 %v4968, %v5214
    %v5296 = vsub.f32 %v4969, %v5214
    %v5297 = vsub.f32 %v4970, %v5214
    %v5298 = vsub.f32 %v4971, %v5215
    %v5299 = vsub.f32 %v4972, %v5215
    %v5300 = vsub.f32 %v4973, %v5215
    %v5301 = vsub.f32 %v4974, %v5215
    %v5302 = vsub.f32 %v4975, %v5216
    %v5303 = vsub.f32 %v4976, %v5216
    %v5304 = vsub.f32 %v4977, %v5216
    %v5305 = vsub.f32 %v4978, %v5216
    %v5306 = vsub.f32 %v4979, %v5217
    %v5307 = vsub.f32 %v4980, %v5217
    %v5308 = vsub.f32 %v4981, %v5217
    %v5309 = vsub.f32 %v4982, %v5217
    %v5310 = vsub.f32 %v4983, %v5218
    %v5311 = vsub.f32 %v4984, %v5218
    %v5312 = vsub.f32 %v4985, %v5218
    %v5313 = vsub.f32 %v4986, %v5218
    %v5314 = vsub.f32 %v4987, %v5219
    %v5315 = vsub.f32 %v4988, %v5219
    %v5316 = vsub.f32 %v4989, %v5219
    %v5317 = vsub.f32 %v4990, %v5219
    %v5318 = vsub.f32 %v4991, %v5220
    %v5319 = vsub.f32 %v4992, %v5220
    %v5320 = vsub.f32 %v4993, %v5220
    %v5321 = vsub.f32 %v4994, %v5220
    %v5322 = vsub.f32 %v4995, %v5221
    %v5323 = vsub.f32 %v4996, %v5221
    %v5324 = vsub.f32 %v4997, %v5221
    %v5325 = vsub.f32 %v4998, %v5221
    %v5326 = vsub.f32 %v4999, %v5222
    %v5327 = vsub.f32 %v5000, %v5222
    %v5328 = vsub.f32 %v5001, %v5222
    %v5329 = vsub.f32 %v5002, %v5222
    %v5330 = vsub.f32 %v5003, %v5223
    %v5331 = vsub.f32 %v5004, %v5223
    %v5332 = vsub.f32 %v5005, %v5223
    %v5333 = vsub.f32 %v5006, %v5223
    %v5334 = vsub.f32 %v5007, %v5224
    %v5335 = vsub.f32 %v5008, %v5224
    %v5336 = vsub.f32 %v5009, %v5224
    %v5337 = vsub.f32 %v5010, %v5224
    %v5338 = vsub.f32 %v5011, %v5225
    %v5339 = vsub.f32 %v5012, %v5225
    %v5340 = vsub.f32 %v5013, %v5225
    %v5341 = vsub.f32 %v5014, %v5225
    %v5342 = vsub.f32 %v5015, %v5226
    %v5343 = vsub.f32 %v5016, %v5226
    %v5344 = vsub.f32 %v5017, %v5226
    %v5345 = vsub.f32 %v5018, %v5226
    %v5346 = vsub.f32 %v5019, %v5227
    %v5347 = vsub.f32 %v5020, %v5227
    %v5348 = vsub.f32 %v5021, %v5227
    %v5349 = vsub.f32 %v5022, %v5227
    %v5350 = vsub.f32 %v5023, %v5228
    %v5351 = vsub.f32 %v5024, %v5228
    %v5352 = vsub.f32 %v5025, %v5228
    %v5353 = vsub.f32 %v5026, %v5228
    %v5354 = vsub.f32 %v5027, %v5229
    %v5355 = vsub.f32 %v5028, %v5229
    %v5356 = vsub.f32 %v5029, %v5229
    %v5357 = vsub.f32 %v5030, %v5229
    %v5358 = vmul.f32 %v5230, %v5230
    %v5359 = vmul.f32 %v5231, %v5231
    %v5360 = vmul.f32 %v5232, %v5232
    %v5361 = vmul.f32 %v5233, %v5233
    %v5362 = vmul.f32 %v5234, %v5234
    %v5363 = vmul.f32 %v5235, %v5235
    %v5364 = vmul.f32 %v5236, %v5236
    %v5365 = vmul.f32 %v5237, %v5237
    %v5366 = vmul.f32 %v5238, %v5238
    %v5367 = vmul.f32 %v5239, %v5239
    %v5368 = vmul.f32 %v5240, %v5240
    %v5369 = vmul.f32 %v5241, %v5241
    %v5370 = vmul.f32 %v5242, %v5242
    %v5371 = vmul.f32 %v5243, %v5243
    %v5372 = vmul.f32 %v5244, %v5244
    %v5373 = vmul.f32 %v5245, %v5245
    %v5374 = vmul.f32 %v5246, %v5246
    %v5375 = vmul.f32 %v5247, %v5247
    %v5376 = vmul.f32 %v5248, %v5248
    %v5377 = vmul.f32 %v5249, %v5249
    %v5378 = vmul.f32 %v5250, %v5250
    %v5379 = vmul.f32 %v5251, %v5251
    %v5380 = vmul.f32 %v5252, %v5252
    %v5381 = vmul.f32 %v5253, %v5253
    %v5382 = vmul.f32 %v5254, %v5254
    %v5383 = vmul.f32 %v5255, %v5255
    %v5384 = vmul.f32 %v5256, %v5256
    %v5385 = vmul.f32 %v5257, %v5257
    %v5386 = vmul.f32 %v5258, %v5258
    %v5387 = vmul.f32 %v5259, %v5259
    %v5388 = vmul.f32 %v5260, %v5260
    %v5389 = vmul.f32 %v5261, %v5261
    %v5390 = vmul.f32 %v5262, %v5262
    %v5391 = vmul.f32 %v5263, %v5263
    %v5392 = vmul.f32 %v5264, %v5264
    %v5393 = vmul.f32 %v5265, %v5265
    %v5394 = vmul.f32 %v5266, %v5266
    %v5395 = vmul.f32 %v5267, %v5267
    %v5396 = vmul.f32 %v5268, %v5268
    %v5397 = vmul.f32 %v5269, %v5269
    %v5398 = vmul.f32 %v5270, %v5270
    %v5399 = vmul.f32 %v5271, %v5271
    %v5400 = vmul.f32 %v5272, %v5272
    %v5401 = vmul.f32 %v5273, %v5273
    %v5402 = vmul.f32 %v5274, %v5274
    %v5403 = vmul.f32 %v5275, %v5275
    %v5404 = vmul.f32 %v5276, %v5276
    %v5405 = vmul.f32 %v5277, %v5277
    %v5406 = vmul.f32 %v5278, %v5278
    %v5407 = vmul.f32 %v5279, %v5279
    %v5408 = vmul.f32 %v5280, %v5280
    %v5409 = vmul.f32 %v5281, %v5281
    %v5410 = vmul.f32 %v5282, %v5282
    %v5411 = vmul.f32 %v5283, %v5283
    %v5412 = vmul.f32 %v5284, %v5284
    %v5413 = vmul.f32 %v5285, %v5285
    %v5414 = vmul.f32 %v5286, %v5286
    %v5415 = vmul.f32 %v5287, %v5287
    %v5416 = vmul.f32 %v5288, %v5288
    %v5417 = vmul.f32 %v5289, %v5289
    %v5418 = vmul.f32 %v5290, %v5290
    %v5419 = vmul.f32 %v5291, %v5291
    %v5420 = vmul.f32 %v5292, %v5292
    %v5421 = vmul.f32 %v5293, %v5293
    %v5422 = vmul.f32 %v5294, %v5294
    %v5423 = vmul.f32 %v5295, %v5295
    %v5424 = vmul.f32 %v5296, %v5296
    %v5425 = vmul.f32 %v5297, %v5297
    %v5426 = vmul.f32 %v5298, %v5298
    %v5427 = vmul.f32 %v5299, %v5299
    %v5428 = vmul.f32 %v5300, %v5300
    %v5429 = vmul.f32 %v5301, %v5301
    %v5430 = vmul.f32 %v5302, %v5302
    %v5431 = vmul.f32 %v5303, %v5303
    %v5432 = vmul.f32 %v5304, %v5304
    %v5433 = vmul.f32 %v5305, %v5305
    %v5434 = vmul.f32 %v5306, %v5306
    %v5435 = vmul.f32 %v5307, %v5307
    %v5436 = vmul.f32 %v5308, %v5308
    %v5437 = vmul.f32 %v5309, %v5309
    %v5438 = vmul.f32 %v5310, %v5310
    %v5439 = vmul.f32 %v5311, %v5311
    %v5440 = vmul.f32 %v5312, %v5312
    %v5441 = vmul.f32 %v5313, %v5313
    %v5442 = vmul.f32 %v5314, %v5314
    %v5443 = vmul.f32 %v5315, %v5315
    %v5444 = vmul.f32 %v5316, %v5316
    %v5445 = vmul.f32 %v5317, %v5317
    %v5446 = vmul.f32 %v5318, %v5318
    %v5447 = vmul.f32 %v5319, %v5319
    %v5448 = vmul.f32 %v5320, %v5320
    %v5449 = vmul.f32 %v5321, %v5321
    %v5450 = vmul.f32 %v5322, %v5322
    %v5451 = vmul.f32 %v5323, %v5323
    %v5452 = vmul.f32 %v5324, %v5324
    %v5453 = vmul.f32 %v5325, %v5325
    %v5454 = vmul.f32 %v5326, %v5326
    %v5455 = vmul.f32 %v5327, %v5327
    %v5456 = vmul.f32 %v5328, %v5328
    %v5457 = vmul.f32 %v5329, %v5329
    %v5458 = vmul.f32 %v5330, %v5330
    %v5459 = vmul.f32 %v5331, %v5331
    %v5460 = vmul.f32 %v5332, %v5332
    %v5461 = vmul.f32 %v5333, %v5333
    %v5462 = vmul.f32 %v5334, %v5334
    %v5463 = vmul.f32 %v5335, %v5335
    %v5464 = vmul.f32 %v5336, %v5336
    %v5465 = vmul.f32 %v5337, %v5337
    %v5466 = vmul.f32 %v5338, %v5338
    %v5467 = vmul.f32 %v5339, %v5339
    %v5468 = vmul.f32 %v5340, %v5340
    %v5469 = vmul.f32 %v5341, %v5341
    %v5470 = vmul.f32 %v5342, %v5342
    %v5471 = vmul.f32 %v5343, %v5343
    %v5472 = vmul.f32 %v5344, %v5344
    %v5473 = vmul.f32 %v5345, %v5345
    %v5474 = vmul.f32 %v5346, %v5346
    %v5475 = vmul.f32 %v5347, %v5347
    %v5476 = vmul.f32 %v5348, %v5348
    %v5477 = vmul.f32 %v5349, %v5349
    %v5478 = vmul.f32 %v5350, %v5350
    %v5479 = vmul.f32 %v5351, %v5351
    %v5480 = vmul.f32 %v5352, %v5352
    %v5481 = vmul.f32 %v5353, %v5353
    %v5482 = vmul.f32 %v5354, %v5354
    %v5483 = vmul.f32 %v5355, %v5355
    %v5484 = vmul.f32 %v5356, %v5356
    %v5485 = vmul.f32 %v5357, %v5357
    %v5486 = vadd.f32 %v5358, %v5359
    %v5487 = vadd.f32 %v5486, %v5360
    %v5488 = vadd.f32 %v5487, %v5361
    %5489 = vadd.xlane.f32.xlu0 %v5488
    %v5490 = vpop.xlane.xlu0 %5489
    %v5491 = vadd.f32 %v5362, %v5363
    %v5492 = vadd.f32 %v5491, %v5364
    %v5493 = vadd.f32 %v5492, %v5365
    %5494 = vadd.xlane.f32.xlu0 %v5493
    %v5495 = vpop.xlane.xlu0 %5494
    %v5496 = vadd.f32 %v5366, %v5367
    %v5497 = vadd.f32 %v5496, %v5368
    %v5498 = vadd.f32 %v5497, %v5369
    %5499 = vadd.xlane.f32.xlu0 %v5498
    %v5500 = vpop.xlane.xlu0 %5499
    %v5501 = vadd.f32 %v5370, %v5371
    %v5502 = vadd.f32 %v5501, %v5372
    %v5503 = vadd.f32 %v5502, %v5373
    %5504 = vadd.xlane.f32.xlu0 %v5503
    %v5505 = vpop.xlane.xlu0 %5504
    %v5506 = vadd.f32 %v5374, %v5375
    %v5507 = vadd.f32 %v5506, %v5376
    %v5508 = vadd.f32 %v5507, %v5377
    %5509 = vadd.xlane.f32.xlu0 %v5508
    %v5510 = vpop.xlane.xlu0 %5509
    %v5511 = vadd.f32 %v5378, %v5379
    %v5512 = vadd.f32 %v5511, %v5380
    %v5513 = vadd.f32 %v5512, %v5381
    %5514 = vadd.xlane.f32.xlu0 %v5513
    %v5515 = vpop.xlane.xlu0 %5514
    %v5516 = vadd.f32 %v5382, %v5383
    %v5517 = vadd.f32 %v5516, %v5384
    %v5518 = vadd.f32 %v5517, %v5385
    %5519 = vadd.xlane.f32.xlu0 %v5518
    %v5520 = vpop.xlane.xlu0 %5519
    %v5521 = vadd.f32 %v5386, %v5387
    %v5522 = vadd.f32 %v5521, %v5388
    %v5523 = vadd.f32 %v5522, %v5389
    %5524 = vadd.xlane.f32.xlu0 %v5523
    %v5525 = vpop.xlane.xlu0 %5524
    %v5526 = vadd.f32 %v5390, %v5391
    %v5527 = vadd.f32 %v5526, %v5392
    %v5528 = vadd.f32 %v5527, %v5393
    %5529 = vadd.xlane.f32.xlu0 %v5528
    %v5530 = vpop.xlane.xlu0 %5529
    %v5531 = vadd.f32 %v5394, %v5395
    %v5532 = vadd.f32 %v5531, %v5396
    %v5533 = vadd.f32 %v5532, %v5397
    %5534 = vadd.xlane.f32.xlu0 %v5533
    %v5535 = vpop.xlane.xlu0 %5534
    %v5536 = vadd.f32 %v5398, %v5399
    %v5537 = vadd.f32 %v5536, %v5400
    %v5538 = vadd.f32 %v5537, %v5401
    %5539 = vadd.xlane.f32.xlu0 %v5538
    %v5540 = vpop.xlane.xlu0 %5539
    %v5541 = vadd.f32 %v5402, %v5403
    %v5542 = vadd.f32 %v5541, %v5404
    %v5543 = vadd.f32 %v5542, %v5405
    %5544 = vadd.xlane.f32.xlu0 %v5543
    %v5545 = vpop.xlane.xlu0 %5544
    %v5546 = vadd.f32 %v5406, %v5407
    %v5547 = vadd.f32 %v5546, %v5408
    %v5548 = vadd.f32 %v5547, %v5409
    %5549 = vadd.xlane.f32.xlu0 %v5548
    %v5550 = vpop.xlane.xlu0 %5549
    %v5551 = vadd.f32 %v5410, %v5411
    %v5552 = vadd.f32 %v5551, %v5412
    %v5553 = vadd.f32 %v5552, %v5413
    %5554 = vadd.xlane.f32.xlu0 %v5553
    %v5555 = vpop.xlane.xlu0 %5554
    %v5556 = vadd.f32 %v5414, %v5415
    %v5557 = vadd.f32 %v5556, %v5416
    %v5558 = vadd.f32 %v5557, %v5417
    %5559 = vadd.xlane.f32.xlu0 %v5558
    %v5560 = vpop.xlane.xlu0 %5559
    %v5561 = vadd.f32 %v5418, %v5419
    %v5562 = vadd.f32 %v5561, %v5420
    %v5563 = vadd.f32 %v5562, %v5421
    %5564 = vadd.xlane.f32.xlu0 %v5563
    %v5565 = vpop.xlane.xlu0 %5564
    %v5566 = vadd.f32 %v5422, %v5423
    %v5567 = vadd.f32 %v5566, %v5424
    %v5568 = vadd.f32 %v5567, %v5425
    %5569 = vadd.xlane.f32.xlu0 %v5568
    %v5570 = vpop.xlane.xlu0 %5569
    %v5571 = vadd.f32 %v5426, %v5427
    %v5572 = vadd.f32 %v5571, %v5428
    %v5573 = vadd.f32 %v5572, %v5429
    %5574 = vadd.xlane.f32.xlu0 %v5573
    %v5575 = vpop.xlane.xlu0 %5574
    %v5576 = vadd.f32 %v5430, %v5431
    %v5577 = vadd.f32 %v5576, %v5432
    %v5578 = vadd.f32 %v5577, %v5433
    %5579 = vadd.xlane.f32.xlu0 %v5578
    %v5580 = vpop.xlane.xlu0 %5579
    %v5581 = vadd.f32 %v5434, %v5435
    %v5582 = vadd.f32 %v5581, %v5436
    %v5583 = vadd.f32 %v5582, %v5437
    %5584 = vadd.xlane.f32.xlu0 %v5583
    %v5585 = vpop.xlane.xlu0 %5584
    %v5586 = vadd.f32 %v5438, %v5439
    %v5587 = vadd.f32 %v5586, %v5440
    %v5588 = vadd.f32 %v5587, %v5441
    %5589 = vadd.xlane.f32.xlu0 %v5588
    %v5590 = vpop.xlane.xlu0 %5589
    %v5591 = vadd.f32 %v5442, %v5443
    %v5592 = vadd.f32 %v5591, %v5444
    %v5593 = vadd.f32 %v5592, %v5445
    %5594 = vadd.xlane.f32.xlu0 %v5593
    %v5595 = vpop.xlane.xlu0 %5594
    %v5596 = vadd.f32 %v5446, %v5447
    %v5597 = vadd.f32 %v5596, %v5448
    %v5598 = vadd.f32 %v5597, %v5449
    %5599 = vadd.xlane.f32.xlu0 %v5598
    %v5600 = vpop.xlane.xlu0 %5599
    %v5601 = vadd.f32 %v5450, %v5451
    %v5602 = vadd.f32 %v5601, %v5452
    %v5603 = vadd.f32 %v5602, %v5453
    %5604 = vadd.xlane.f32.xlu0 %v5603
    %v5605 = vpop.xlane.xlu0 %5604
    %v5606 = vadd.f32 %v5454, %v5455
    %v5607 = vadd.f32 %v5606, %v5456
    %v5608 = vadd.f32 %v5607, %v5457
    %5609 = vadd.xlane.f32.xlu0 %v5608
    %v5610 = vpop.xlane.xlu0 %5609
    %v5611 = vadd.f32 %v5458, %v5459
    %v5612 = vadd.f32 %v5611, %v5460
    %v5613 = vadd.f32 %v5612, %v5461
    %5614 = vadd.xlane.f32.xlu0 %v5613
    %v5615 = vpop.xlane.xlu0 %5614
    %v5616 = vadd.f32 %v5462, %v5463
    %v5617 = vadd.f32 %v5616, %v5464
    %v5618 = vadd.f32 %v5617, %v5465
    %5619 = vadd.xlane.f32.xlu0 %v5618
    %v5620 = vpop.xlane.xlu0 %5619
    %v5621 = vadd.f32 %v5466, %v5467
    %v5622 = vadd.f32 %v5621, %v5468
    %v5623 = vadd.f32 %v5622, %v5469
    %5624 = vadd.xlane.f32.xlu0 %v5623
    %v5625 = vpop.xlane.xlu0 %5624
    %v5626 = vadd.f32 %v5470, %v5471
    %v5627 = vadd.f32 %v5626, %v5472
    %v5628 = vadd.f32 %v5627, %v5473
    %5629 = vadd.xlane.f32.xlu0 %v5628
    %v5630 = vpop.xlane.xlu0 %5629
    %v5631 = vadd.f32 %v5474, %v5475
    %v5632 = vadd.f32 %v5631, %v5476
    %v5633 = vadd.f32 %v5632, %v5477
    %5634 = vadd.xlane.f32.xlu0 %v5633
    %v5635 = vpop.xlane.xlu0 %5634
    %v5636 = vadd.f32 %v5478, %v5479
    %v5637 = vadd.f32 %v5636, %v5480
    %v5638 = vadd.f32 %v5637, %v5481
    %5639 = vadd.xlane.f32.xlu0 %v5638
    %v5640 = vpop.xlane.xlu0 %5639
    %v5641 = vadd.f32 %v5482, %v5483
    %v5642 = vadd.f32 %v5641, %v5484
    %v5643 = vadd.f32 %v5642, %v5485
    %5644 = vadd.xlane.f32.xlu0 %v5643
    %v5645 = vpop.xlane.xlu0 %5644
    %v5646 = vmul.f32 %v5490, %v5197
    %v5647 = vmul.f32 %v5495, %v5197
    %v5648 = vmul.f32 %v5500, %v5197
    %v5649 = vmul.f32 %v5505, %v5197
    %v5650 = vmul.f32 %v5510, %v5197
    %v5651 = vmul.f32 %v5515, %v5197
    %v5652 = vmul.f32 %v5520, %v5197
    %v5653 = vmul.f32 %v5525, %v5197
    %v5654 = vmul.f32 %v5530, %v5197
    %v5655 = vmul.f32 %v5535, %v5197
    %v5656 = vmul.f32 %v5540, %v5197
    %v5657 = vmul.f32 %v5545, %v5197
    %v5658 = vmul.f32 %v5550, %v5197
    %v5659 = vmul.f32 %v5555, %v5197
    %v5660 = vmul.f32 %v5560, %v5197
    %v5661 = vmul.f32 %v5565, %v5197
    %v5662 = vmul.f32 %v5570, %v5197
    %v5663 = vmul.f32 %v5575, %v5197
    %v5664 = vmul.f32 %v5580, %v5197
    %v5665 = vmul.f32 %v5585, %v5197
    %v5666 = vmul.f32 %v5590, %v5197
    %v5667 = vmul.f32 %v5595, %v5197
    %v5668 = vmul.f32 %v5600, %v5197
    %v5669 = vmul.f32 %v5605, %v5197
    %v5670 = vmul.f32 %v5610, %v5197
    %v5671 = vmul.f32 %v5615, %v5197
    %v5672 = vmul.f32 %v5620, %v5197
    %v5673 = vmul.f32 %v5625, %v5197
    %v5674 = vmul.f32 %v5630, %v5197
    %v5675 = vmul.f32 %v5635, %v5197
    %v5676 = vmul.f32 %v5640, %v5197
    %v5677 = vmul.f32 %v5645, %v5197
    %v5678 = vadd.f32 %v5646, 1e-05
    %v5679 = vadd.f32 %v5647, 1e-05
    %v5680 = vadd.f32 %v5648, 1e-05
    %v5681 = vadd.f32 %v5649, 1e-05
    %v5682 = vadd.f32 %v5650, 1e-05
    %v5683 = vadd.f32 %v5651, 1e-05
    %v5684 = vadd.f32 %v5652, 1e-05
    %v5685 = vadd.f32 %v5653, 1e-05
    %v5686 = vadd.f32 %v5654, 1e-05
    %v5687 = vadd.f32 %v5655, 1e-05
    %v5688 = vadd.f32 %v5656, 1e-05
    %v5689 = vadd.f32 %v5657, 1e-05
    %v5690 = vadd.f32 %v5658, 1e-05
    %v5691 = vadd.f32 %v5659, 1e-05
    %v5692 = vadd.f32 %v5660, 1e-05
    %v5693 = vadd.f32 %v5661, 1e-05
    %v5694 = vadd.f32 %v5662, 1e-05
    %v5695 = vadd.f32 %v5663, 1e-05
    %v5696 = vadd.f32 %v5664, 1e-05
    %v5697 = vadd.f32 %v5665, 1e-05
    %v5698 = vadd.f32 %v5666, 1e-05
    %v5699 = vadd.f32 %v5667, 1e-05
    %v5700 = vadd.f32 %v5668, 1e-05
    %v5701 = vadd.f32 %v5669, 1e-05
    %v5702 = vadd.f32 %v5670, 1e-05
    %v5703 = vadd.f32 %v5671, 1e-05
    %v5704 = vadd.f32 %v5672, 1e-05
    %v5705 = vadd.f32 %v5673, 1e-05
    %v5706 = vadd.f32 %v5674, 1e-05
    %v5707 = vadd.f32 %v5675, 1e-05
    %v5708 = vadd.f32 %v5676, 1e-05
    %v5709 = vadd.f32 %v5677, 1e-05
    %v5710 = vrsqrt.pop %v5678
    %v5711 = vmul.f32 %v5710, %v5678
    %v5712 = vmul.f32 %v5711, %v5710
    %v5713 = vmul.f32 0.5, %v5712
    %v5714 = vsub.f32 1.5, %v5713
    %v5715 = vmul.f32 %v5710, %v5714
    %vm5716 = vweird.f32 %v5678
    %vm5717 = vweird.f32 %v5710
    %vm5718 = vmor %vm5716, %vm5717
    %v5719 = vsel %vm5718, %v5710, %v5715
    %v5720 = vrsqrt.pop %v5679
    %v5721 = vmul.f32 %v5720, %v5679
    %v5722 = vmul.f32 %v5721, %v5720
    %v5723 = vmul.f32 0.5, %v5722
    %v5724 = vsub.f32 1.5, %v5723
    %v5725 = vmul.f32 %v5720, %v5724
    %vm5726 = vweird.f32 %v5679
    %vm5727 = vweird.f32 %v5720
    %vm5728 = vmor %vm5726, %vm5727
    %v5729 = vsel %vm5728, %v5720, %v5725
    %v5730 = vrsqrt.pop %v5680
    %v5731 = vmul.f32 %v5730, %v5680
    %v5732 = vmul.f32 %v5731, %v5730
    %v5733 = vmul.f32 0.5, %v5732
    %v5734 = vsub.f32 1.5, %v5733
    %v5735 = vmul.f32 %v5730, %v5734
    %vm5736 = vweird.f32 %v5680
    %vm5737 = vweird.f32 %v5730
    %vm5738 = vmor %vm5736, %vm5737
    %v5739 = vsel %vm5738, %v5730, %v5735
    %v5740 = vrsqrt.pop %v5681
    %v5741 = vmul.f32 %v5740, %v5681
    %v5742 = vmul.f32 %v5741, %v5740
    %v5743 = vmul.f32 0.5, %v5742
    %v5744 = vsub.f32 1.5, %v5743
    %v5745 = vmul.f32 %v5740, %v5744
    %vm5746 = vweird.f32 %v5681
    %vm5747 = vweird.f32 %v5740
    %vm5748 = vmor %vm5746, %vm5747
    %v5749 = vsel %vm5748, %v5740, %v5745
    %v5750 = vrsqrt.pop %v5682
    %v5751 = vmul.f32 %v5750, %v5682
    %v5752 = vmul.f32 %v5751, %v5750
    %v5753 = vmul.f32 0.5, %v5752
    %v5754 = vsub.f32 1.5, %v5753
    %v5755 = vmul.f32 %v5750, %v5754
    %vm5756 = vweird.f32 %v5682
    %vm5757 = vweird.f32 %v5750
    %vm5758 = vmor %vm5756, %vm5757
    %v5759 = vsel %vm5758, %v5750, %v5755
    %v5760 = vrsqrt.pop %v5683
    %v5761 = vmul.f32 %v5760, %v5683
    %v5762 = vmul.f32 %v5761, %v5760
    %v5763 = vmul.f32 0.5, %v5762
    %v5764 = vsub.f32 1.5, %v5763
    %v5765 = vmul.f32 %v5760, %v5764
    %vm5766 = vweird.f32 %v5683
    %vm5767 = vweird.f32 %v5760
    %vm5768 = vmor %vm5766, %vm5767
    %v5769 = vsel %vm5768, %v5760, %v5765
    %v5770 = vrsqrt.pop %v5684
    %v5771 = vmul.f32 %v5770, %v5684
    %v5772 = vmul.f32 %v5771, %v5770
    %v5773 = vmul.f32 0.5, %v5772
    %v5774 = vsub.f32 1.5, %v5773
    %v5775 = vmul.f32 %v5770, %v5774
    %vm5776 = vweird.f32 %v5684
    %vm5777 = vweird.f32 %v5770
    %vm5778 = vmor %vm5776, %vm5777
    %v5779 = vsel %vm5778, %v5770, %v5775
    %v5780 = vrsqrt.pop %v5685
    %v5781 = vmul.f32 %v5780, %v5685
    %v5782 = vmul.f32 %v5781, %v5780
    %v5783 = vmul.f32 0.5, %v5782
    %v5784 = vsub.f32 1.5, %v5783
    %v5785 = vmul.f32 %v5780, %v5784
    %vm5786 = vweird.f32 %v5685
    %vm5787 = vweird.f32 %v5780
    %vm5788 = vmor %vm5786, %vm5787
    %v5789 = vsel %vm5788, %v5780, %v5785
    %v5790 = vrsqrt.pop %v5686
    %v5791 = vmul.f32 %v5790, %v5686
    %v5792 = vmul.f32 %v5791, %v5790
    %v5793 = vmul.f32 0.5, %v5792
    %v5794 = vsub.f32 1.5, %v5793
    %v5795 = vmul.f32 %v5790, %v5794
    %vm5796 = vweird.f32 %v5686
    %vm5797 = vweird.f32 %v5790
    %vm5798 = vmor %vm5796, %vm5797
    %v5799 = vsel %vm5798, %v5790, %v5795
    %v5800 = vrsqrt.pop %v5687
    %v5801 = vmul.f32 %v5800, %v5687
    %v5802 = vmul.f32 %v5801, %v5800
    %v5803 = vmul.f32 0.5, %v5802
    %v5804 = vsub.f32 1.5, %v5803
    %v5805 = vmul.f32 %v5800, %v5804
    %vm5806 = vweird.f32 %v5687
    %vm5807 = vweird.f32 %v5800
    %vm5808 = vmor %vm5806, %vm5807
    %v5809 = vsel %vm5808, %v5800, %v5805
    %v5810 = vrsqrt.pop %v5688
    %v5811 = vmul.f32 %v5810, %v5688
    %v5812 = vmul.f32 %v5811, %v5810
    %v5813 = vmul.f32 0.5, %v5812
    %v5814 = vsub.f32 1.5, %v5813
    %v5815 = vmul.f32 %v5810, %v5814
    %vm5816 = vweird.f32 %v5688
    %vm5817 = vweird.f32 %v5810
    %vm5818 = vmor %vm5816, %vm5817
    %v5819 = vsel %vm5818, %v5810, %v5815
    %v5820 = vrsqrt.pop %v5689
    %v5821 = vmul.f32 %v5820, %v5689
    %v5822 = vmul.f32 %v5821, %v5820
    %v5823 = vmul.f32 0.5, %v5822
    %v5824 = vsub.f32 1.5, %v5823
    %v5825 = vmul.f32 %v5820, %v5824
    %vm5826 = vweird.f32 %v5689
    %vm5827 = vweird.f32 %v5820
    %vm5828 = vmor %vm5826, %vm5827
    %v5829 = vsel %vm5828, %v5820, %v5825
    %v5830 = vrsqrt.pop %v5690
    %v5831 = vmul.f32 %v5830, %v5690
    %v5832 = vmul.f32 %v5831, %v5830
    %v5833 = vmul.f32 0.5, %v5832
    %v5834 = vsub.f32 1.5, %v5833
    %v5835 = vmul.f32 %v5830, %v5834
    %vm5836 = vweird.f32 %v5690
    %vm5837 = vweird.f32 %v5830
    %vm5838 = vmor %vm5836, %vm5837
    %v5839 = vsel %vm5838, %v5830, %v5835
    %v5840 = vrsqrt.pop %v5691
    %v5841 = vmul.f32 %v5840, %v5691
    %v5842 = vmul.f32 %v5841, %v5840
    %v5843 = vmul.f32 0.5, %v5842
    %v5844 = vsub.f32 1.5, %v5843
    %v5845 = vmul.f32 %v5840, %v5844
    %vm5846 = vweird.f32 %v5691
    %vm5847 = vweird.f32 %v5840
    %vm5848 = vmor %vm5846, %vm5847
    %v5849 = vsel %vm5848, %v5840, %v5845
    %v5850 = vrsqrt.pop %v5692
    %v5851 = vmul.f32 %v5850, %v5692
    %v5852 = vmul.f32 %v5851, %v5850
    %v5853 = vmul.f32 0.5, %v5852
    %v5854 = vsub.f32 1.5, %v5853
    %v5855 = vmul.f32 %v5850, %v5854
    %vm5856 = vweird.f32 %v5692
    %vm5857 = vweird.f32 %v5850
    %vm5858 = vmor %vm5856, %vm5857
    %v5859 = vsel %vm5858, %v5850, %v5855
    %v5860 = vrsqrt.pop %v5693
    %v5861 = vmul.f32 %v5860, %v5693
    %v5862 = vmul.f32 %v5861, %v5860
    %v5863 = vmul.f32 0.5, %v5862
    %v5864 = vsub.f32 1.5, %v5863
    %v5865 = vmul.f32 %v5860, %v5864
    %vm5866 = vweird.f32 %v5693
    %vm5867 = vweird.f32 %v5860
    %vm5868 = vmor %vm5866, %vm5867
    %v5869 = vsel %vm5868, %v5860, %v5865
    %v5870 = vrsqrt.pop %v5694
    %v5871 = vmul.f32 %v5870, %v5694
    %v5872 = vmul.f32 %v5871, %v5870
    %v5873 = vmul.f32 0.5, %v5872
    %v5874 = vsub.f32 1.5, %v5873
    %v5875 = vmul.f32 %v5870, %v5874
    %vm5876 = vweird.f32 %v5694
    %vm5877 = vweird.f32 %v5870
    %vm5878 = vmor %vm5876, %vm5877
    %v5879 = vsel %vm5878, %v5870, %v5875
    %v5880 = vrsqrt.pop %v5695
    %v5881 = vmul.f32 %v5880, %v5695
    %v5882 = vmul.f32 %v5881, %v5880
    %v5883 = vmul.f32 0.5, %v5882
    %v5884 = vsub.f32 1.5, %v5883
    %v5885 = vmul.f32 %v5880, %v5884
    %vm5886 = vweird.f32 %v5695
    %vm5887 = vweird.f32 %v5880
    %vm5888 = vmor %vm5886, %vm5887
    %v5889 = vsel %vm5888, %v5880, %v5885
    %v5890 = vrsqrt.pop %v5696
    %v5891 = vmul.f32 %v5890, %v5696
    %v5892 = vmul.f32 %v5891, %v5890
    %v5893 = vmul.f32 0.5, %v5892
    %v5894 = vsub.f32 1.5, %v5893
    %v5895 = vmul.f32 %v5890, %v5894
    %vm5896 = vweird.f32 %v5696
    %vm5897 = vweird.f32 %v5890
    %vm5898 = vmor %vm5896, %vm5897
    %v5899 = vsel %vm5898, %v5890, %v5895
    %v5900 = vrsqrt.pop %v5697
    %v5901 = vmul.f32 %v5900, %v5697
    %v5902 = vmul.f32 %v5901, %v5900
    %v5903 = vmul.f32 0.5, %v5902
    %v5904 = vsub.f32 1.5, %v5903
    %v5905 = vmul.f32 %v5900, %v5904
    %vm5906 = vweird.f32 %v5697
    %vm5907 = vweird.f32 %v5900
    %vm5908 = vmor %vm5906, %vm5907
    %v5909 = vsel %vm5908, %v5900, %v5905
    %v5910 = vrsqrt.pop %v5698
    %v5911 = vmul.f32 %v5910, %v5698
    %v5912 = vmul.f32 %v5911, %v5910
    %v5913 = vmul.f32 0.5, %v5912
    %v5914 = vsub.f32 1.5, %v5913
    %v5915 = vmul.f32 %v5910, %v5914
    %vm5916 = vweird.f32 %v5698
    %vm5917 = vweird.f32 %v5910
    %vm5918 = vmor %vm5916, %vm5917
    %v5919 = vsel %vm5918, %v5910, %v5915
    %v5920 = vrsqrt.pop %v5699
    %v5921 = vmul.f32 %v5920, %v5699
    %v5922 = vmul.f32 %v5921, %v5920
    %v5923 = vmul.f32 0.5, %v5922
    %v5924 = vsub.f32 1.5, %v5923
    %v5925 = vmul.f32 %v5920, %v5924
    %vm5926 = vweird.f32 %v5699
    %vm5927 = vweird.f32 %v5920
    %vm5928 = vmor %vm5926, %vm5927
    %v5929 = vsel %vm5928, %v5920, %v5925
    %v5930 = vrsqrt.pop %v5700
    %v5931 = vmul.f32 %v5930, %v5700
    %v5932 = vmul.f32 %v5931, %v5930
    %v5933 = vmul.f32 0.5, %v5932
    %v5934 = vsub.f32 1.5, %v5933
    %v5935 = vmul.f32 %v5930, %v5934
    %vm5936 = vweird.f32 %v5700
    %vm5937 = vweird.f32 %v5930
    %vm5938 = vmor %vm5936, %vm5937
    %v5939 = vsel %vm5938, %v5930, %v5935
    %v5940 = vrsqrt.pop %v5701
    %v5941 = vmul.f32 %v5940, %v5701
    %v5942 = vmul.f32 %v5941, %v5940
    %v5943 = vmul.f32 0.5, %v5942
    %v5944 = vsub.f32 1.5, %v5943
    %v5945 = vmul.f32 %v5940, %v5944
    %vm5946 = vweird.f32 %v5701
    %vm5947 = vweird.f32 %v5940
    %vm5948 = vmor %vm5946, %vm5947
    %v5949 = vsel %vm5948, %v5940, %v5945
    %v5950 = vrsqrt.pop %v5702
    %v5951 = vmul.f32 %v5950, %v5702
    %v5952 = vmul.f32 %v5951, %v5950
    %v5953 = vmul.f32 0.5, %v5952
    %v5954 = vsub.f32 1.5, %v5953
    %v5955 = vmul.f32 %v5950, %v5954
    %vm5956 = vweird.f32 %v5702
    %vm5957 = vweird.f32 %v5950
    %vm5958 = vmor %vm5956, %vm5957
    %v5959 = vsel %vm5958, %v5950, %v5955
    %v5960 = vrsqrt.pop %v5703
    %v5961 = vmul.f32 %v5960, %v5703
    %v5962 = vmul.f32 %v5961, %v5960
    %v5963 = vmul.f32 0.5, %v5962
    %v5964 = vsub.f32 1.5, %v5963
    %v5965 = vmul.f32 %v5960, %v5964
    %vm5966 = vweird.f32 %v5703
    %vm5967 = vweird.f32 %v5960
    %vm5968 = vmor %vm5966, %vm5967
    %v5969 = vsel %vm5968, %v5960, %v5965
    %v5970 = vrsqrt.pop %v5704
    %v5971 = vmul.f32 %v5970, %v5704
    %v5972 = vmul.f32 %v5971, %v5970
    %v5973 = vmul.f32 0.5, %v5972
    %v5974 = vsub.f32 1.5, %v5973
    %v5975 = vmul.f32 %v5970, %v5974
    %vm5976 = vweird.f32 %v5704
    %vm5977 = vweird.f32 %v5970
    %vm5978 = vmor %vm5976, %vm5977
    %v5979 = vsel %vm5978, %v5970, %v5975
    %v5980 = vrsqrt.pop %v5705
    %v5981 = vmul.f32 %v5980, %v5705
    %v5982 = vmul.f32 %v5981, %v5980
    %v5983 = vmul.f32 0.5, %v5982
    %v5984 = vsub.f32 1.5, %v5983
    %v5985 = vmul.f32 %v5980, %v5984
    %vm5986 = vweird.f32 %v5705
    %vm5987 = vweird.f32 %v5980
    %vm5988 = vmor %vm5986, %vm5987
    %v5989 = vsel %vm5988, %v5980, %v5985
    %v5990 = vrsqrt.pop %v5706
    %v5991 = vmul.f32 %v5990, %v5706
    %v5992 = vmul.f32 %v5991, %v5990
    %v5993 = vmul.f32 0.5, %v5992
    %v5994 = vsub.f32 1.5, %v5993
    %v5995 = vmul.f32 %v5990, %v5994
    %vm5996 = vweird.f32 %v5706
    %vm5997 = vweird.f32 %v5990
    %vm5998 = vmor %vm5996, %vm5997
    %v5999 = vsel %vm5998, %v5990, %v5995
    %v6000 = vrsqrt.pop %v5707
    %v6001 = vmul.f32 %v6000, %v5707
    %v6002 = vmul.f32 %v6001, %v6000
    %v6003 = vmul.f32 0.5, %v6002
    %v6004 = vsub.f32 1.5, %v6003
    %v6005 = vmul.f32 %v6000, %v6004
    %vm6006 = vweird.f32 %v5707
    %vm6007 = vweird.f32 %v6000
    %vm6008 = vmor %vm6006, %vm6007
    %v6009 = vsel %vm6008, %v6000, %v6005
    %v6010 = vrsqrt.pop %v5708
    %v6011 = vmul.f32 %v6010, %v5708
    %v6012 = vmul.f32 %v6011, %v6010
    %v6013 = vmul.f32 0.5, %v6012
    %v6014 = vsub.f32 1.5, %v6013
    %v6015 = vmul.f32 %v6010, %v6014
    %vm6016 = vweird.f32 %v5708
    %vm6017 = vweird.f32 %v6010
    %vm6018 = vmor %vm6016, %vm6017
    %v6019 = vsel %vm6018, %v6010, %v6015
    %v6020 = vrsqrt.pop %v5709
    %v6021 = vmul.f32 %v6020, %v5709
    %v6022 = vmul.f32 %v6021, %v6020
    %v6023 = vmul.f32 0.5, %v6022
    %v6024 = vsub.f32 1.5, %v6023
    %v6025 = vmul.f32 %v6020, %v6024
    %vm6026 = vweird.f32 %v5709
    %vm6027 = vweird.f32 %v6020
    %vm6028 = vmor %vm6026, %vm6027
    %v6029 = vsel %vm6028, %v6020, %v6025
    %v6030 = vmul.f32 %v5230, %v5719
    %v6031 = vmul.f32 %v5231, %v5719
    %v6032 = vmul.f32 %v5232, %v5719
    %v6033 = vmul.f32 %v5233, %v5719
    %v6034 = vmul.f32 %v5234, %v5729
    %v6035 = vmul.f32 %v5235, %v5729
    %v6036 = vmul.f32 %v5236, %v5729
    %v6037 = vmul.f32 %v5237, %v5729
    %v6038 = vmul.f32 %v5238, %v5739
    %v6039 = vmul.f32 %v5239, %v5739
    %v6040 = vmul.f32 %v5240, %v5739
    %v6041 = vmul.f32 %v5241, %v5739
    %v6042 = vmul.f32 %v5242, %v5749
    %v6043 = vmul.f32 %v5243, %v5749
    %v6044 = vmul.f32 %v5244, %v5749
    %v6045 = vmul.f32 %v5245, %v5749
    %v6046 = vmul.f32 %v5246, %v5759
    %v6047 = vmul.f32 %v5247, %v5759
    %v6048 = vmul.f32 %v5248, %v5759
    %v6049 = vmul.f32 %v5249, %v5759
    %v6050 = vmul.f32 %v5250, %v5769
    %v6051 = vmul.f32 %v5251, %v5769
    %v6052 = vmul.f32 %v5252, %v5769
    %v6053 = vmul.f32 %v5253, %v5769
    %v6054 = vmul.f32 %v5254, %v5779
    %v6055 = vmul.f32 %v5255, %v5779
    %v6056 = vmul.f32 %v5256, %v5779
    %v6057 = vmul.f32 %v5257, %v5779
    %v6058 = vmul.f32 %v5258, %v5789
    %v6059 = vmul.f32 %v5259, %v5789
    %v6060 = vmul.f32 %v5260, %v5789
    %v6061 = vmul.f32 %v5261, %v5789
    %v6062 = vmul.f32 %v5262, %v5799
    %v6063 = vmul.f32 %v5263, %v5799
    %v6064 = vmul.f32 %v5264, %v5799
    %v6065 = vmul.f32 %v5265, %v5799
    %v6066 = vmul.f32 %v5266, %v5809
    %v6067 = vmul.f32 %v5267, %v5809
    %v6068 = vmul.f32 %v5268, %v5809
    %v6069 = vmul.f32 %v5269, %v5809
    %v6070 = vmul.f32 %v5270, %v5819
    %v6071 = vmul.f32 %v5271, %v5819
    %v6072 = vmul.f32 %v5272, %v5819
    %v6073 = vmul.f32 %v5273, %v5819
    %v6074 = vmul.f32 %v5274, %v5829
    %v6075 = vmul.f32 %v5275, %v5829
    %v6076 = vmul.f32 %v5276, %v5829
    %v6077 = vmul.f32 %v5277, %v5829
    %v6078 = vmul.f32 %v5278, %v5839
    %v6079 = vmul.f32 %v5279, %v5839
    %v6080 = vmul.f32 %v5280, %v5839
    %v6081 = vmul.f32 %v5281, %v5839
    %v6082 = vmul.f32 %v5282, %v5849
    %v6083 = vmul.f32 %v5283, %v5849
    %v6084 = vmul.f32 %v5284, %v5849
    %v6085 = vmul.f32 %v5285, %v5849
    %v6086 = vmul.f32 %v5286, %v5859
    %v6087 = vmul.f32 %v5287, %v5859
    %v6088 = vmul.f32 %v5288, %v5859
    %v6089 = vmul.f32 %v5289, %v5859
    %v6090 = vmul.f32 %v5290, %v5869
    %v6091 = vmul.f32 %v5291, %v5869
    %v6092 = vmul.f32 %v5292, %v5869
    %v6093 = vmul.f32 %v5293, %v5869
    %v6094 = vmul.f32 %v5294, %v5879
    %v6095 = vmul.f32 %v5295, %v5879
    %v6096 = vmul.f32 %v5296, %v5879
    %v6097 = vmul.f32 %v5297, %v5879
    %v6098 = vmul.f32 %v5298, %v5889
    %v6099 = vmul.f32 %v5299, %v5889
    %v6100 = vmul.f32 %v5300, %v5889
    %v6101 = vmul.f32 %v5301, %v5889
    %v6102 = vmul.f32 %v5302, %v5899
    %v6103 = vmul.f32 %v5303, %v5899
    %v6104 = vmul.f32 %v5304, %v5899
    %v6105 = vmul.f32 %v5305, %v5899
    %v6106 = vmul.f32 %v5306, %v5909
    %v6107 = vmul.f32 %v5307, %v5909
    %v6108 = vmul.f32 %v5308, %v5909
    %v6109 = vmul.f32 %v5309, %v5909
    %v6110 = vmul.f32 %v5310, %v5919
    %v6111 = vmul.f32 %v5311, %v5919
    %v6112 = vmul.f32 %v5312, %v5919
    %v6113 = vmul.f32 %v5313, %v5919
    %v6114 = vmul.f32 %v5314, %v5929
    %v6115 = vmul.f32 %v5315, %v5929
    %v6116 = vmul.f32 %v5316, %v5929
    %v6117 = vmul.f32 %v5317, %v5929
    %v6118 = vmul.f32 %v5318, %v5939
    %v6119 = vmul.f32 %v5319, %v5939
    %v6120 = vmul.f32 %v5320, %v5939
    %v6121 = vmul.f32 %v5321, %v5939
    %v6122 = vmul.f32 %v5322, %v5949
    %v6123 = vmul.f32 %v5323, %v5949
    %v6124 = vmul.f32 %v5324, %v5949
    %v6125 = vmul.f32 %v5325, %v5949
    %v6126 = vmul.f32 %v5326, %v5959
    %v6127 = vmul.f32 %v5327, %v5959
    %v6128 = vmul.f32 %v5328, %v5959
    %v6129 = vmul.f32 %v5329, %v5959
    %v6130 = vmul.f32 %v5330, %v5969
    %v6131 = vmul.f32 %v5331, %v5969
    %v6132 = vmul.f32 %v5332, %v5969
    %v6133 = vmul.f32 %v5333, %v5969
    %v6134 = vmul.f32 %v5334, %v5979
    %v6135 = vmul.f32 %v5335, %v5979
    %v6136 = vmul.f32 %v5336, %v5979
    %v6137 = vmul.f32 %v5337, %v5979
    %v6138 = vmul.f32 %v5338, %v5989
    %v6139 = vmul.f32 %v5339, %v5989
    %v6140 = vmul.f32 %v5340, %v5989
    %v6141 = vmul.f32 %v5341, %v5989
    %v6142 = vmul.f32 %v5342, %v5999
    %v6143 = vmul.f32 %v5343, %v5999
    %v6144 = vmul.f32 %v5344, %v5999
    %v6145 = vmul.f32 %v5345, %v5999
    %v6146 = vmul.f32 %v5346, %v6009
    %v6147 = vmul.f32 %v5347, %v6009
    %v6148 = vmul.f32 %v5348, %v6009
    %v6149 = vmul.f32 %v5349, %v6009
    %v6150 = vmul.f32 %v5350, %v6019
    %v6151 = vmul.f32 %v5351, %v6019
    %v6152 = vmul.f32 %v5352, %v6019
    %v6153 = vmul.f32 %v5353, %v6019
    %v6154 = vmul.f32 %v5354, %v6029
    %v6155 = vmul.f32 %v5355, %v6029
    %v6156 = vmul.f32 %v5356, %v6029
    %v6157 = vmul.f32 %v5357, %v6029
    %v6158 = vld [vmem:[%s5] sm:$0xf]
    %v6160 = vperm.slane %v6158, 0
    %v6161 = vperm.slane %v6158, 1
    %v6162 = vperm.slane %v6158, 2
    %v6163 = vperm.slane %v6158, 3
    %v6168 = vmul.f32 %v6030, %v6160
    %v6169 = vmul.f32 %v6031, %v6161
    %v6170 = vmul.f32 %v6032, %v6162
    %v6171 = vmul.f32 %v6033, %v6163
    %v6172 = vmul.f32 %v6034, %v6160
    %v6173 = vmul.f32 %v6035, %v6161
    %v6174 = vmul.f32 %v6036, %v6162
    %v6175 = vmul.f32 %v6037, %v6163
    %v6176 = vmul.f32 %v6038, %v6160
    %v6177 = vmul.f32 %v6039, %v6161
    %v6178 = vmul.f32 %v6040, %v6162
    %v6179 = vmul.f32 %v6041, %v6163
    %v6180 = vmul.f32 %v6042, %v6160
    %v6181 = vmul.f32 %v6043, %v6161
    %v6182 = vmul.f32 %v6044, %v6162
    %v6183 = vmul.f32 %v6045, %v6163
    %v6184 = vmul.f32 %v6046, %v6160
    %v6185 = vmul.f32 %v6047, %v6161
    %v6186 = vmul.f32 %v6048, %v6162
    %v6187 = vmul.f32 %v6049, %v6163
    %v6188 = vmul.f32 %v6050, %v6160
    %v6189 = vmul.f32 %v6051, %v6161
    %v6190 = vmul.f32 %v6052, %v6162
    %v6191 = vmul.f32 %v6053, %v6163
    %v6192 = vmul.f32 %v6054, %v6160
    %v6193 = vmul.f32 %v6055, %v6161
    %v6194 = vmul.f32 %v6056, %v6162
    %v6195 = vmul.f32 %v6057, %v6163
    %v6196 = vmul.f32 %v6058, %v6160
    %v6197 = vmul.f32 %v6059, %v6161
    %v6198 = vmul.f32 %v6060, %v6162
    %v6199 = vmul.f32 %v6061, %v6163
    %v6200 = vmul.f32 %v6062, %v6160
    %v6201 = vmul.f32 %v6063, %v6161
    %v6202 = vmul.f32 %v6064, %v6162
    %v6203 = vmul.f32 %v6065, %v6163
    %v6204 = vmul.f32 %v6066, %v6160
    %v6205 = vmul.f32 %v6067, %v6161
    %v6206 = vmul.f32 %v6068, %v6162
    %v6207 = vmul.f32 %v6069, %v6163
    %v6208 = vmul.f32 %v6070, %v6160
    %v6209 = vmul.f32 %v6071, %v6161
    %v6210 = vmul.f32 %v6072, %v6162
    %v6211 = vmul.f32 %v6073, %v6163
    %v6212 = vmul.f32 %v6074, %v6160
    %v6213 = vmul.f32 %v6075, %v6161
    %v6214 = vmul.f32 %v6076, %v6162
    %v6215 = vmul.f32 %v6077, %v6163
    %v6216 = vmul.f32 %v6078, %v6160
    %v6217 = vmul.f32 %v6079, %v6161
    %v6218 = vmul.f32 %v6080, %v6162
    %v6219 = vmul.f32 %v6081, %v6163
    %v6220 = vmul.f32 %v6082, %v6160
    %v6221 = vmul.f32 %v6083, %v6161
    %v6222 = vmul.f32 %v6084, %v6162
    %v6223 = vmul.f32 %v6085, %v6163
    %v6224 = vmul.f32 %v6086, %v6160
    %v6225 = vmul.f32 %v6087, %v6161
    %v6226 = vmul.f32 %v6088, %v6162
    %v6227 = vmul.f32 %v6089, %v6163
    %v6228 = vmul.f32 %v6090, %v6160
    %v6229 = vmul.f32 %v6091, %v6161
    %v6230 = vmul.f32 %v6092, %v6162
    %v6231 = vmul.f32 %v6093, %v6163
    %v6232 = vmul.f32 %v6094, %v6160
    %v6233 = vmul.f32 %v6095, %v6161
    %v6234 = vmul.f32 %v6096, %v6162
    %v6235 = vmul.f32 %v6097, %v6163
    %v6236 = vmul.f32 %v6098, %v6160
    %v6237 = vmul.f32 %v6099, %v6161
    %v6238 = vmul.f32 %v6100, %v6162
    %v6239 = vmul.f32 %v6101, %v6163
    %v6240 = vmul.f32 %v6102, %v6160
    %v6241 = vmul.f32 %v6103, %v6161
    %v6242 = vmul.f32 %v6104, %v6162
    %v6243 = vmul.f32 %v6105, %v6163
    %v6244 = vmul.f32 %v6106, %v6160
    %v6245 = vmul.f32 %v6107, %v6161
    %v6246 = vmul.f32 %v6108, %v6162
    %v6247 = vmul.f32 %v6109, %v6163
    %v6248 = vmul.f32 %v6110, %v6160
    %v6249 = vmul.f32 %v6111, %v6161
    %v6250 = vmul.f32 %v6112, %v6162
    %v6251 = vmul.f32 %v6113, %v6163
    %v6252 = vmul.f32 %v6114, %v6160
    %v6253 = vmul.f32 %v6115, %v6161
    %v6254 = vmul.f32 %v6116, %v6162
    %v6255 = vmul.f32 %v6117, %v6163
    %v6256 = vmul.f32 %v6118, %v6160
    %v6257 = vmul.f32 %v6119, %v6161
    %v6258 = vmul.f32 %v6120, %v6162
    %v6259 = vmul.f32 %v6121, %v6163
    %v6260 = vmul.f32 %v6122, %v6160
    %v6261 = vmul.f32 %v6123, %v6161
    %v6262 = vmul.f32 %v6124, %v6162
    %v6263 = vmul.f32 %v6125, %v6163
    %v6264 = vmul.f32 %v6126, %v6160
    %v6265 = vmul.f32 %v6127, %v6161
    %v6266 = vmul.f32 %v6128, %v6162
    %v6267 = vmul.f32 %v6129, %v6163
    %v6268 = vmul.f32 %v6130, %v6160
    %v6269 = vmul.f32 %v6131, %v6161
    %v6270 = vmul.f32 %v6132, %v6162
    %v6271 = vmul.f32 %v6133, %v6163
    %v6272 = vmul.f32 %v6134, %v6160
    %v6273 = vmul.f32 %v6135, %v6161
    %v6274 = vmul.f32 %v6136, %v6162
    %v6275 = vmul.f32 %v6137, %v6163
    %v6276 = vmul.f32 %v6138, %v6160
    %v6277 = vmul.f32 %v6139, %v6161
    %v6278 = vmul.f32 %v6140, %v6162
    %v6279 = vmul.f32 %v6141, %v6163
    %v6280 = vmul.f32 %v6142, %v6160
    %v6281 = vmul.f32 %v6143, %v6161
    %v6282 = vmul.f32 %v6144, %v6162
    %v6283 = vmul.f32 %v6145, %v6163
    %v6284 = vmul.f32 %v6146, %v6160
    %v6285 = vmul.f32 %v6147, %v6161
    %v6286 = vmul.f32 %v6148, %v6162
    %v6287 = vmul.f32 %v6149, %v6163
    %v6288 = vmul.f32 %v6150, %v6160
    %v6289 = vmul.f32 %v6151, %v6161
    %v6290 = vmul.f32 %v6152, %v6162
    %v6291 = vmul.f32 %v6153, %v6163
    %v6292 = vmul.f32 %v6154, %v6160
    %v6293 = vmul.f32 %v6155, %v6161
    %v6294 = vmul.f32 %v6156, %v6162
    %v6295 = vmul.f32 %v6157, %v6163
    %v6296 = vld [vmem:[#allocation11] sm:$0xf]
    %v6298 = vperm.slane %v6296, 0
    %v6299 = vperm.slane %v6296, 1
    %v6300 = vperm.slane %v6296, 2
    %v6301 = vperm.slane %v6296, 3
    %v6306 = vadd.f32 %v6168, %v6298
    %v6307 = vadd.f32 %v6169, %v6299
    %v6308 = vadd.f32 %v6170, %v6300
    %v6309 = vadd.f32 %v6171, %v6301
    %v6310 = vadd.f32 %v6172, %v6298
    %v6311 = vadd.f32 %v6173, %v6299
    %v6312 = vadd.f32 %v6174, %v6300
    %v6313 = vadd.f32 %v6175, %v6301
    %v6314 = vadd.f32 %v6176, %v6298
    %v6315 = vadd.f32 %v6177, %v6299
    %v6316 = vadd.f32 %v6178, %v6300
    %v6317 = vadd.f32 %v6179, %v6301
    %v6318 = vadd.f32 %v6180, %v6298
    %v6319 = vadd.f32 %v6181, %v6299
    %v6320 = vadd.f32 %v6182, %v6300
    %v6321 = vadd.f32 %v6183, %v6301
    %v6322 = vadd.f32 %v6184, %v6298
    %v6323 = vadd.f32 %v6185, %v6299
    %v6324 = vadd.f32 %v6186, %v6300
    %v6325 = vadd.f32 %v6187, %v6301
    %v6326 = vadd.f32 %v6188, %v6298
    %v6327 = vadd.f32 %v6189, %v6299
    %v6328 = vadd.f32 %v6190, %v6300
    %v6329 = vadd.f32 %v6191, %v6301
    %v6330 = vadd.f32 %v6192, %v6298
    %v6331 = vadd.f32 %v6193, %v6299
    %v6332 = vadd.f32 %v6194, %v6300
    %v6333 = vadd.f32 %v6195, %v6301
    %v6334 = vadd.f32 %v6196, %v6298
    %v6335 = vadd.f32 %v6197, %v6299
    %v6336 = vadd.f32 %v6198, %v6300
    %v6337 = vadd.f32 %v6199, %v6301
    %v6338 = vadd.f32 %v6200, %v6298
    %v6339 = vadd.f32 %v6201, %v6299
    %v6340 = vadd.f32 %v6202, %v6300
    %v6341 = vadd.f32 %v6203, %v6301
    %v6342 = vadd.f32 %v6204, %v6298
    %v6343 = vadd.f32 %v6205, %v6299
    %v6344 = vadd.f32 %v6206, %v6300
    %v6345 = vadd.f32 %v6207, %v6301
    %v6346 = vadd.f32 %v6208, %v6298
    %v6347 = vadd.f32 %v6209, %v6299
    %v6348 = vadd.f32 %v6210, %v6300
    %v6349 = vadd.f32 %v6211, %v6301
    %v6350 = vadd.f32 %v6212, %v6298
    %v6351 = vadd.f32 %v6213, %v6299
    %v6352 = vadd.f32 %v6214, %v6300
    %v6353 = vadd.f32 %v6215, %v6301
    %v6354 = vadd.f32 %v6216, %v6298
    %v6355 = vadd.f32 %v6217, %v6299
    %v6356 = vadd.f32 %v6218, %v6300
    %v6357 = vadd.f32 %v6219, %v6301
    %v6358 = vadd.f32 %v6220, %v6298
    %v6359 = vadd.f32 %v6221, %v6299
    %v6360 = vadd.f32 %v6222, %v6300
    %v6361 = vadd.f32 %v6223, %v6301
    %v6362 = vadd.f32 %v6224, %v6298
    %v6363 = vadd.f32 %v6225, %v6299
    %v6364 = vadd.f32 %v6226, %v6300
    %v6365 = vadd.f32 %v6227, %v6301
    %v6366 = vadd.f32 %v6228, %v6298
    %v6367 = vadd.f32 %v6229, %v6299
    %v6368 = vadd.f32 %v6230, %v6300
    %v6369 = vadd.f32 %v6231, %v6301
    %v6370 = vadd.f32 %v6232, %v6298
    %v6371 = vadd.f32 %v6233, %v6299
    %v6372 = vadd.f32 %v6234, %v6300
    %v6373 = vadd.f32 %v6235, %v6301
    %v6374 = vadd.f32 %v6236, %v6298
    %v6375 = vadd.f32 %v6237, %v6299
    %v6376 = vadd.f32 %v6238, %v6300
    %v6377 = vadd.f32 %v6239, %v6301
    %v6378 = vadd.f32 %v6240, %v6298
    %v6379 = vadd.f32 %v6241, %v6299
    %v6380 = vadd.f32 %v6242, %v6300
    %v6381 = vadd.f32 %v6243, %v6301
    %v6382 = vadd.f32 %v6244, %v6298
    %v6383 = vadd.f32 %v6245, %v6299
    %v6384 = vadd.f32 %v6246, %v6300
    %v6385 = vadd.f32 %v6247, %v6301
    %v6386 = vadd.f32 %v6248, %v6298
    %v6387 = vadd.f32 %v6249, %v6299
    %v6388 = vadd.f32 %v6250, %v6300
    %v6389 = vadd.f32 %v6251, %v6301
    %v6390 = vadd.f32 %v6252, %v6298
    %v6391 = vadd.f32 %v6253, %v6299
    %v6392 = vadd.f32 %v6254, %v6300
    %v6393 = vadd.f32 %v6255, %v6301
    %v6394 = vadd.f32 %v6256, %v6298
    %v6395 = vadd.f32 %v6257, %v6299
    %v6396 = vadd.f32 %v6258, %v6300
    %v6397 = vadd.f32 %v6259, %v6301
    %v6398 = vadd.f32 %v6260, %v6298
    %v6399 = vadd.f32 %v6261, %v6299
    %v6400 = vadd.f32 %v6262, %v6300
    %v6401 = vadd.f32 %v6263, %v6301
    %v6402 = vadd.f32 %v6264, %v6298
    %v6403 = vadd.f32 %v6265, %v6299
    %v6404 = vadd.f32 %v6266, %v6300
    %v6405 = vadd.f32 %v6267, %v6301
    %v6406 = vadd.f32 %v6268, %v6298
    %v6407 = vadd.f32 %v6269, %v6299
    %v6408 = vadd.f32 %v6270, %v6300
    %v6409 = vadd.f32 %v6271, %v6301
    %v6410 = vadd.f32 %v6272, %v6298
    %v6411 = vadd.f32 %v6273, %v6299
    %v6412 = vadd.f32 %v6274, %v6300
    %v6413 = vadd.f32 %v6275, %v6301
    %v6414 = vadd.f32 %v6276, %v6298
    %v6415 = vadd.f32 %v6277, %v6299
    %v6416 = vadd.f32 %v6278, %v6300
    %v6417 = vadd.f32 %v6279, %v6301
    %v6418 = vadd.f32 %v6280, %v6298
    %v6419 = vadd.f32 %v6281, %v6299
    %v6420 = vadd.f32 %v6282, %v6300
    %v6421 = vadd.f32 %v6283, %v6301
    %v6422 = vadd.f32 %v6284, %v6298
    %v6423 = vadd.f32 %v6285, %v6299
    %v6424 = vadd.f32 %v6286, %v6300
    %v6425 = vadd.f32 %v6287, %v6301
    %v6426 = vadd.f32 %v6288, %v6298
    %v6427 = vadd.f32 %v6289, %v6299
    %v6428 = vadd.f32 %v6290, %v6300
    %v6429 = vadd.f32 %v6291, %v6301
    %v6430 = vadd.f32 %v6292, %v6298
    %v6431 = vadd.f32 %v6293, %v6299
    %v6432 = vadd.f32 %v6294, %v6300
    %v6433 = vadd.f32 %v6295, %v6301
    %6434 = vst [vmem:[#allocation13] sm:$0xff] %v6306
    %6435 = vst [vmem:[#allocation13 + $0x8] sm:$0xff] %v6307
    %6436 = vst [vmem:[#allocation13 + $0x10] sm:$0xff] %v6308
    %6437 = vst [vmem:[#allocation13 + $0x18] sm:$0xff] %v6309
    %6438 = vst [vmem:[#allocation13 + $0x20] sm:$0xff] %v6310
    %6439 = vst [vmem:[#allocation13 + $0x28] sm:$0xff] %v6311
    %6440 = vst [vmem:[#allocation13 + $0x30] sm:$0xff] %v6312
    %6441 = vst [vmem:[#allocation13 + $0x38] sm:$0xff] %v6313
    %6442 = vst [vmem:[#allocation13 + $0x40] sm:$0xff] %v6314
    %6443 = vst [vmem:[#allocation13 + $0x48] sm:$0xff] %v6315
    %6444 = vst [vmem:[#allocation13 + $0x50] sm:$0xff] %v6316
    %6445 = vst [vmem:[#allocation13 + $0x58] sm:$0xff] %v6317
    %6446 = vst [vmem:[#allocation13 + $0x60] sm:$0xff] %v6318
    %6447 = vst [vmem:[#allocation13 + $0x68] sm:$0xff] %v6319
    %6448 = vst [vmem:[#allocation13 + $0x70] sm:$0xff] %v6320
    %6449 = vst [vmem:[#allocation13 + $0x78] sm:$0xff] %v6321
    %6450 = vst [vmem:[#allocation13 + $0x80] sm:$0xff] %v6322
    %6451 = vst [vmem:[#allocation13 + $0x88] sm:$0xff] %v6323
    %6452 = vst [vmem:[#allocation13 + $0x90] sm:$0xff] %v6324
    %6453 = vst [vmem:[#allocation13 + $0x98] sm:$0xff] %v6325
    %6454 = vst [vmem:[#allocation13 + $0xa0] sm:$0xff] %v6326
    %6455 = vst [vmem:[#allocation13 + $0xa8] sm:$0xff] %v6327
    %6456 = vst [vmem:[#allocation13 + $0xb0] sm:$0xff] %v6328
    %6457 = vst [vmem:[#allocation13 + $0xb8] sm:$0xff] %v6329
    %6458 = vst [vmem:[#allocation13 + $0xc0] sm:$0xff] %v6330
    %6459 = vst [vmem:[#allocation13 + $0xc8] sm:$0xff] %v6331
    %6460 = vst [vmem:[#allocation13 + $0xd0] sm:$0xff] %v6332
    %6461 = vst [vmem:[#allocation13 + $0xd8] sm:$0xff] %v6333
    %6462 = vst [vmem:[#allocation13 + $0xe0] sm:$0xff] %v6334
    %6463 = vst [vmem:[#allocation13 + $0xe8] sm:$0xff] %v6335
    %6464 = vst [vmem:[#allocation13 + $0xf0] sm:$0xff] %v6336
    %6465 = vst [vmem:[#allocation13 + $0xf8] sm:$0xff] %v6337
    %6466 = vst [vmem:[#allocation13 + $0x100] sm:$0xff] %v6338
    %6467 = vst [vmem:[#allocation13 + $0x108] sm:$0xff] %v6339
    %6468 = vst [vmem:[#allocation13 + $0x110] sm:$0xff] %v6340
    %6469 = vst [vmem:[#allocation13 + $0x118] sm:$0xff] %v6341
    %6470 = vst [vmem:[#allocation13 + $0x120] sm:$0xff] %v6342
    %6471 = vst [vmem:[#allocation13 + $0x128] sm:$0xff] %v6343
    %6472 = vst [vmem:[#allocation13 + $0x130] sm:$0xff] %v6344
    %6473 = vst [vmem:[#allocation13 + $0x138] sm:$0xff] %v6345
    %6474 = vst [vmem:[#allocation13 + $0x140] sm:$0xff] %v6346
    %6475 = vst [vmem:[#allocation13 + $0x148] sm:$0xff] %v6347
    %6476 = vst [vmem:[#allocation13 + $0x150] sm:$0xff] %v6348
    %6477 = vst [vmem:[#allocation13 + $0x158] sm:$0xff] %v6349
    %6478 = vst [vmem:[#allocation13 + $0x160] sm:$0xff] %v6350
    %6479 = vst [vmem:[#allocation13 + $0x168] sm:$0xff] %v6351
    %6480 = vst [vmem:[#allocation13 + $0x170] sm:$0xff] %v6352
    %6481 = vst [vmem:[#allocation13 + $0x178] sm:$0xff] %v6353
    %6482 = vst [vmem:[#allocation13 + $0x180] sm:$0xff] %v6354
    %6483 = vst [vmem:[#allocation13 + $0x188] sm:$0xff] %v6355
    %6484 = vst [vmem:[#allocation13 + $0x190] sm:$0xff] %v6356
    %6485 = vst [vmem:[#allocation13 + $0x198] sm:$0xff] %v6357
    %6486 = vst [vmem:[#allocation13 + $0x1a0] sm:$0xff] %v6358
    %6487 = vst [vmem:[#allocation13 + $0x1a8] sm:$0xff] %v6359
    %6488 = vst [vmem:[#allocation13 + $0x1b0] sm:$0xff] %v6360
    %6489 = vst [vmem:[#allocation13 + $0x1b8] sm:$0xff] %v6361
    %6490 = vst [vmem:[#allocation13 + $0x1c0] sm:$0xff] %v6362
    %6491 = vst [vmem:[#allocation13 + $0x1c8] sm:$0xff] %v6363
    %6492 = vst [vmem:[#allocation13 + $0x1d0] sm:$0xff] %v6364
    %6493 = vst [vmem:[#allocation13 + $0x1d8] sm:$0xff] %v6365
    %6494 = vst [vmem:[#allocation13 + $0x1e0] sm:$0xff] %v6366
    %6495 = vst [vmem:[#allocation13 + $0x1e8] sm:$0xff] %v6367
    %6496 = vst [vmem:[#allocation13 + $0x1f0] sm:$0xff] %v6368
    %6497 = vst [vmem:[#allocation13 + $0x1f8] sm:$0xff] %v6369
    %6498 = vst [vmem:[#allocation13 + $0x200] sm:$0xff] %v6370
    %6499 = vst [vmem:[#allocation13 + $0x208] sm:$0xff] %v6371
    %6500 = vst [vmem:[#allocation13 + $0x210] sm:$0xff] %v6372
    %6501 = vst [vmem:[#allocation13 + $0x218] sm:$0xff] %v6373
    %6502 = vst [vmem:[#allocation13 + $0x220] sm:$0xff] %v6374
    %6503 = vst [vmem:[#allocation13 + $0x228] sm:$0xff] %v6375
    %6504 = vst [vmem:[#allocation13 + $0x230] sm:$0xff] %v6376
    %6505 = vst [vmem:[#allocation13 + $0x238] sm:$0xff] %v6377
    %6506 = vst [vmem:[#allocation13 + $0x240] sm:$0xff] %v6378
    %6507 = vst [vmem:[#allocation13 + $0x248] sm:$0xff] %v6379
    %6508 = vst [vmem:[#allocation13 + $0x250] sm:$0xff] %v6380
    %6509 = vst [vmem:[#allocation13 + $0x258] sm:$0xff] %v6381
    %6510 = vst [vmem:[#allocation13 + $0x260] sm:$0xff] %v6382
    %6511 = vst [vmem:[#allocation13 + $0x268] sm:$0xff] %v6383
    %6512 = vst [vmem:[#allocation13 + $0x270] sm:$0xff] %v6384
    %6513 = vst [vmem:[#allocation13 + $0x278] sm:$0xff] %v6385
    %6514 = vst [vmem:[#allocation13 + $0x280] sm:$0xff] %v6386
    %6515 = vst [vmem:[#allocation13 + $0x288] sm:$0xff] %v6387
    %6516 = vst [vmem:[#allocation13 + $0x290] sm:$0xff] %v6388
    %6517 = vst [vmem:[#allocation13 + $0x298] sm:$0xff] %v6389
    %6518 = vst [vmem:[#allocation13 + $0x2a0] sm:$0xff] %v6390
    %6519 = vst [vmem:[#allocation13 + $0x2a8] sm:$0xff] %v6391
    %6520 = vst [vmem:[#allocation13 + $0x2b0] sm:$0xff] %v6392
    %6521 = vst [vmem:[#allocation13 + $0x2b8] sm:$0xff] %v6393
    %6522 = vst [vmem:[#allocation13 + $0x2c0] sm:$0xff] %v6394
    %6523 = vst [vmem:[#allocation13 + $0x2c8] sm:$0xff] %v6395
    %6524 = vst [vmem:[#allocation13 + $0x2d0] sm:$0xff] %v6396
    %6525 = vst [vmem:[#allocation13 + $0x2d8] sm:$0xff] %v6397
    %6526 = vst [vmem:[#allocation13 + $0x2e0] sm:$0xff] %v6398
    %6527 = vst [vmem:[#allocation13 + $0x2e8] sm:$0xff] %v6399
    %6528 = vst [vmem:[#allocation13 + $0x2f0] sm:$0xff] %v6400
    %6529 = vst [vmem:[#allocation13 + $0x2f8] sm:$0xff] %v6401
    %6530 = vst [vmem:[#allocation13 + $0x300] sm:$0xff] %v6402
    %6531 = vst [vmem:[#allocation13 + $0x308] sm:$0xff] %v6403
    %6532 = vst [vmem:[#allocation13 + $0x310] sm:$0xff] %v6404
    %6533 = vst [vmem:[#allocation13 + $0x318] sm:$0xff] %v6405
    %6534 = vst [vmem:[#allocation13 + $0x320] sm:$0xff] %v6406
    %6535 = vst [vmem:[#allocation13 + $0x328] sm:$0xff] %v6407
    %6536 = vst [vmem:[#allocation13 + $0x330] sm:$0xff] %v6408
    %6537 = vst [vmem:[#allocation13 + $0x338] sm:$0xff] %v6409
    %6538 = vst [vmem:[#allocation13 + $0x340] sm:$0xff] %v6410
    %6539 = vst [vmem:[#allocation13 + $0x348] sm:$0xff] %v6411
    %6540 = vst [vmem:[#allocation13 + $0x350] sm:$0xff] %v6412
    %6541 = vst [vmem:[#allocation13 + $0x358] sm:$0xff] %v6413
    %6542 = vst [vmem:[#allocation13 + $0x360] sm:$0xff] %v6414
    %6543 = vst [vmem:[#allocation13 + $0x368] sm:$0xff] %v6415
    %6544 = vst [vmem:[#allocation13 + $0x370] sm:$0xff] %v6416
    %6545 = vst [vmem:[#allocation13 + $0x378] sm:$0xff] %v6417
    %6546 = vst [vmem:[#allocation13 + $0x380] sm:$0xff] %v6418
    %6547 = vst [vmem:[#allocation13 + $0x388] sm:$0xff] %v6419
    %6548 = vst [vmem:[#allocation13 + $0x390] sm:$0xff] %v6420
    %6549 = vst [vmem:[#allocation13 + $0x398] sm:$0xff] %v6421
    %6550 = vst [vmem:[#allocation13 + $0x3a0] sm:$0xff] %v6422
    %6551 = vst [vmem:[#allocation13 + $0x3a8] sm:$0xff] %v6423
    %6552 = vst [vmem:[#allocation13 + $0x3b0] sm:$0xff] %v6424
    %6553 = vst [vmem:[#allocation13 + $0x3b8] sm:$0xff] %v6425
    %6554 = vst [vmem:[#allocation13 + $0x3c0] sm:$0xff] %v6426
    %6555 = vst [vmem:[#allocation13 + $0x3c8] sm:$0xff] %v6427
    %6556 = vst [vmem:[#allocation13 + $0x3d0] sm:$0xff] %v6428
    %6557 = vst [vmem:[#allocation13 + $0x3d8] sm:$0xff] %v6429
    %6558 = vst [vmem:[#allocation13 + $0x3e0] sm:$0xff] %v6430
    %6559 = vst [vmem:[#allocation13 + $0x3e8] sm:$0xff] %v6431
    %6560 = vst [vmem:[#allocation13 + $0x3f0] sm:$0xff] %v6432
    %6561 = vst [vmem:[#allocation13 + $0x3f8] sm:$0xff] %v6433
    // Predicated region
    $region54: #{tpu_custom_call.1} parent=1 // pred_check
      _
    $region55: #{tpu_custom_call.1} parent=1 // pred_check_branch
      %6563 = sbr.rel (0) target = $region57
    $region56: #{tpu_custom_call.1} parent=1 // pred_region
      %6565 = vsyncadd [#allocation4], 0
      %s6566 = sshll.u32 [#allocation13], 4
      %s6567 = int_to_ptr.vmem [resolvable:$true] %s6566
      %s6568 = sshll.u32 %s7, 4
      %s6569 = int_to_ptr.hbm [resolvable:$true] %s6568
      %6574 = dma.vmem_to_hbm [thread:$0]  %s6567, 16384, %s6569, [#allocation4], 512, 512, 32
    $region57: #{tpu_custom_call.1} parent=1 // pred_fallthru
      _
    // Predicated region
    $region58: #{tpu_custom_call.1} parent=1 // pred_check
      _
    $region59: #{tpu_custom_call.1} parent=1 // pred_check_branch
      %6576 = sbr.rel (0) target = $region61
    $region60: #{tpu_custom_call.1} parent=1 // pred_region
      %6578 = dma.done [#allocation4], 16384
    $region61: #{tpu_custom_call.1} parent=1 // pred_fallthru
      _
    %6579 = vsyncpa [#allocation3], 1
    %6580 = vsyncpa [#allocation6], 1
    %6581 = vsyncpa [#allocation9], 1
    %6582 = vsyncpa [#allocation12], 1
    %6583 = vsyncpa [#allocation4], 1

</llo_original>
